<compile_context>
chip_gen: v7x
topology: tpu7x:2x2x1
jax: 0.10.0
libtpu: 0.0.40
codegen_flags: <defaults>
</compile_context>

<pallas_src>
import jax
import jax.numpy as jnp
import numpy as np
from jax.experimental import pallas as pl
from jax.experimental.pallas import tpu as pltpu

# ---- hyper-params consistent with the module (num_layers = 2 -> 3 Linear per MLP) ----
DATA_SIZE = 4
HIDDEN_SIZE = 16
MLP_SIZE = 32
BATCH = 16                     # small demo batch (single tile)
T_SIZE = 9                     # knots at t = 0..8 ; 8 reversible-Heun steps with dt = 1.0
C = 1 + DATA_SIZE              # control-path channels (time + data)


def _lipswish(x):
    return 0.909 * x * jax.nn.sigmoid(x)


def _discriminator_kernel(coeffs_ref,
                          wi1, bi1, wi2, bi2, wi3, bi3,
                          wf1t, wf1h, bf1, wf2, bf2, wf3, bf3,
                          wr, br,
                          out_ref):
    # coeffs_ref: (t_size, C, tile_batch) — batch on lanes, channels on sublanes.
    t_size, c, tb = coeffs_ref.shape
    hidden = wi3.shape[0]
    n_steps = t_size - 1

    def dot(a, b):
        # Tiny-K f32 matmuls; the kernel is slot-bound, not MXU-bound, so f32 is kept.
        # (On v6e/v7x, casting a/b to bf16 here is a valid further micro-opt; re-validate
        #  tolerances against the HIGHEST-precision reference if doing so.)
        return jnp.dot(a, b, preferred_element_type=jnp.float32)

    # ---------- hoist loop-invariant weight reads into vreg-resident values ----------
    Wi1, Bi1 = wi1[...], bi1[...]
    Wi2, Bi2 = wi2[...], bi2[...]
    Wi3, Bi3 = wi3[...], bi3[...]
    Wf1t, Wf1h, Bf1 = wf1t[...], wf1h[...], bf1[...]
    Wf2, Bf2 = wf2[...], bf2[...]
    Wf3, Bf3 = wf3[...], bf3[...]
    Wr, Br = wr[...], br[...]

    # ---------- initial MLP: h0 = MLP(Y0), Y0 = ys_coeffs[:, 0]; layout (feat, batch) ----
    y0 = coeffs_ref[0]                                     # (C, tb)
    a = _lipswish(dot(Wi1, y0) + Bi1)
    a = _lipswish(dot(Wi2, a) + Bi2)
    h0 = dot(Wi3, a) + Bi3                                 # (hidden, tb)

    # ---------- controlled vector field, contracted with dY/dt (all per-step) ----------
    def vf(k_t, k_d, z):
        # concat([t, z]) @ W1  ==  W1h^T @ z + (t * W1_tcol + b1)   (lane-broadcast (mlp,1))
        t_term = float(k_t) * Wf1t + Bf1
        h = _lipswish(dot(Wf1h, z) + t_term)
        h = _lipswish(dot(Wf2, h) + Bf2)
        # Wf3 rows are channel-major: row (cc*hidden + hh) == PyTorch .view()[hh, cc]
        m = jnp.tanh(dot(Wf3, h) + Bf3)                    # (C*hidden, tb)
        dY = coeffs_ref[k_d + 1] - coeffs_ref[k_d]         # (C, tb): dY/dt on [k_d, k_d+1]
        # out[hh, b] = sum_c m[c*hidden + hh, b] * dY[c, b]
        # static 16-row sublane slices + sublane-broadcast multiplies — pure VPU work.
        out = m[0:hidden, :] * dY[0:1, :]
        for cc in range(1, c):
            out = out + m[cc * hidden:(cc + 1) * hidden, :] * dY[cc:cc + 1, :]
        return out                                         # (hidden, tb)

    # ---------- reversible Heun (torchsde), zero diffusion, dt = 1.0; fully unrolled ----
    y = h0
    z = h0
    f = vf(0, 0, h0)                                       # f at t = 0, dY on [0, 1]
    for n in range(n_steps):
        z1 = 2.0 * y - z + f                               # z_{n+1} = 2 y_n - z_n + dt f_n
        f1 = vf(n + 1, n, z1)                              # f at t = n+1, dY on [n, n+1]
        y = y + 0.5 * (f + f1)                             # y_{n+1} = y_n + dt/2 (f_n + f_{n+1})
        z, f = z1, f1

    # ---------- readout: reduce over batch FIRST, then a tiny dot; per-tile score SUM ----
    y_sum = jnp.sum(y, axis=1, keepdims=True)              # (hidden, 1)  lane reduce (XLU)
    score_sum = jnp.sum(Wr * y_sum, axis=0, keepdims=True) + float(tb) * Br   # (1, 1)
    out_ref[...] = score_sum.reshape(1, 1, 1)


def discriminator_forward(ys_coeffs, params, block_batch=None):
    """ys_coeffs: (batch, t_size, 1+data_size) float32 — same layout as the PyTorch module."""
    batch, t_size, c = ys_coeffs.shape
    hidden = params["wi3"].shape[1]

    if block_batch is None:
        # Batch sits on the lane axis: prefer 256-wide tiles (v6e/v7x MXU width),
        # then 128 (v5e / lane width), else one tile for small batches.
        # On v7x also prefer an even tile count so both TensorCores stay busy.
        if batch % 256 == 0:
            block_batch = 256
        elif batch % 128 == 0:
            block_batch = 128
        else:
            block_batch = batch
    assert batch % block_batch == 0
    assert block_batch == batch or block_batch % 128 == 0, \
        "batch tile (lane dim) must be a multiple of 128 or the full batch"
    num_tiles = batch // block_batch

    # Lane-dense, time-major coefficients for the kernel: (t_size, C, batch).
    coeffs_k = jnp.transpose(ys_coeffs, (1, 2, 0)).astype(jnp.float32)

    # Weights transposed to (out_features, in_features); biases as (out_features, 1).
    wi1, bi1 = params["wi1"].T, params["bi1"].T
    wi2, bi2 = params["wi2"].T, params["bi2"].T
    wi3, bi3 = params["wi3"].T, params["bi3"].T
    wf1T = params["wf1"].T                                  # (mlp, 1+hidden)
    wf1t, wf1h = wf1T[:, 0:1], wf1T[:, 1:]                  # time column / hidden block
    bf1 = params["bf1"].T
    wf2, bf2 = params["wf2"].T, params["bf2"].T
    # Permute func final layer so kernel ROW (cc*hidden + hh) equals PyTorch's flat
    # output index (hh*C + cc), i.e. element [hh, cc] of .view(batch, hidden, 1+data).
    idx = np.arange(hidden * c)
    old = (idx % hidden) * c + (idx // hidden)
    wf3 = params["wf3"].T[old, :]                           # (C*hidden, mlp)
    bf3 = params["bf3"].T[old, :]                           # (C*hidden, 1)
    wr, br = params["wr"], params["br"]                     # (hidden, 1), (1, 1)

    inputs = (coeffs_k, wi1, bi1, wi2, bi2, wi3, bi3,
              wf1t, wf1h, bf1, wf2, bf2, wf3, bf3, wr, br)

    def full_spec(x):
        # Whole (tiny) weight array resident in VMEM; same block every grid step.
        return pl.BlockSpec(x.shape, lambda b: (0,) * x.ndim)

    in_specs = ([pl.BlockSpec((t_size, c, block_batch), lambda b: (0, 0, b))]
                + [full_spec(x) for x in inputs[1:]])

    out = pl.pallas_call(
        _discriminator_kernel,
        out_shape=jax.ShapeDtypeStruct((num_tiles, 1, 1), jnp.float32),
        grid=(num_tiles,),
        in_specs=in_specs,
        out_specs=pl.BlockSpec((1, 1, 1), lambda b: (b, 0, 0)),
        compiler_params=pltpu.CompilerParams(
            dimension_semantics=("parallel",)),   # independent batch tiles (megacore on v7x)
    )(*inputs)
    # Finish the mean over the full batch with one tiny XLA reduce over per-tile sums.
    return jnp.sum(out) / batch


def init_params(key):
    """Deterministic PyTorch-style Linear init (U(-1/sqrt(fan_in), 1/sqrt(fan_in)))."""
    def linear(k, fan_in, fan_out):
        kw, kb = jax.random.split(k)
        lim = 1.0 / np.sqrt(fan_in)
        w = jax.random.uniform(kw, (fan_in, fan_out), jnp.float32, -lim, lim)
        b = jax.random.uniform(kb, (1, fan_out), jnp.float32, -lim, lim)
        return w, b

    keys = jax.random.split(key, 7)
    p = {}
    p["wi1"], p["bi1"] = linear(keys[0], C, MLP_SIZE)                       # initial MLP
    p["wi2"], p["bi2"] = linear(keys[1], MLP_SIZE, MLP_SIZE)
    p["wi3"], p["bi3"] = linear(keys[2], MLP_SIZE, HIDDEN_SIZE)
    p["wf1"], p["bf1"] = linear(keys[3], 1 + HIDDEN_SIZE, MLP_SIZE)         # func MLP
    p["wf2"], p["bf2"] = linear(keys[4], MLP_SIZE, MLP_SIZE)
    p["wf3"], p["bf3"] = linear(keys[5], MLP_SIZE, HIDDEN_SIZE * C)
    p["wr"], p["br"] = linear(keys[6], HIDDEN_SIZE, 1)                      # readout
    return p


def reference_forward(ys_coeffs, params):
    """Plain-JAX mirror of the PyTorch semantics (concat / view / reversible Heun)."""
    HP = jax.lax.Precision.HIGHEST

    def mlp_initial(x):
        a = _lipswish(jnp.dot(x, params["wi1"], precision=HP) + params["bi1"])
        a = _lipswish(jnp.dot(a, params["wi2"], precision=HP) + params["bi2"])
        return jnp.dot(a, params["wi3"], precision=HP) + params["bi3"]

    def func(t, h):
        b = h.shape[0]
        th = jnp.concatenate([jnp.full((b, 1), t, jnp.float32), h], axis=1)
        a = _lipswish(jnp.dot(th, params["wf1"], precision=HP) + params["bf1"])
        a = _lipswish(jnp.dot(a, params["wf2"], precision=HP) + params["bf2"])
        out = jnp.tanh(jnp.dot(a, params["wf3"], precision=HP) + params["bf3"])
        return out.reshape(b, HIDDEN_SIZE, C)

    coeffs = ys_coeffs
    T = coeffs.shape[1] - 1

    def deriv(k):              # linear interpolation derivative at integer time k
        k = max(min(k, T), 1)
        return coeffs[:, k] - coeffs[:, k - 1]

    y = mlp_initial(coeffs[:, 0])
    z = y
    f = jnp.einsum("bhc,bc->bh", func(0.0, y), deriv(0), precision=HP)
    for n in range(T):
        z1 = 2.0 * y - z + f
        f1 = jnp.einsum("bhc,bc->bh", func(float(n + 1), z1), deriv(n + 1), precision=HP)
        y = y + 0.5 * (f + f1)
        z, f = z1, f1
    score = jnp.dot(y, params["wr"], precision=HP) + params["br"]
    return jnp.mean(score)


# TODO(synk): only the forward pass is implemented; torchcde's adjoint_reversible_heun
# backward machinery has no Pallas equivalent here.

if __name__ == "__main__":
    key = jax.random.PRNGKey(0)
    pkey, dkey, dkey2 = jax.random.split(key, 3)
    params = init_params(pkey)

    # ys_coeffs: channel 0 is time (as in the SDE-GAN example), remaining channels are data.
    ts = jnp.linspace(0.0, T_SIZE - 1, T_SIZE)
    data = 0.3 * jax.random.normal(dkey, (BATCH, T_SIZE, DATA_SIZE), jnp.float32)
    ys_coeffs = jnp.concatenate(
        [jnp.broadcast_to(ts[None, :, None], (BATCH, T_SIZE, 1)), data], axis=-1)

    # Small demo batch -> single tile (no serial grid overhead on single-TC chips).
    out = jax.block_until_ready(discriminator_forward(ys_coeffs, params))
    ref = jax.block_until_ready(reference_forward(ys_coeffs, params))
    assert out.shape == ()
    assert np.isfinite(float(out))
    np.testing.assert_allclose(float(out), float(ref), rtol=1e-3, atol=1e-3)

    # Larger batch exercises the lane-tiled (128-wide), multi-tile "parallel" grid path.
    BIG = 256
    data2 = 0.3 * jax.random.normal(dkey2, (BIG, T_SIZE, DATA_SIZE), jnp.float32)
    ys2 = jnp.concatenate(
        [jnp.broadcast_to(ts[None, :, None], (BIG, T_SIZE, 1)), data2], axis=-1)
    out2 = jax.block_until_ready(discriminator_forward(ys2, params, block_batch=128))
    ref2 = jax.block_until_ready(reference_forward(ys2, params))
    np.testing.assert_allclose(float(out2), float(ref2), rtol=1e-3, atol=1e-3)

    print("KERNEL_OK")
</pallas_src>

<mosaic_0001>
module attributes {stable_mosaic.version = 11 : i64} {
  func.func @_discriminator_kernel(%arg0: i32, %arg1: memref<9x5x16xf32, #tpu.memory_space<vmem>>, %arg2: memref<32x5xf32, #tpu.memory_space<vmem>>, %arg3: memref<32x1xf32, #tpu.memory_space<vmem>>, %arg4: memref<32x32xf32, #tpu.memory_space<vmem>>, %arg5: memref<32x1xf32, #tpu.memory_space<vmem>>, %arg6: memref<16x32xf32, #tpu.memory_space<vmem>>, %arg7: memref<16x1xf32, #tpu.memory_space<vmem>>, %arg8: memref<32x1xf32, #tpu.memory_space<vmem>>, %arg9: memref<32x16xf32, #tpu.memory_space<vmem>>, %arg10: memref<32x1xf32, #tpu.memory_space<vmem>>, %arg11: memref<32x32xf32, #tpu.memory_space<vmem>>, %arg12: memref<32x1xf32, #tpu.memory_space<vmem>>, %arg13: memref<80x32xf32, #tpu.memory_space<vmem>>, %arg14: memref<80x1xf32, #tpu.memory_space<vmem>>, %arg15: memref<16x1xf32, #tpu.memory_space<vmem>>, %arg16: memref<1x1xf32, #tpu.memory_space<vmem>>, %arg17: memref<1x1x1xf32, #tpu.memory_space<vmem>>) attributes {dimension_semantics = [#tpu.dimension_semantics<parallel>], iteration_bounds = array<i64: 1>, scalar_prefetch = 0 : i64, scratch_operands = 0 : i64, tpu.core_type = #tpu.core_type<tc>, window_params = [{transform_indices = @transform_0, window_bounds = array<i64: 9, 5, 16>}, {pipeline_mode = #tpu.pipeline_mode<synchronous>, transform_indices = @transform_1, window_bounds = array<i64: 32, 5>}, {pipeline_mode = #tpu.pipeline_mode<synchronous>, transform_indices = @transform_2, window_bounds = array<i64: 32, 1>}, {pipeline_mode = #tpu.pipeline_mode<synchronous>, transform_indices = @transform_3, window_bounds = array<i64: 32, 32>}, {pipeline_mode = #tpu.pipeline_mode<synchronous>, transform_indices = @transform_4, window_bounds = array<i64: 32, 1>}, {pipeline_mode = #tpu.pipeline_mode<synchronous>, transform_indices = @transform_5, window_bounds = array<i64: 16, 32>}, {pipeline_mode = #tpu.pipeline_mode<synchronous>, transform_indices = @transform_6, window_bounds = array<i64: 16, 1>}, {pipeline_mode = #tpu.pipeline_mode<synchronous>, transform_indices = @transform_7, window_bounds = array<i64: 32, 1>}, {pipeline_mode = #tpu.pipeline_mode<synchronous>, transform_indices = @transform_8, window_bounds = array<i64: 32, 16>}, {pipeline_mode = #tpu.pipeline_mode<synchronous>, transform_indices = @transform_9, window_bounds = array<i64: 32, 1>}, {pipeline_mode = #tpu.pipeline_mode<synchronous>, transform_indices = @transform_10, window_bounds = array<i64: 32, 32>}, {pipeline_mode = #tpu.pipeline_mode<synchronous>, transform_indices = @transform_11, window_bounds = array<i64: 32, 1>}, {pipeline_mode = #tpu.pipeline_mode<synchronous>, transform_indices = @transform_12, window_bounds = array<i64: 80, 32>}, {pipeline_mode = #tpu.pipeline_mode<synchronous>, transform_indices = @transform_13, window_bounds = array<i64: 80, 1>}, {pipeline_mode = #tpu.pipeline_mode<synchronous>, transform_indices = @transform_14, window_bounds = array<i64: 16, 1>}, {pipeline_mode = #tpu.pipeline_mode<synchronous>, transform_indices = @transform_15, window_bounds = array<i64: 1, 1>}, {transform_indices = @transform_16, window_bounds = array<i64: 1, 1, 1>}]} {
    %c0 = arith.constant 0 : index
    %c0_0 = arith.constant 0 : index
    %0 = vector.load %arg2[%c0, %c0_0] : memref<32x5xf32, #tpu.memory_space<vmem>>, vector<32x5xf32>
    %c0_1 = arith.constant 0 : index
    %c0_2 = arith.constant 0 : index
    %1 = vector.load %arg3[%c0_1, %c0_2] : memref<32x1xf32, #tpu.memory_space<vmem>>, vector<32x1xf32>
    %c0_3 = arith.constant 0 : index
    %c0_4 = arith.constant 0 : index
    %2 = vector.load %arg4[%c0_3, %c0_4] : memref<32x32xf32, #tpu.memory_space<vmem>>, vector<32x32xf32>
    %c0_5 = arith.constant 0 : index
    %c0_6 = arith.constant 0 : index
    %3 = vector.load %arg5[%c0_5, %c0_6] : memref<32x1xf32, #tpu.memory_space<vmem>>, vector<32x1xf32>
    %c0_7 = arith.constant 0 : index
    %c0_8 = arith.constant 0 : index
    %4 = vector.load %arg6[%c0_7, %c0_8] : memref<16x32xf32, #tpu.memory_space<vmem>>, vector<16x32xf32>
    %c0_9 = arith.constant 0 : index
    %c0_10 = arith.constant 0 : index
    %5 = vector.load %arg7[%c0_9, %c0_10] : memref<16x1xf32, #tpu.memory_space<vmem>>, vector<16x1xf32>
    %c0_11 = arith.constant 0 : index
    %c0_12 = arith.constant 0 : index
    %6 = vector.load %arg8[%c0_11, %c0_12] : memref<32x1xf32, #tpu.memory_space<vmem>>, vector<32x1xf32>
    %c0_13 = arith.constant 0 : index
    %c0_14 = arith.constant 0 : index
    %7 = vector.load %arg9[%c0_13, %c0_14] : memref<32x16xf32, #tpu.memory_space<vmem>>, vector<32x16xf32>
    %c0_15 = arith.constant 0 : index
    %c0_16 = arith.constant 0 : index
    %8 = vector.load %arg10[%c0_15, %c0_16] : memref<32x1xf32, #tpu.memory_space<vmem>>, vector<32x1xf32>
    %c0_17 = arith.constant 0 : index
    %c0_18 = arith.constant 0 : index
    %9 = vector.load %arg11[%c0_17, %c0_18] : memref<32x32xf32, #tpu.memory_space<vmem>>, vector<32x32xf32>
    %c0_19 = arith.constant 0 : index
    %c0_20 = arith.constant 0 : index
    %10 = vector.load %arg12[%c0_19, %c0_20] : memref<32x1xf32, #tpu.memory_space<vmem>>, vector<32x1xf32>
    %c0_21 = arith.constant 0 : index
    %c0_22 = arith.constant 0 : index
    %11 = vector.load %arg13[%c0_21, %c0_22] : memref<80x32xf32, #tpu.memory_space<vmem>>, vector<80x32xf32>
    %c0_23 = arith.constant 0 : index
    %c0_24 = arith.constant 0 : index
    %12 = vector.load %arg14[%c0_23, %c0_24] : memref<80x1xf32, #tpu.memory_space<vmem>>, vector<80x1xf32>
    %c0_25 = arith.constant 0 : index
    %c0_26 = arith.constant 0 : index
    %13 = vector.load %arg15[%c0_25, %c0_26] : memref<16x1xf32, #tpu.memory_space<vmem>>, vector<16x1xf32>
    %c0_27 = arith.constant 0 : index
    %c0_28 = arith.constant 0 : index
    %14 = vector.load %arg16[%c0_27, %c0_28] : memref<1x1xf32, #tpu.memory_space<vmem>>, vector<1x1xf32>
    %c0_29 = arith.constant 0 : index
    %c0_30 = arith.constant 0 : index
    %c0_31 = arith.constant 0 : index
    %15 = vector.load %arg1[%c0_29, %c0_30, %c0_31] : memref<9x5x16xf32, #tpu.memory_space<vmem>>, vector<1x5x16xf32>
    %16 = vector.shape_cast %15 : vector<1x5x16xf32> to vector<5x16xf32>
    %cst = arith.constant dense<0.000000e+00> : vector<32x16xf32>
    %17 = tpu.matmul %0, %16, %cst {dimension_numbers = #tpu.dot_dimension_numbers<[1], [0], [0], [1], [0, 0, 1, 1], [], []>} : vector<32x5xf32>, vector<5x16xf32>, vector<32x16xf32> -> vector<32x16xf32>
    %18 = vector.broadcast %1 : vector<32x1xf32> to vector<32x16xf32>
    %19 = arith.addf %17, %18 : vector<32x16xf32>
    %cst_32 = arith.constant 0.908999979 : f32
    %20 = vector.broadcast %cst_32 : f32 to vector<32x16xf32>
    %21 = arith.mulf %20, %19 : vector<32x16xf32>
    %22 = arith.negf %19 : vector<32x16xf32>
    %23 = math.exp %22 : vector<32x16xf32>
    %cst_33 = arith.constant 1.000000e+00 : f32
    %24 = vector.broadcast %cst_33 : f32 to vector<32x16xf32>
    %25 = arith.addf %24, %23 : vector<32x16xf32>
    %26 = arith.divf %24, %25 : vector<32x16xf32>
    %27 = arith.mulf %21, %26 : vector<32x16xf32>
    %cst_34 = arith.constant dense<0.000000e+00> : vector<32x16xf32>
    %28 = tpu.matmul %2, %27, %cst_34 {dimension_numbers = #tpu.dot_dimension_numbers<[1], [0], [0], [1], [0, 0, 1, 1], [], []>} : vector<32x32xf32>, vector<32x16xf32>, vector<32x16xf32> -> vector<32x16xf32>
    %29 = vector.broadcast %3 : vector<32x1xf32> to vector<32x16xf32>
    %30 = arith.addf %28, %29 : vector<32x16xf32>
    %cst_35 = arith.constant 0.908999979 : f32
    %31 = vector.broadcast %cst_35 : f32 to vector<32x16xf32>
    %32 = arith.mulf %31, %30 : vector<32x16xf32>
    %33 = arith.negf %30 : vector<32x16xf32>
    %34 = math.exp %33 : vector<32x16xf32>
    %cst_36 = arith.constant 1.000000e+00 : f32
    %35 = vector.broadcast %cst_36 : f32 to vector<32x16xf32>
    %36 = arith.addf %35, %34 : vector<32x16xf32>
    %37 = arith.divf %35, %36 : vector<32x16xf32>
    %38 = arith.mulf %32, %37 : vector<32x16xf32>
    %cst_37 = arith.constant dense<0.000000e+00> : vector<16x16xf32>
    %39 = tpu.matmul %4, %38, %cst_37 {dimension_numbers = #tpu.dot_dimension_numbers<[1], [0], [0], [1], [0, 0, 1, 1], [], []>} : vector<16x32xf32>, vector<32x16xf32>, vector<16x16xf32> -> vector<16x16xf32>
    %40 = vector.broadcast %5 : vector<16x1xf32> to vector<16x16xf32>
    %41 = arith.addf %39, %40 : vector<16x16xf32>
    %cst_38 = arith.constant 0.000000e+00 : f32
    %42 = vector.broadcast %cst_38 : f32 to vector<32x1xf32>
    %43 = arith.mulf %42, %6 : vector<32x1xf32>
    %44 = arith.addf %43, %8 : vector<32x1xf32>
    %cst_39 = arith.constant dense<0.000000e+00> : vector<32x16xf32>
    %45 = tpu.matmul %7, %41, %cst_39 {dimension_numbers = #tpu.dot_dimension_numbers<[1], [0], [0], [1], [0, 0, 1, 1], [], []>} : vector<32x16xf32>, vector<16x16xf32>, vector<32x16xf32> -> vector<32x16xf32>
    %46 = vector.broadcast %44 : vector<32x1xf32> to vector<32x16xf32>
    %47 = arith.addf %45, %46 : vector<32x16xf32>
    %cst_40 = arith.constant 0.908999979 : f32
    %48 = vector.broadcast %cst_40 : f32 to vector<32x16xf32>
    %49 = arith.mulf %48, %47 : vector<32x16xf32>
    %50 = arith.negf %47 : vector<32x16xf32>
    %51 = math.exp %50 : vector<32x16xf32>
    %cst_41 = arith.constant 1.000000e+00 : f32
    %52 = vector.broadcast %cst_41 : f32 to vector<32x16xf32>
    %53 = arith.addf %52, %51 : vector<32x16xf32>
    %54 = arith.divf %52, %53 : vector<32x16xf32>
    %55 = arith.mulf %49, %54 : vector<32x16xf32>
    %cst_42 = arith.constant dense<0.000000e+00> : vector<32x16xf32>
    %56 = tpu.matmul %9, %55, %cst_42 {dimension_numbers = #tpu.dot_dimension_numbers<[1], [0], [0], [1], [0, 0, 1, 1], [], []>} : vector<32x32xf32>, vector<32x16xf32>, vector<32x16xf32> -> vector<32x16xf32>
    %57 = vector.broadcast %10 : vector<32x1xf32> to vector<32x16xf32>
    %58 = arith.addf %56, %57 : vector<32x16xf32>
    %cst_43 = arith.constant 0.908999979 : f32
    %59 = vector.broadcast %cst_43 : f32 to vector<32x16xf32>
    %60 = arith.mulf %59, %58 : vector<32x16xf32>
    %61 = arith.negf %58 : vector<32x16xf32>
    %62 = math.exp %61 : vector<32x16xf32>
    %cst_44 = arith.constant 1.000000e+00 : f32
    %63 = vector.broadcast %cst_44 : f32 to vector<32x16xf32>
    %64 = arith.addf %63, %62 : vector<32x16xf32>
    %65 = arith.divf %63, %64 : vector<32x16xf32>
    %66 = arith.mulf %60, %65 : vector<32x16xf32>
    %cst_45 = arith.constant dense<0.000000e+00> : vector<80x16xf32>
    %67 = tpu.matmul %11, %66, %cst_45 {dimension_numbers = #tpu.dot_dimension_numbers<[1], [0], [0], [1], [0, 0, 1, 1], [], []>} : vector<80x32xf32>, vector<32x16xf32>, vector<80x16xf32> -> vector<80x16xf32>
    %68 = vector.broadcast %12 : vector<80x1xf32> to vector<80x16xf32>
    %69 = arith.addf %67, %68 : vector<80x16xf32>
    %70 = math.tanh %69 : vector<80x16xf32>
    %c1 = arith.constant 1 : index
    %c0_46 = arith.constant 0 : index
    %c0_47 = arith.constant 0 : index
    %71 = vector.load %arg1[%c1, %c0_46, %c0_47] : memref<9x5x16xf32, #tpu.memory_space<vmem>>, vector<1x5x16xf32>
    %72 = vector.shape_cast %71 : vector<1x5x16xf32> to vector<5x16xf32>
    %c0_48 = arith.constant 0 : index
    %c0_49 = arith.constant 0 : index
    %c0_50 = arith.constant 0 : index
    %73 = vector.load %arg1[%c0_48, %c0_49, %c0_50] : memref<9x5x16xf32, #tpu.memory_space<vmem>>, vector<1x5x16xf32>
    %74 = vector.shape_cast %73 : vector<1x5x16xf32> to vector<5x16xf32>
    %75 = arith.subf %72, %74 : vector<5x16xf32>
    %76 = vector.extract_strided_slice %70 {offsets = [0, 0], sizes = [16, 16], strides = [1, 1]} : vector<80x16xf32> to vector<16x16xf32>
    %77 = vector.extract_strided_slice %75 {offsets = [0, 0], sizes = [1, 16], strides = [1, 1]} : vector<5x16xf32> to vector<1x16xf32>
    %78 = vector.broadcast %77 : vector<1x16xf32> to vector<16x16xf32>
    %79 = arith.mulf %76, %78 : vector<16x16xf32>
    %80 = vector.extract_strided_slice %70 {offsets = [16, 0], sizes = [16, 16], strides = [1, 1]} : vector<80x16xf32> to vector<16x16xf32>
    %81 = vector.extract_strided_slice %75 {offsets = [1, 0], sizes = [1, 16], strides = [1, 1]} : vector<5x16xf32> to vector<1x16xf32>
    %82 = vector.broadcast %81 : vector<1x16xf32> to vector<16x16xf32>
    %83 = arith.mulf %80, %82 : vector<16x16xf32>
    %84 = arith.addf %79, %83 : vector<16x16xf32>
    %85 = vector.extract_strided_slice %70 {offsets = [32, 0], sizes = [16, 16], strides = [1, 1]} : vector<80x16xf32> to vector<16x16xf32>
    %86 = vector.extract_strided_slice %75 {offsets = [2, 0], sizes = [1, 16], strides = [1, 1]} : vector<5x16xf32> to vector<1x16xf32>
    %87 = vector.broadcast %86 : vector<1x16xf32> to vector<16x16xf32>
    %88 = arith.mulf %85, %87 : vector<16x16xf32>
    %89 = arith.addf %84, %88 : vector<16x16xf32>
    %90 = vector.extract_strided_slice %70 {offsets = [48, 0], sizes = [16, 16], strides = [1, 1]} : vector<80x16xf32> to vector<16x16xf32>
    %91 = vector.extract_strided_slice %75 {offsets = [3, 0], sizes = [1, 16], strides = [1, 1]} : vector<5x16xf32> to vector<1x16xf32>
    %92 = vector.broadcast %91 : vector<1x16xf32> to vector<16x16xf32>
    %93 = arith.mulf %90, %92 : vector<16x16xf32>
    %94 = arith.addf %89, %93 : vector<16x16xf32>
    %95 = vector.extract_strided_slice %70 {offsets = [64, 0], sizes = [16, 16], strides = [1, 1]} : vector<80x16xf32> to vector<16x16xf32>
    %96 = vector.extract_strided_slice %75 {offsets = [4, 0], sizes = [1, 16], strides = [1, 1]} : vector<5x16xf32> to vector<1x16xf32>
    %97 = vector.broadcast %96 : vector<1x16xf32> to vector<16x16xf32>
    %98 = arith.mulf %95, %97 : vector<16x16xf32>
    %99 = arith.addf %94, %98 : vector<16x16xf32>
    %cst_51 = arith.constant 2.000000e+00 : f32
    %100 = vector.broadcast %cst_51 : f32 to vector<16x16xf32>
    %101 = arith.mulf %100, %41 : vector<16x16xf32>
    %102 = arith.subf %101, %41 : vector<16x16xf32>
    %103 = arith.addf %102, %99 : vector<16x16xf32>
    %cst_52 = arith.constant 1.000000e+00 : f32
    %104 = vector.broadcast %cst_52 : f32 to vector<32x1xf32>
    %105 = arith.mulf %104, %6 : vector<32x1xf32>
    %106 = arith.addf %105, %8 : vector<32x1xf32>
    %cst_53 = arith.constant dense<0.000000e+00> : vector<32x16xf32>
    %107 = tpu.matmul %7, %103, %cst_53 {dimension_numbers = #tpu.dot_dimension_numbers<[1], [0], [0], [1], [0, 0, 1, 1], [], []>} : vector<32x16xf32>, vector<16x16xf32>, vector<32x16xf32> -> vector<32x16xf32>
    %108 = vector.broadcast %106 : vector<32x1xf32> to vector<32x16xf32>
    %109 = arith.addf %107, %108 : vector<32x16xf32>
    %cst_54 = arith.constant 0.908999979 : f32
    %110 = vector.broadcast %cst_54 : f32 to vector<32x16xf32>
    %111 = arith.mulf %110, %109 : vector<32x16xf32>
    %112 = arith.negf %109 : vector<32x16xf32>
    %113 = math.exp %112 : vector<32x16xf32>
    %cst_55 = arith.constant 1.000000e+00 : f32
    %114 = vector.broadcast %cst_55 : f32 to vector<32x16xf32>
    %115 = arith.addf %114, %113 : vector<32x16xf32>
    %116 = arith.divf %114, %115 : vector<32x16xf32>
    %117 = arith.mulf %111, %116 : vector<32x16xf32>
    %cst_56 = arith.constant dense<0.000000e+00> : vector<32x16xf32>
    %118 = tpu.matmul %9, %117, %cst_56 {dimension_numbers = #tpu.dot_dimension_numbers<[1], [0], [0], [1], [0, 0, 1, 1], [], []>} : vector<32x32xf32>, vector<32x16xf32>, vector<32x16xf32> -> vector<32x16xf32>
    %119 = vector.broadcast %10 : vector<32x1xf32> to vector<32x16xf32>
    %120 = arith.addf %118, %119 : vector<32x16xf32>
    %cst_57 = arith.constant 0.908999979 : f32
    %121 = vector.broadcast %cst_57 : f32 to vector<32x16xf32>
    %122 = arith.mulf %121, %120 : vector<32x16xf32>
    %123 = arith.negf %120 : vector<32x16xf32>
    %124 = math.exp %123 : vector<32x16xf32>
    %cst_58 = arith.constant 1.000000e+00 : f32
    %125 = vector.broadcast %cst_58 : f32 to vector<32x16xf32>
    %126 = arith.addf %125, %124 : vector<32x16xf32>
    %127 = arith.divf %125, %126 : vector<32x16xf32>
    %128 = arith.mulf %122, %127 : vector<32x16xf32>
    %cst_59 = arith.constant dense<0.000000e+00> : vector<80x16xf32>
    %129 = tpu.matmul %11, %128, %cst_59 {dimension_numbers = #tpu.dot_dimension_numbers<[1], [0], [0], [1], [0, 0, 1, 1], [], []>} : vector<80x32xf32>, vector<32x16xf32>, vector<80x16xf32> -> vector<80x16xf32>
    %130 = vector.broadcast %12 : vector<80x1xf32> to vector<80x16xf32>
    %131 = arith.addf %129, %130 : vector<80x16xf32>
    %132 = math.tanh %131 : vector<80x16xf32>
    %c1_60 = arith.constant 1 : index
    %c0_61 = arith.constant 0 : index
    %c0_62 = arith.constant 0 : index
    %133 = vector.load %arg1[%c1_60, %c0_61, %c0_62] : memref<9x5x16xf32, #tpu.memory_space<vmem>>, vector<1x5x16xf32>
    %134 = vector.shape_cast %133 : vector<1x5x16xf32> to vector<5x16xf32>
    %c0_63 = arith.constant 0 : index
    %c0_64 = arith.constant 0 : index
    %c0_65 = arith.constant 0 : index
    %135 = vector.load %arg1[%c0_63, %c0_64, %c0_65] : memref<9x5x16xf32, #tpu.memory_space<vmem>>, vector<1x5x16xf32>
    %136 = vector.shape_cast %135 : vector<1x5x16xf32> to vector<5x16xf32>
    %137 = arith.subf %134, %136 : vector<5x16xf32>
    %138 = vector.extract_strided_slice %132 {offsets = [0, 0], sizes = [16, 16], strides = [1, 1]} : vector<80x16xf32> to vector<16x16xf32>
    %139 = vector.extract_strided_slice %137 {offsets = [0, 0], sizes = [1, 16], strides = [1, 1]} : vector<5x16xf32> to vector<1x16xf32>
    %140 = vector.broadcast %139 : vector<1x16xf32> to vector<16x16xf32>
    %141 = arith.mulf %138, %140 : vector<16x16xf32>
    %142 = vector.extract_strided_slice %132 {offsets = [16, 0], sizes = [16, 16], strides = [1, 1]} : vector<80x16xf32> to vector<16x16xf32>
    %143 = vector.extract_strided_slice %137 {offsets = [1, 0], sizes = [1, 16], strides = [1, 1]} : vector<5x16xf32> to vector<1x16xf32>
    %144 = vector.broadcast %143 : vector<1x16xf32> to vector<16x16xf32>
    %145 = arith.mulf %142, %144 : vector<16x16xf32>
    %146 = arith.addf %141, %145 : vector<16x16xf32>
    %147 = vector.extract_strided_slice %132 {offsets = [32, 0], sizes = [16, 16], strides = [1, 1]} : vector<80x16xf32> to vector<16x16xf32>
    %148 = vector.extract_strided_slice %137 {offsets = [2, 0], sizes = [1, 16], strides = [1, 1]} : vector<5x16xf32> to vector<1x16xf32>
    %149 = vector.broadcast %148 : vector<1x16xf32> to vector<16x16xf32>
    %150 = arith.mulf %147, %149 : vector<16x16xf32>
    %151 = arith.addf %146, %150 : vector<16x16xf32>
    %152 = vector.extract_strided_slice %132 {offsets = [48, 0], sizes = [16, 16], strides = [1, 1]} : vector<80x16xf32> to vector<16x16xf32>
    %153 = vector.extract_strided_slice %137 {offsets = [3, 0], sizes = [1, 16], strides = [1, 1]} : vector<5x16xf32> to vector<1x16xf32>
    %154 = vector.broadcast %153 : vector<1x16xf32> to vector<16x16xf32>
    %155 = arith.mulf %152, %154 : vector<16x16xf32>
    %156 = arith.addf %151, %155 : vector<16x16xf32>
    %157 = vector.extract_strided_slice %132 {offsets = [64, 0], sizes = [16, 16], strides = [1, 1]} : vector<80x16xf32> to vector<16x16xf32>
    %158 = vector.extract_strided_slice %137 {offsets = [4, 0], sizes = [1, 16], strides = [1, 1]} : vector<5x16xf32> to vector<1x16xf32>
    %159 = vector.broadcast %158 : vector<1x16xf32> to vector<16x16xf32>
    %160 = arith.mulf %157, %159 : vector<16x16xf32>
    %161 = arith.addf %156, %160 : vector<16x16xf32>
    %162 = arith.addf %99, %161 : vector<16x16xf32>
    %cst_66 = arith.constant 5.000000e-01 : f32
    %163 = vector.broadcast %cst_66 : f32 to vector<16x16xf32>
    %164 = arith.mulf %163, %162 : vector<16x16xf32>
    %165 = arith.addf %41, %164 : vector<16x16xf32>
    %cst_67 = arith.constant 2.000000e+00 : f32
    %166 = vector.broadcast %cst_67 : f32 to vector<16x16xf32>
    %167 = arith.mulf %166, %165 : vector<16x16xf32>
    %168 = arith.subf %167, %103 : vector<16x16xf32>
    %169 = arith.addf %168, %161 : vector<16x16xf32>
    %cst_68 = arith.constant 2.000000e+00 : f32
    %170 = vector.broadcast %cst_68 : f32 to vector<32x1xf32>
    %171 = arith.mulf %170, %6 : vector<32x1xf32>
    %172 = arith.addf %171, %8 : vector<32x1xf32>
    %cst_69 = arith.constant dense<0.000000e+00> : vector<32x16xf32>
    %173 = tpu.matmul %7, %169, %cst_69 {dimension_numbers = #tpu.dot_dimension_numbers<[1], [0], [0], [1], [0, 0, 1, 1], [], []>} : vector<32x16xf32>, vector<16x16xf32>, vector<32x16xf32> -> vector<32x16xf32>
    %174 = vector.broadcast %172 : vector<32x1xf32> to vector<32x16xf32>
    %175 = arith.addf %173, %174 : vector<32x16xf32>
    %cst_70 = arith.constant 0.908999979 : f32
    %176 = vector.broadcast %cst_70 : f32 to vector<32x16xf32>
    %177 = arith.mulf %176, %175 : vector<32x16xf32>
    %178 = arith.negf %175 : vector<32x16xf32>
    %179 = math.exp %178 : vector<32x16xf32>
    %cst_71 = arith.constant 1.000000e+00 : f32
    %180 = vector.broadcast %cst_71 : f32 to vector<32x16xf32>
    %181 = arith.addf %180, %179 : vector<32x16xf32>
    %182 = arith.divf %180, %181 : vector<32x16xf32>
    %183 = arith.mulf %177, %182 : vector<32x16xf32>
    %cst_72 = arith.constant dense<0.000000e+00> : vector<32x16xf32>
    %184 = tpu.matmul %9, %183, %cst_72 {dimension_numbers = #tpu.dot_dimension_numbers<[1], [0], [0], [1], [0, 0, 1, 1], [], []>} : vector<32x32xf32>, vector<32x16xf32>, vector<32x16xf32> -> vector<32x16xf32>
    %185 = vector.broadcast %10 : vector<32x1xf32> to vector<32x16xf32>
    %186 = arith.addf %184, %185 : vector<32x16xf32>
    %cst_73 = arith.constant 0.908999979 : f32
    %187 = vector.broadcast %cst_73 : f32 to vector<32x16xf32>
    %188 = arith.mulf %187, %186 : vector<32x16xf32>
    %189 = arith.negf %186 : vector<32x16xf32>
    %190 = math.exp %189 : vector<32x16xf32>
    %cst_74 = arith.constant 1.000000e+00 : f32
    %191 = vector.broadcast %cst_74 : f32 to vector<32x16xf32>
    %192 = arith.addf %191, %190 : vector<32x16xf32>
    %193 = arith.divf %191, %192 : vector<32x16xf32>
    %194 = arith.mulf %188, %193 : vector<32x16xf32>
    %cst_75 = arith.constant dense<0.000000e+00> : vector<80x16xf32>
    %195 = tpu.matmul %11, %194, %cst_75 {dimension_numbers = #tpu.dot_dimension_numbers<[1], [0], [0], [1], [0, 0, 1, 1], [], []>} : vector<80x32xf32>, vector<32x16xf32>, vector<80x16xf32> -> vector<80x16xf32>
    %196 = vector.broadcast %12 : vector<80x1xf32> to vector<80x16xf32>
    %197 = arith.addf %195, %196 : vector<80x16xf32>
    %198 = math.tanh %197 : vector<80x16xf32>
    %c2 = arith.constant 2 : index
    %c0_76 = arith.constant 0 : index
    %c0_77 = arith.constant 0 : index
    %199 = vector.load %arg1[%c2, %c0_76, %c0_77] : memref<9x5x16xf32, #tpu.memory_space<vmem>>, vector<1x5x16xf32>
    %200 = vector.shape_cast %199 : vector<1x5x16xf32> to vector<5x16xf32>
    %c1_78 = arith.constant 1 : index
    %c0_79 = arith.constant 0 : index
    %c0_80 = arith.constant 0 : index
    %201 = vector.load %arg1[%c1_78, %c0_79, %c0_80] : memref<9x5x16xf32, #tpu.memory_space<vmem>>, vector<1x5x16xf32>
    %202 = vector.shape_cast %201 : vector<1x5x16xf32> to vector<5x16xf32>
    %203 = arith.subf %200, %202 : vector<5x16xf32>
    %204 = vector.extract_strided_slice %198 {offsets = [0, 0], sizes = [16, 16], strides = [1, 1]} : vector<80x16xf32> to vector<16x16xf32>
    %205 = vector.extract_strided_slice %203 {offsets = [0, 0], sizes = [1, 16], strides = [1, 1]} : vector<5x16xf32> to vector<1x16xf32>
    %206 = vector.broadcast %205 : vector<1x16xf32> to vector<16x16xf32>
    %207 = arith.mulf %204, %206 : vector<16x16xf32>
    %208 = vector.extract_strided_slice %198 {offsets = [16, 0], sizes = [16, 16], strides = [1, 1]} : vector<80x16xf32> to vector<16x16xf32>
    %209 = vector.extract_strided_slice %203 {offsets = [1, 0], sizes = [1, 16], strides = [1, 1]} : vector<5x16xf32> to vector<1x16xf32>
    %210 = vector.broadcast %209 : vector<1x16xf32> to vector<16x16xf32>
    %211 = arith.mulf %208, %210 : vector<16x16xf32>
    %212 = arith.addf %207, %211 : vector<16x16xf32>
    %213 = vector.extract_strided_slice %198 {offsets = [32, 0], sizes = [16, 16], strides = [1, 1]} : vector<80x16xf32> to vector<16x16xf32>
    %214 = vector.extract_strided_slice %203 {offsets = [2, 0], sizes = [1, 16], strides = [1, 1]} : vector<5x16xf32> to vector<1x16xf32>
    %215 = vector.broadcast %214 : vector<1x16xf32> to vector<16x16xf32>
    %216 = arith.mulf %213, %215 : vector<16x16xf32>
    %217 = arith.addf %212, %216 : vector<16x16xf32>
    %218 = vector.extract_strided_slice %198 {offsets = [48, 0], sizes = [16, 16], strides = [1, 1]} : vector<80x16xf32> to vector<16x16xf32>
    %219 = vector.extract_strided_slice %203 {offsets = [3, 0], sizes = [1, 16], strides = [1, 1]} : vector<5x16xf32> to vector<1x16xf32>
    %220 = vector.broadcast %219 : vector<1x16xf32> to vector<16x16xf32>
    %221 = arith.mulf %218, %220 : vector<16x16xf32>
    %222 = arith.addf %217, %221 : vector<16x16xf32>
    %223 = vector.extract_strided_slice %198 {offsets = [64, 0], sizes = [16, 16], strides = [1, 1]} : vector<80x16xf32> to vector<16x16xf32>
    %224 = vector.extract_strided_slice %203 {offsets = [4, 0], sizes = [1, 16], strides = [1, 1]} : vector<5x16xf32> to vector<1x16xf32>
    %225 = vector.broadcast %224 : vector<1x16xf32> to vector<16x16xf32>
    %226 = arith.mulf %223, %225 : vector<16x16xf32>
    %227 = arith.addf %222, %226 : vector<16x16xf32>
    %228 = arith.addf %161, %227 : vector<16x16xf32>
    %cst_81 = arith.constant 5.000000e-01 : f32
    %229 = vector.broadcast %cst_81 : f32 to vector<16x16xf32>
    %230 = arith.mulf %229, %228 : vector<16x16xf32>
    %231 = arith.addf %165, %230 : vector<16x16xf32>
    %cst_82 = arith.constant 2.000000e+00 : f32
    %232 = vector.broadcast %cst_82 : f32 to vector<16x16xf32>
    %233 = arith.mulf %232, %231 : vector<16x16xf32>
    %234 = arith.subf %233, %169 : vector<16x16xf32>
    %235 = arith.addf %234, %227 : vector<16x16xf32>
    %cst_83 = arith.constant 3.000000e+00 : f32
    %236 = vector.broadcast %cst_83 : f32 to vector<32x1xf32>
    %237 = arith.mulf %236, %6 : vector<32x1xf32>
    %238 = arith.addf %237, %8 : vector<32x1xf32>
    %cst_84 = arith.constant dense<0.000000e+00> : vector<32x16xf32>
    %239 = tpu.matmul %7, %235, %cst_84 {dimension_numbers = #tpu.dot_dimension_numbers<[1], [0], [0], [1], [0, 0, 1, 1], [], []>} : vector<32x16xf32>, vector<16x16xf32>, vector<32x16xf32> -> vector<32x16xf32>
    %240 = vector.broadcast %238 : vector<32x1xf32> to vector<32x16xf32>
    %241 = arith.addf %239, %240 : vector<32x16xf32>
    %cst_85 = arith.constant 0.908999979 : f32
    %242 = vector.broadcast %cst_85 : f32 to vector<32x16xf32>
    %243 = arith.mulf %242, %241 : vector<32x16xf32>
    %244 = arith.negf %241 : vector<32x16xf32>
    %245 = math.exp %244 : vector<32x16xf32>
    %cst_86 = arith.constant 1.000000e+00 : f32
    %246 = vector.broadcast %cst_86 : f32 to vector<32x16xf32>
    %247 = arith.addf %246, %245 : vector<32x16xf32>
    %248 = arith.divf %246, %247 : vector<32x16xf32>
    %249 = arith.mulf %243, %248 : vector<32x16xf32>
    %cst_87 = arith.constant dense<0.000000e+00> : vector<32x16xf32>
    %250 = tpu.matmul %9, %249, %cst_87 {dimension_numbers = #tpu.dot_dimension_numbers<[1], [0], [0], [1], [0, 0, 1, 1], [], []>} : vector<32x32xf32>, vector<32x16xf32>, vector<32x16xf32> -> vector<32x16xf32>
    %251 = vector.broadcast %10 : vector<32x1xf32> to vector<32x16xf32>
    %252 = arith.addf %250, %251 : vector<32x16xf32>
    %cst_88 = arith.constant 0.908999979 : f32
    %253 = vector.broadcast %cst_88 : f32 to vector<32x16xf32>
    %254 = arith.mulf %253, %252 : vector<32x16xf32>
    %255 = arith.negf %252 : vector<32x16xf32>
    %256 = math.exp %255 : vector<32x16xf32>
    %cst_89 = arith.constant 1.000000e+00 : f32
    %257 = vector.broadcast %cst_89 : f32 to vector<32x16xf32>
    %258 = arith.addf %257, %256 : vector<32x16xf32>
    %259 = arith.divf %257, %258 : vector<32x16xf32>
    %260 = arith.mulf %254, %259 : vector<32x16xf32>
    %cst_90 = arith.constant dense<0.000000e+00> : vector<80x16xf32>
    %261 = tpu.matmul %11, %260, %cst_90 {dimension_numbers = #tpu.dot_dimension_numbers<[1], [0], [0], [1], [0, 0, 1, 1], [], []>} : vector<80x32xf32>, vector<32x16xf32>, vector<80x16xf32> -> vector<80x16xf32>
    %262 = vector.broadcast %12 : vector<80x1xf32> to vector<80x16xf32>
    %263 = arith.addf %261, %262 : vector<80x16xf32>
    %264 = math.tanh %263 : vector<80x16xf32>
    %c3 = arith.constant 3 : index
    %c0_91 = arith.constant 0 : index
    %c0_92 = arith.constant 0 : index
    %265 = vector.load %arg1[%c3, %c0_91, %c0_92] : memref<9x5x16xf32, #tpu.memory_space<vmem>>, vector<1x5x16xf32>
    %266 = vector.shape_cast %265 : vector<1x5x16xf32> to vector<5x16xf32>
    %c2_93 = arith.constant 2 : index
    %c0_94 = arith.constant 0 : index
    %c0_95 = arith.constant 0 : index
    %267 = vector.load %arg1[%c2_93, %c0_94, %c0_95] : memref<9x5x16xf32, #tpu.memory_space<vmem>>, vector<1x5x16xf32>
    %268 = vector.shape_cast %267 : vector<1x5x16xf32> to vector<5x16xf32>
    %269 = arith.subf %266, %268 : vector<5x16xf32>
    %270 = vector.extract_strided_slice %264 {offsets = [0, 0], sizes = [16, 16], strides = [1, 1]} : vector<80x16xf32> to vector<16x16xf32>
    %271 = vector.extract_strided_slice %269 {offsets = [0, 0], sizes = [1, 16], strides = [1, 1]} : vector<5x16xf32> to vector<1x16xf32>
    %272 = vector.broadcast %271 : vector<1x16xf32> to vector<16x16xf32>
    %273 = arith.mulf %270, %272 : vector<16x16xf32>
    %274 = vector.extract_strided_slice %264 {offsets = [16, 0], sizes = [16, 16], strides = [1, 1]} : vector<80x16xf32> to vector<16x16xf32>
    %275 = vector.extract_strided_slice %269 {offsets = [1, 0], sizes = [1, 16], strides = [1, 1]} : vector<5x16xf32> to vector<1x16xf32>
    %276 = vector.broadcast %275 : vector<1x16xf32> to vector<16x16xf32>
    %277 = arith.mulf %274, %276 : vector<16x16xf32>
    %278 = arith.addf %273, %277 : vector<16x16xf32>
    %279 = vector.extract_strided_slice %264 {offsets = [32, 0], sizes = [16, 16], strides = [1, 1]} : vector<80x16xf32> to vector<16x16xf32>
    %280 = vector.extract_strided_slice %269 {offsets = [2, 0], sizes = [1, 16], strides = [1, 1]} : vector<5x16xf32> to vector<1x16xf32>
    %281 = vector.broadcast %280 : vector<1x16xf32> to vector<16x16xf32>
    %282 = arith.mulf %279, %281 : vector<16x16xf32>
    %283 = arith.addf %278, %282 : vector<16x16xf32>
    %284 = vector.extract_strided_slice %264 {offsets = [48, 0], sizes = [16, 16], strides = [1, 1]} : vector<80x16xf32> to vector<16x16xf32>
    %285 = vector.extract_strided_slice %269 {offsets = [3, 0], sizes = [1, 16], strides = [1, 1]} : vector<5x16xf32> to vector<1x16xf32>
    %286 = vector.broadcast %285 : vector<1x16xf32> to vector<16x16xf32>
    %287 = arith.mulf %284, %286 : vector<16x16xf32>
    %288 = arith.addf %283, %287 : vector<16x16xf32>
    %289 = vector.extract_strided_slice %264 {offsets = [64, 0], sizes = [16, 16], strides = [1, 1]} : vector<80x16xf32> to vector<16x16xf32>
    %290 = vector.extract_strided_slice %269 {offsets = [4, 0], sizes = [1, 16], strides = [1, 1]} : vector<5x16xf32> to vector<1x16xf32>
    %291 = vector.broadcast %290 : vector<1x16xf32> to vector<16x16xf32>
    %292 = arith.mulf %289, %291 : vector<16x16xf32>
    %293 = arith.addf %288, %292 : vector<16x16xf32>
    %294 = arith.addf %227, %293 : vector<16x16xf32>
    %cst_96 = arith.constant 5.000000e-01 : f32
    %295 = vector.broadcast %cst_96 : f32 to vector<16x16xf32>
    %296 = arith.mulf %295, %294 : vector<16x16xf32>
    %297 = arith.addf %231, %296 : vector<16x16xf32>
    %cst_97 = arith.constant 2.000000e+00 : f32
    %298 = vector.broadcast %cst_97 : f32 to vector<16x16xf32>
    %299 = arith.mulf %298, %297 : vector<16x16xf32>
    %300 = arith.subf %299, %235 : vector<16x16xf32>
    %301 = arith.addf %300, %293 : vector<16x16xf32>
    %cst_98 = arith.constant 4.000000e+00 : f32
    %302 = vector.broadcast %cst_98 : f32 to vector<32x1xf32>
    %303 = arith.mulf %302, %6 : vector<32x1xf32>
    %304 = arith.addf %303, %8 : vector<32x1xf32>
    %cst_99 = arith.constant dense<0.000000e+00> : vector<32x16xf32>
    %305 = tpu.matmul %7, %301, %cst_99 {dimension_numbers = #tpu.dot_dimension_numbers<[1], [0], [0], [1], [0, 0, 1, 1], [], []>} : vector<32x16xf32>, vector<16x16xf32>, vector<32x16xf32> -> vector<32x16xf32>
    %306 = vector.broadcast %304 : vector<32x1xf32> to vector<32x16xf32>
    %307 = arith.addf %305, %306 : vector<32x16xf32>
    %cst_100 = arith.constant 0.908999979 : f32
    %308 = vector.broadcast %cst_100 : f32 to vector<32x16xf32>
    %309 = arith.mulf %308, %307 : vector<32x16xf32>
    %310 = arith.negf %307 : vector<32x16xf32>
    %311 = math.exp %310 : vector<32x16xf32>
    %cst_101 = arith.constant 1.000000e+00 : f32
    %312 = vector.broadcast %cst_101 : f32 to vector<32x16xf32>
    %313 = arith.addf %312, %311 : vector<32x16xf32>
    %314 = arith.divf %312, %313 : vector<32x16xf32>
    %315 = arith.mulf %309, %314 : vector<32x16xf32>
    %cst_102 = arith.constant dense<0.000000e+00> : vector<32x16xf32>
    %316 = tpu.matmul %9, %315, %cst_102 {dimension_numbers = #tpu.dot_dimension_numbers<[1], [0], [0], [1], [0, 0, 1, 1], [], []>} : vector<32x32xf32>, vector<32x16xf32>, vector<32x16xf32> -> vector<32x16xf32>
    %317 = vector.broadcast %10 : vector<32x1xf32> to vector<32x16xf32>
    %318 = arith.addf %316, %317 : vector<32x16xf32>
    %cst_103 = arith.constant 0.908999979 : f32
    %319 = vector.broadcast %cst_103 : f32 to vector<32x16xf32>
    %320 = arith.mulf %319, %318 : vector<32x16xf32>
    %321 = arith.negf %318 : vector<32x16xf32>
    %322 = math.exp %321 : vector<32x16xf32>
    %cst_104 = arith.constant 1.000000e+00 : f32
    %323 = vector.broadcast %cst_104 : f32 to vector<32x16xf32>
    %324 = arith.addf %323, %322 : vector<32x16xf32>
    %325 = arith.divf %323, %324 : vector<32x16xf32>
    %326 = arith.mulf %320, %325 : vector<32x16xf32>
    %cst_105 = arith.constant dense<0.000000e+00> : vector<80x16xf32>
    %327 = tpu.matmul %11, %326, %cst_105 {dimension_numbers = #tpu.dot_dimension_numbers<[1], [0], [0], [1], [0, 0, 1, 1], [], []>} : vector<80x32xf32>, vector<32x16xf32>, vector<80x16xf32> -> vector<80x16xf32>
    %328 = vector.broadcast %12 : vector<80x1xf32> to vector<80x16xf32>
    %329 = arith.addf %327, %328 : vector<80x16xf32>
    %330 = math.tanh %329 : vector<80x16xf32>
    %c4 = arith.constant 4 : index
    %c0_106 = arith.constant 0 : index
    %c0_107 = arith.constant 0 : index
    %331 = vector.load %arg1[%c4, %c0_106, %c0_107] : memref<9x5x16xf32, #tpu.memory_space<vmem>>, vector<1x5x16xf32>
    %332 = vector.shape_cast %331 : vector<1x5x16xf32> to vector<5x16xf32>
    %c3_108 = arith.constant 3 : index
    %c0_109 = arith.constant 0 : index
    %c0_110 = arith.constant 0 : index
    %333 = vector.load %arg1[%c3_108, %c0_109, %c0_110] : memref<9x5x16xf32, #tpu.memory_space<vmem>>, vector<1x5x16xf32>
    %334 = vector.shape_cast %333 : vector<1x5x16xf32> to vector<5x16xf32>
    %335 = arith.subf %332, %334 : vector<5x16xf32>
    %336 = vector.extract_strided_slice %330 {offsets = [0, 0], sizes = [16, 16], strides = [1, 1]} : vector<80x16xf32> to vector<16x16xf32>
    %337 = vector.extract_strided_slice %335 {offsets = [0, 0], sizes = [1, 16], strides = [1, 1]} : vector<5x16xf32> to vector<1x16xf32>
    %338 = vector.broadcast %337 : vector<1x16xf32> to vector<16x16xf32>
    %339 = arith.mulf %336, %338 : vector<16x16xf32>
    %340 = vector.extract_strided_slice %330 {offsets = [16, 0], sizes = [16, 16], strides = [1, 1]} : vector<80x16xf32> to vector<16x16xf32>
    %341 = vector.extract_strided_slice %335 {offsets = [1, 0], sizes = [1, 16], strides = [1, 1]} : vector<5x16xf32> to vector<1x16xf32>
    %342 = vector.broadcast %341 : vector<1x16xf32> to vector<16x16xf32>
    %343 = arith.mulf %340, %342 : vector<16x16xf32>
    %344 = arith.addf %339, %343 : vector<16x16xf32>
    %345 = vector.extract_strided_slice %330 {offsets = [32, 0], sizes = [16, 16], strides = [1, 1]} : vector<80x16xf32> to vector<16x16xf32>
    %346 = vector.extract_strided_slice %335 {offsets = [2, 0], sizes = [1, 16], strides = [1, 1]} : vector<5x16xf32> to vector<1x16xf32>
    %347 = vector.broadcast %346 : vector<1x16xf32> to vector<16x16xf32>
    %348 = arith.mulf %345, %347 : vector<16x16xf32>
    %349 = arith.addf %344, %348 : vector<16x16xf32>
    %350 = vector.extract_strided_slice %330 {offsets = [48, 0], sizes = [16, 16], strides = [1, 1]} : vector<80x16xf32> to vector<16x16xf32>
    %351 = vector.extract_strided_slice %335 {offsets = [3, 0], sizes = [1, 16], strides = [1, 1]} : vector<5x16xf32> to vector<1x16xf32>
    %352 = vector.broadcast %351 : vector<1x16xf32> to vector<16x16xf32>
    %353 = arith.mulf %350, %352 : vector<16x16xf32>
    %354 = arith.addf %349, %353 : vector<16x16xf32>
    %355 = vector.extract_strided_slice %330 {offsets = [64, 0], sizes = [16, 16], strides = [1, 1]} : vector<80x16xf32> to vector<16x16xf32>
    %356 = vector.extract_strided_slice %335 {offsets = [4, 0], sizes = [1, 16], strides = [1, 1]} : vector<5x16xf32> to vector<1x16xf32>
    %357 = vector.broadcast %356 : vector<1x16xf32> to vector<16x16xf32>
    %358 = arith.mulf %355, %357 : vector<16x16xf32>
    %359 = arith.addf %354, %358 : vector<16x16xf32>
    %360 = arith.addf %293, %359 : vector<16x16xf32>
    %cst_111 = arith.constant 5.000000e-01 : f32
    %361 = vector.broadcast %cst_111 : f32 to vector<16x16xf32>
    %362 = arith.mulf %361, %360 : vector<16x16xf32>
    %363 = arith.addf %297, %362 : vector<16x16xf32>
    %cst_112 = arith.constant 2.000000e+00 : f32
    %364 = vector.broadcast %cst_112 : f32 to vector<16x16xf32>
    %365 = arith.mulf %364, %363 : vector<16x16xf32>
    %366 = arith.subf %365, %301 : vector<16x16xf32>
    %367 = arith.addf %366, %359 : vector<16x16xf32>
    %cst_113 = arith.constant 5.000000e+00 : f32
    %368 = vector.broadcast %cst_113 : f32 to vector<32x1xf32>
    %369 = arith.mulf %368, %6 : vector<32x1xf32>
    %370 = arith.addf %369, %8 : vector<32x1xf32>
    %cst_114 = arith.constant dense<0.000000e+00> : vector<32x16xf32>
    %371 = tpu.matmul %7, %367, %cst_114 {dimension_numbers = #tpu.dot_dimension_numbers<[1], [0], [0], [1], [0, 0, 1, 1], [], []>} : vector<32x16xf32>, vector<16x16xf32>, vector<32x16xf32> -> vector<32x16xf32>
    %372 = vector.broadcast %370 : vector<32x1xf32> to vector<32x16xf32>
    %373 = arith.addf %371, %372 : vector<32x16xf32>
    %cst_115 = arith.constant 0.908999979 : f32
    %374 = vector.broadcast %cst_115 : f32 to vector<32x16xf32>
    %375 = arith.mulf %374, %373 : vector<32x16xf32>
    %376 = arith.negf %373 : vector<32x16xf32>
    %377 = math.exp %376 : vector<32x16xf32>
    %cst_116 = arith.constant 1.000000e+00 : f32
    %378 = vector.broadcast %cst_116 : f32 to vector<32x16xf32>
    %379 = arith.addf %378, %377 : vector<32x16xf32>
    %380 = arith.divf %378, %379 : vector<32x16xf32>
    %381 = arith.mulf %375, %380 : vector<32x16xf32>
    %cst_117 = arith.constant dense<0.000000e+00> : vector<32x16xf32>
    %382 = tpu.matmul %9, %381, %cst_117 {dimension_numbers = #tpu.dot_dimension_numbers<[1], [0], [0], [1], [0, 0, 1, 1], [], []>} : vector<32x32xf32>, vector<32x16xf32>, vector<32x16xf32> -> vector<32x16xf32>
    %383 = vector.broadcast %10 : vector<32x1xf32> to vector<32x16xf32>
    %384 = arith.addf %382, %383 : vector<32x16xf32>
    %cst_118 = arith.constant 0.908999979 : f32
    %385 = vector.broadcast %cst_118 : f32 to vector<32x16xf32>
    %386 = arith.mulf %385, %384 : vector<32x16xf32>
    %387 = arith.negf %384 : vector<32x16xf32>
    %388 = math.exp %387 : vector<32x16xf32>
    %cst_119 = arith.constant 1.000000e+00 : f32
    %389 = vector.broadcast %cst_119 : f32 to vector<32x16xf32>
    %390 = arith.addf %389, %388 : vector<32x16xf32>
    %391 = arith.divf %389, %390 : vector<32x16xf32>
    %392 = arith.mulf %386, %391 : vector<32x16xf32>
    %cst_120 = arith.constant dense<0.000000e+00> : vector<80x16xf32>
    %393 = tpu.matmul %11, %392, %cst_120 {dimension_numbers = #tpu.dot_dimension_numbers<[1], [0], [0], [1], [0, 0, 1, 1], [], []>} : vector<80x32xf32>, vector<32x16xf32>, vector<80x16xf32> -> vector<80x16xf32>
    %394 = vector.broadcast %12 : vector<80x1xf32> to vector<80x16xf32>
    %395 = arith.addf %393, %394 : vector<80x16xf32>
    %396 = math.tanh %395 : vector<80x16xf32>
    %c5 = arith.constant 5 : index
    %c0_121 = arith.constant 0 : index
    %c0_122 = arith.constant 0 : index
    %397 = vector.load %arg1[%c5, %c0_121, %c0_122] : memref<9x5x16xf32, #tpu.memory_space<vmem>>, vector<1x5x16xf32>
    %398 = vector.shape_cast %397 : vector<1x5x16xf32> to vector<5x16xf32>
    %c4_123 = arith.constant 4 : index
    %c0_124 = arith.constant 0 : index
    %c0_125 = arith.constant 0 : index
    %399 = vector.load %arg1[%c4_123, %c0_124, %c0_125] : memref<9x5x16xf32, #tpu.memory_space<vmem>>, vector<1x5x16xf32>
    %400 = vector.shape_cast %399 : vector<1x5x16xf32> to vector<5x16xf32>
    %401 = arith.subf %398, %400 : vector<5x16xf32>
    %402 = vector.extract_strided_slice %396 {offsets = [0, 0], sizes = [16, 16], strides = [1, 1]} : vector<80x16xf32> to vector<16x16xf32>
    %403 = vector.extract_strided_slice %401 {offsets = [0, 0], sizes = [1, 16], strides = [1, 1]} : vector<5x16xf32> to vector<1x16xf32>
    %404 = vector.broadcast %403 : vector<1x16xf32> to vector<16x16xf32>
    %405 = arith.mulf %402, %404 : vector<16x16xf32>
    %406 = vector.extract_strided_slice %396 {offsets = [16, 0], sizes = [16, 16], strides = [1, 1]} : vector<80x16xf32> to vector<16x16xf32>
    %407 = vector.extract_strided_slice %401 {offsets = [1, 0], sizes = [1, 16], strides = [1, 1]} : vector<5x16xf32> to vector<1x16xf32>
    %408 = vector.broadcast %407 : vector<1x16xf32> to vector<16x16xf32>
    %409 = arith.mulf %406, %408 : vector<16x16xf32>
    %410 = arith.addf %405, %409 : vector<16x16xf32>
    %411 = vector.extract_strided_slice %396 {offsets = [32, 0], sizes = [16, 16], strides = [1, 1]} : vector<80x16xf32> to vector<16x16xf32>
    %412 = vector.extract_strided_slice %401 {offsets = [2, 0], sizes = [1, 16], strides = [1, 1]} : vector<5x16xf32> to vector<1x16xf32>
    %413 = vector.broadcast %412 : vector<1x16xf32> to vector<16x16xf32>
    %414 = arith.mulf %411, %413 : vector<16x16xf32>
    %415 = arith.addf %410, %414 : vector<16x16xf32>
    %416 = vector.extract_strided_slice %396 {offsets = [48, 0], sizes = [16, 16], strides = [1, 1]} : vector<80x16xf32> to vector<16x16xf32>
    %417 = vector.extract_strided_slice %401 {offsets = [3, 0], sizes = [1, 16], strides = [1, 1]} : vector<5x16xf32> to vector<1x16xf32>
    %418 = vector.broadcast %417 : vector<1x16xf32> to vector<16x16xf32>
    %419 = arith.mulf %416, %418 : vector<16x16xf32>
    %420 = arith.addf %415, %419 : vector<16x16xf32>
    %421 = vector.extract_strided_slice %396 {offsets = [64, 0], sizes = [16, 16], strides = [1, 1]} : vector<80x16xf32> to vector<16x16xf32>
    %422 = vector.extract_strided_slice %401 {offsets = [4, 0], sizes = [1, 16], strides = [1, 1]} : vector<5x16xf32> to vector<1x16xf32>
    %423 = vector.broadcast %422 : vector<1x16xf32> to vector<16x16xf32>
    %424 = arith.mulf %421, %423 : vector<16x16xf32>
    %425 = arith.addf %420, %424 : vector<16x16xf32>
    %426 = arith.addf %359, %425 : vector<16x16xf32>
    %cst_126 = arith.constant 5.000000e-01 : f32
    %427 = vector.broadcast %cst_126 : f32 to vector<16x16xf32>
    %428 = arith.mulf %427, %426 : vector<16x16xf32>
    %429 = arith.addf %363, %428 : vector<16x16xf32>
    %cst_127 = arith.constant 2.000000e+00 : f32
    %430 = vector.broadcast %cst_127 : f32 to vector<16x16xf32>
    %431 = arith.mulf %430, %429 : vector<16x16xf32>
    %432 = arith.subf %431, %367 : vector<16x16xf32>
    %433 = arith.addf %432, %425 : vector<16x16xf32>
    %cst_128 = arith.constant 6.000000e+00 : f32
    %434 = vector.broadcast %cst_128 : f32 to vector<32x1xf32>
    %435 = arith.mulf %434, %6 : vector<32x1xf32>
    %436 = arith.addf %435, %8 : vector<32x1xf32>
    %cst_129 = arith.constant dense<0.000000e+00> : vector<32x16xf32>
    %437 = tpu.matmul %7, %433, %cst_129 {dimension_numbers = #tpu.dot_dimension_numbers<[1], [0], [0], [1], [0, 0, 1, 1], [], []>} : vector<32x16xf32>, vector<16x16xf32>, vector<32x16xf32> -> vector<32x16xf32>
    %438 = vector.broadcast %436 : vector<32x1xf32> to vector<32x16xf32>
    %439 = arith.addf %437, %438 : vector<32x16xf32>
    %cst_130 = arith.constant 0.908999979 : f32
    %440 = vector.broadcast %cst_130 : f32 to vector<32x16xf32>
    %441 = arith.mulf %440, %439 : vector<32x16xf32>
    %442 = arith.negf %439 : vector<32x16xf32>
    %443 = math.exp %442 : vector<32x16xf32>
    %cst_131 = arith.constant 1.000000e+00 : f32
    %444 = vector.broadcast %cst_131 : f32 to vector<32x16xf32>
    %445 = arith.addf %444, %443 : vector<32x16xf32>
    %446 = arith.divf %444, %445 : vector<32x16xf32>
    %447 = arith.mulf %441, %446 : vector<32x16xf32>
    %cst_132 = arith.constant dense<0.000000e+00> : vector<32x16xf32>
    %448 = tpu.matmul %9, %447, %cst_132 {dimension_numbers = #tpu.dot_dimension_numbers<[1], [0], [0], [1], [0, 0, 1, 1], [], []>} : vector<32x32xf32>, vector<32x16xf32>, vector<32x16xf32> -> vector<32x16xf32>
    %449 = vector.broadcast %10 : vector<32x1xf32> to vector<32x16xf32>
    %450 = arith.addf %448, %449 : vector<32x16xf32>
    %cst_133 = arith.constant 0.908999979 : f32
    %451 = vector.broadcast %cst_133 : f32 to vector<32x16xf32>
    %452 = arith.mulf %451, %450 : vector<32x16xf32>
    %453 = arith.negf %450 : vector<32x16xf32>
    %454 = math.exp %453 : vector<32x16xf32>
    %cst_134 = arith.constant 1.000000e+00 : f32
    %455 = vector.broadcast %cst_134 : f32 to vector<32x16xf32>
    %456 = arith.addf %455, %454 : vector<32x16xf32>
    %457 = arith.divf %455, %456 : vector<32x16xf32>
    %458 = arith.mulf %452, %457 : vector<32x16xf32>
    %cst_135 = arith.constant dense<0.000000e+00> : vector<80x16xf32>
    %459 = tpu.matmul %11, %458, %cst_135 {dimension_numbers = #tpu.dot_dimension_numbers<[1], [0], [0], [1], [0, 0, 1, 1], [], []>} : vector<80x32xf32>, vector<32x16xf32>, vector<80x16xf32> -> vector<80x16xf32>
    %460 = vector.broadcast %12 : vector<80x1xf32> to vector<80x16xf32>
    %461 = arith.addf %459, %460 : vector<80x16xf32>
    %462 = math.tanh %461 : vector<80x16xf32>
    %c6 = arith.constant 6 : index
    %c0_136 = arith.constant 0 : index
    %c0_137 = arith.constant 0 : index
    %463 = vector.load %arg1[%c6, %c0_136, %c0_137] : memref<9x5x16xf32, #tpu.memory_space<vmem>>, vector<1x5x16xf32>
    %464 = vector.shape_cast %463 : vector<1x5x16xf32> to vector<5x16xf32>
    %c5_138 = arith.constant 5 : index
    %c0_139 = arith.constant 0 : index
    %c0_140 = arith.constant 0 : index
    %465 = vector.load %arg1[%c5_138, %c0_139, %c0_140] : memref<9x5x16xf32, #tpu.memory_space<vmem>>, vector<1x5x16xf32>
    %466 = vector.shape_cast %465 : vector<1x5x16xf32> to vector<5x16xf32>
    %467 = arith.subf %464, %466 : vector<5x16xf32>
    %468 = vector.extract_strided_slice %462 {offsets = [0, 0], sizes = [16, 16], strides = [1, 1]} : vector<80x16xf32> to vector<16x16xf32>
    %469 = vector.extract_strided_slice %467 {offsets = [0, 0], sizes = [1, 16], strides = [1, 1]} : vector<5x16xf32> to vector<1x16xf32>
    %470 = vector.broadcast %469 : vector<1x16xf32> to vector<16x16xf32>
    %471 = arith.mulf %468, %470 : vector<16x16xf32>
    %472 = vector.extract_strided_slice %462 {offsets = [16, 0], sizes = [16, 16], strides = [1, 1]} : vector<80x16xf32> to vector<16x16xf32>
    %473 = vector.extract_strided_slice %467 {offsets = [1, 0], sizes = [1, 16], strides = [1, 1]} : vector<5x16xf32> to vector<1x16xf32>
    %474 = vector.broadcast %473 : vector<1x16xf32> to vector<16x16xf32>
    %475 = arith.mulf %472, %474 : vector<16x16xf32>
    %476 = arith.addf %471, %475 : vector<16x16xf32>
    %477 = vector.extract_strided_slice %462 {offsets = [32, 0], sizes = [16, 16], strides = [1, 1]} : vector<80x16xf32> to vector<16x16xf32>
    %478 = vector.extract_strided_slice %467 {offsets = [2, 0], sizes = [1, 16], strides = [1, 1]} : vector<5x16xf32> to vector<1x16xf32>
    %479 = vector.broadcast %478 : vector<1x16xf32> to vector<16x16xf32>
    %480 = arith.mulf %477, %479 : vector<16x16xf32>
    %481 = arith.addf %476, %480 : vector<16x16xf32>
    %482 = vector.extract_strided_slice %462 {offsets = [48, 0], sizes = [16, 16], strides = [1, 1]} : vector<80x16xf32> to vector<16x16xf32>
    %483 = vector.extract_strided_slice %467 {offsets = [3, 0], sizes = [1, 16], strides = [1, 1]} : vector<5x16xf32> to vector<1x16xf32>
    %484 = vector.broadcast %483 : vector<1x16xf32> to vector<16x16xf32>
    %485 = arith.mulf %482, %484 : vector<16x16xf32>
    %486 = arith.addf %481, %485 : vector<16x16xf32>
    %487 = vector.extract_strided_slice %462 {offsets = [64, 0], sizes = [16, 16], strides = [1, 1]} : vector<80x16xf32> to vector<16x16xf32>
    %488 = vector.extract_strided_slice %467 {offsets = [4, 0], sizes = [1, 16], strides = [1, 1]} : vector<5x16xf32> to vector<1x16xf32>
    %489 = vector.broadcast %488 : vector<1x16xf32> to vector<16x16xf32>
    %490 = arith.mulf %487, %489 : vector<16x16xf32>
    %491 = arith.addf %486, %490 : vector<16x16xf32>
    %492 = arith.addf %425, %491 : vector<16x16xf32>
    %cst_141 = arith.constant 5.000000e-01 : f32
    %493 = vector.broadcast %cst_141 : f32 to vector<16x16xf32>
    %494 = arith.mulf %493, %492 : vector<16x16xf32>
    %495 = arith.addf %429, %494 : vector<16x16xf32>
    %cst_142 = arith.constant 2.000000e+00 : f32
    %496 = vector.broadcast %cst_142 : f32 to vector<16x16xf32>
    %497 = arith.mulf %496, %495 : vector<16x16xf32>
    %498 = arith.subf %497, %433 : vector<16x16xf32>
    %499 = arith.addf %498, %491 : vector<16x16xf32>
    %cst_143 = arith.constant 7.000000e+00 : f32
    %500 = vector.broadcast %cst_143 : f32 to vector<32x1xf32>
    %501 = arith.mulf %500, %6 : vector<32x1xf32>
    %502 = arith.addf %501, %8 : vector<32x1xf32>
    %cst_144 = arith.constant dense<0.000000e+00> : vector<32x16xf32>
    %503 = tpu.matmul %7, %499, %cst_144 {dimension_numbers = #tpu.dot_dimension_numbers<[1], [0], [0], [1], [0, 0, 1, 1], [], []>} : vector<32x16xf32>, vector<16x16xf32>, vector<32x16xf32> -> vector<32x16xf32>
    %504 = vector.broadcast %502 : vector<32x1xf32> to vector<32x16xf32>
    %505 = arith.addf %503, %504 : vector<32x16xf32>
    %cst_145 = arith.constant 0.908999979 : f32
    %506 = vector.broadcast %cst_145 : f32 to vector<32x16xf32>
    %507 = arith.mulf %506, %505 : vector<32x16xf32>
    %508 = arith.negf %505 : vector<32x16xf32>
    %509 = math.exp %508 : vector<32x16xf32>
    %cst_146 = arith.constant 1.000000e+00 : f32
    %510 = vector.broadcast %cst_146 : f32 to vector<32x16xf32>
    %511 = arith.addf %510, %509 : vector<32x16xf32>
    %512 = arith.divf %510, %511 : vector<32x16xf32>
    %513 = arith.mulf %507, %512 : vector<32x16xf32>
    %cst_147 = arith.constant dense<0.000000e+00> : vector<32x16xf32>
    %514 = tpu.matmul %9, %513, %cst_147 {dimension_numbers = #tpu.dot_dimension_numbers<[1], [0], [0], [1], [0, 0, 1, 1], [], []>} : vector<32x32xf32>, vector<32x16xf32>, vector<32x16xf32> -> vector<32x16xf32>
    %515 = vector.broadcast %10 : vector<32x1xf32> to vector<32x16xf32>
    %516 = arith.addf %514, %515 : vector<32x16xf32>
    %cst_148 = arith.constant 0.908999979 : f32
    %517 = vector.broadcast %cst_148 : f32 to vector<32x16xf32>
    %518 = arith.mulf %517, %516 : vector<32x16xf32>
    %519 = arith.negf %516 : vector<32x16xf32>
    %520 = math.exp %519 : vector<32x16xf32>
    %cst_149 = arith.constant 1.000000e+00 : f32
    %521 = vector.broadcast %cst_149 : f32 to vector<32x16xf32>
    %522 = arith.addf %521, %520 : vector<32x16xf32>
    %523 = arith.divf %521, %522 : vector<32x16xf32>
    %524 = arith.mulf %518, %523 : vector<32x16xf32>
    %cst_150 = arith.constant dense<0.000000e+00> : vector<80x16xf32>
    %525 = tpu.matmul %11, %524, %cst_150 {dimension_numbers = #tpu.dot_dimension_numbers<[1], [0], [0], [1], [0, 0, 1, 1], [], []>} : vector<80x32xf32>, vector<32x16xf32>, vector<80x16xf32> -> vector<80x16xf32>
    %526 = vector.broadcast %12 : vector<80x1xf32> to vector<80x16xf32>
    %527 = arith.addf %525, %526 : vector<80x16xf32>
    %528 = math.tanh %527 : vector<80x16xf32>
    %c7 = arith.constant 7 : index
    %c0_151 = arith.constant 0 : index
    %c0_152 = arith.constant 0 : index
    %529 = vector.load %arg1[%c7, %c0_151, %c0_152] : memref<9x5x16xf32, #tpu.memory_space<vmem>>, vector<1x5x16xf32>
    %530 = vector.shape_cast %529 : vector<1x5x16xf32> to vector<5x16xf32>
    %c6_153 = arith.constant 6 : index
    %c0_154 = arith.constant 0 : index
    %c0_155 = arith.constant 0 : index
    %531 = vector.load %arg1[%c6_153, %c0_154, %c0_155] : memref<9x5x16xf32, #tpu.memory_space<vmem>>, vector<1x5x16xf32>
    %532 = vector.shape_cast %531 : vector<1x5x16xf32> to vector<5x16xf32>
    %533 = arith.subf %530, %532 : vector<5x16xf32>
    %534 = vector.extract_strided_slice %528 {offsets = [0, 0], sizes = [16, 16], strides = [1, 1]} : vector<80x16xf32> to vector<16x16xf32>
    %535 = vector.extract_strided_slice %533 {offsets = [0, 0], sizes = [1, 16], strides = [1, 1]} : vector<5x16xf32> to vector<1x16xf32>
    %536 = vector.broadcast %535 : vector<1x16xf32> to vector<16x16xf32>
    %537 = arith.mulf %534, %536 : vector<16x16xf32>
    %538 = vector.extract_strided_slice %528 {offsets = [16, 0], sizes = [16, 16], strides = [1, 1]} : vector<80x16xf32> to vector<16x16xf32>
    %539 = vector.extract_strided_slice %533 {offsets = [1, 0], sizes = [1, 16], strides = [1, 1]} : vector<5x16xf32> to vector<1x16xf32>
    %540 = vector.broadcast %539 : vector<1x16xf32> to vector<16x16xf32>
    %541 = arith.mulf %538, %540 : vector<16x16xf32>
    %542 = arith.addf %537, %541 : vector<16x16xf32>
    %543 = vector.extract_strided_slice %528 {offsets = [32, 0], sizes = [16, 16], strides = [1, 1]} : vector<80x16xf32> to vector<16x16xf32>
    %544 = vector.extract_strided_slice %533 {offsets = [2, 0], sizes = [1, 16], strides = [1, 1]} : vector<5x16xf32> to vector<1x16xf32>
    %545 = vector.broadcast %544 : vector<1x16xf32> to vector<16x16xf32>
    %546 = arith.mulf %543, %545 : vector<16x16xf32>
    %547 = arith.addf %542, %546 : vector<16x16xf32>
    %548 = vector.extract_strided_slice %528 {offsets = [48, 0], sizes = [16, 16], strides = [1, 1]} : vector<80x16xf32> to vector<16x16xf32>
    %549 = vector.extract_strided_slice %533 {offsets = [3, 0], sizes = [1, 16], strides = [1, 1]} : vector<5x16xf32> to vector<1x16xf32>
    %550 = vector.broadcast %549 : vector<1x16xf32> to vector<16x16xf32>
    %551 = arith.mulf %548, %550 : vector<16x16xf32>
    %552 = arith.addf %547, %551 : vector<16x16xf32>
    %553 = vector.extract_strided_slice %528 {offsets = [64, 0], sizes = [16, 16], strides = [1, 1]} : vector<80x16xf32> to vector<16x16xf32>
    %554 = vector.extract_strided_slice %533 {offsets = [4, 0], sizes = [1, 16], strides = [1, 1]} : vector<5x16xf32> to vector<1x16xf32>
    %555 = vector.broadcast %554 : vector<1x16xf32> to vector<16x16xf32>
    %556 = arith.mulf %553, %555 : vector<16x16xf32>
    %557 = arith.addf %552, %556 : vector<16x16xf32>
    %558 = arith.addf %491, %557 : vector<16x16xf32>
    %cst_156 = arith.constant 5.000000e-01 : f32
    %559 = vector.broadcast %cst_156 : f32 to vector<16x16xf32>
    %560 = arith.mulf %559, %558 : vector<16x16xf32>
    %561 = arith.addf %495, %560 : vector<16x16xf32>
    %cst_157 = arith.constant 2.000000e+00 : f32
    %562 = vector.broadcast %cst_157 : f32 to vector<16x16xf32>
    %563 = arith.mulf %562, %561 : vector<16x16xf32>
    %564 = arith.subf %563, %499 : vector<16x16xf32>
    %565 = arith.addf %564, %557 : vector<16x16xf32>
    %cst_158 = arith.constant 8.000000e+00 : f32
    %566 = vector.broadcast %cst_158 : f32 to vector<32x1xf32>
    %567 = arith.mulf %566, %6 : vector<32x1xf32>
    %568 = arith.addf %567, %8 : vector<32x1xf32>
    %cst_159 = arith.constant dense<0.000000e+00> : vector<32x16xf32>
    %569 = tpu.matmul %7, %565, %cst_159 {dimension_numbers = #tpu.dot_dimension_numbers<[1], [0], [0], [1], [0, 0, 1, 1], [], []>} : vector<32x16xf32>, vector<16x16xf32>, vector<32x16xf32> -> vector<32x16xf32>
    %570 = vector.broadcast %568 : vector<32x1xf32> to vector<32x16xf32>
    %571 = arith.addf %569, %570 : vector<32x16xf32>
    %cst_160 = arith.constant 0.908999979 : f32
    %572 = vector.broadcast %cst_160 : f32 to vector<32x16xf32>
    %573 = arith.mulf %572, %571 : vector<32x16xf32>
    %574 = arith.negf %571 : vector<32x16xf32>
    %575 = math.exp %574 : vector<32x16xf32>
    %cst_161 = arith.constant 1.000000e+00 : f32
    %576 = vector.broadcast %cst_161 : f32 to vector<32x16xf32>
    %577 = arith.addf %576, %575 : vector<32x16xf32>
    %578 = arith.divf %576, %577 : vector<32x16xf32>
    %579 = arith.mulf %573, %578 : vector<32x16xf32>
    %cst_162 = arith.constant dense<0.000000e+00> : vector<32x16xf32>
    %580 = tpu.matmul %9, %579, %cst_162 {dimension_numbers = #tpu.dot_dimension_numbers<[1], [0], [0], [1], [0, 0, 1, 1], [], []>} : vector<32x32xf32>, vector<32x16xf32>, vector<32x16xf32> -> vector<32x16xf32>
    %581 = vector.broadcast %10 : vector<32x1xf32> to vector<32x16xf32>
    %582 = arith.addf %580, %581 : vector<32x16xf32>
    %cst_163 = arith.constant 0.908999979 : f32
    %583 = vector.broadcast %cst_163 : f32 to vector<32x16xf32>
    %584 = arith.mulf %583, %582 : vector<32x16xf32>
    %585 = arith.negf %582 : vector<32x16xf32>
    %586 = math.exp %585 : vector<32x16xf32>
    %cst_164 = arith.constant 1.000000e+00 : f32
    %587 = vector.broadcast %cst_164 : f32 to vector<32x16xf32>
    %588 = arith.addf %587, %586 : vector<32x16xf32>
    %589 = arith.divf %587, %588 : vector<32x16xf32>
    %590 = arith.mulf %584, %589 : vector<32x16xf32>
    %cst_165 = arith.constant dense<0.000000e+00> : vector<80x16xf32>
    %591 = tpu.matmul %11, %590, %cst_165 {dimension_numbers = #tpu.dot_dimension_numbers<[1], [0], [0], [1], [0, 0, 1, 1], [], []>} : vector<80x32xf32>, vector<32x16xf32>, vector<80x16xf32> -> vector<80x16xf32>
    %592 = vector.broadcast %12 : vector<80x1xf32> to vector<80x16xf32>
    %593 = arith.addf %591, %592 : vector<80x16xf32>
    %594 = math.tanh %593 : vector<80x16xf32>
    %c8 = arith.constant 8 : index
    %c0_166 = arith.constant 0 : index
    %c0_167 = arith.constant 0 : index
    %595 = vector.load %arg1[%c8, %c0_166, %c0_167] : memref<9x5x16xf32, #tpu.memory_space<vmem>>, vector<1x5x16xf32>
    %596 = vector.shape_cast %595 : vector<1x5x16xf32> to vector<5x16xf32>
    %c7_168 = arith.constant 7 : index
    %c0_169 = arith.constant 0 : index
    %c0_170 = arith.constant 0 : index
    %597 = vector.load %arg1[%c7_168, %c0_169, %c0_170] : memref<9x5x16xf32, #tpu.memory_space<vmem>>, vector<1x5x16xf32>
    %598 = vector.shape_cast %597 : vector<1x5x16xf32> to vector<5x16xf32>
    %599 = arith.subf %596, %598 : vector<5x16xf32>
    %600 = vector.extract_strided_slice %594 {offsets = [0, 0], sizes = [16, 16], strides = [1, 1]} : vector<80x16xf32> to vector<16x16xf32>
    %601 = vector.extract_strided_slice %599 {offsets = [0, 0], sizes = [1, 16], strides = [1, 1]} : vector<5x16xf32> to vector<1x16xf32>
    %602 = vector.broadcast %601 : vector<1x16xf32> to vector<16x16xf32>
    %603 = arith.mulf %600, %602 : vector<16x16xf32>
    %604 = vector.extract_strided_slice %594 {offsets = [16, 0], sizes = [16, 16], strides = [1, 1]} : vector<80x16xf32> to vector<16x16xf32>
    %605 = vector.extract_strided_slice %599 {offsets = [1, 0], sizes = [1, 16], strides = [1, 1]} : vector<5x16xf32> to vector<1x16xf32>
    %606 = vector.broadcast %605 : vector<1x16xf32> to vector<16x16xf32>
    %607 = arith.mulf %604, %606 : vector<16x16xf32>
    %608 = arith.addf %603, %607 : vector<16x16xf32>
    %609 = vector.extract_strided_slice %594 {offsets = [32, 0], sizes = [16, 16], strides = [1, 1]} : vector<80x16xf32> to vector<16x16xf32>
    %610 = vector.extract_strided_slice %599 {offsets = [2, 0], sizes = [1, 16], strides = [1, 1]} : vector<5x16xf32> to vector<1x16xf32>
    %611 = vector.broadcast %610 : vector<1x16xf32> to vector<16x16xf32>
    %612 = arith.mulf %609, %611 : vector<16x16xf32>
    %613 = arith.addf %608, %612 : vector<16x16xf32>
    %614 = vector.extract_strided_slice %594 {offsets = [48, 0], sizes = [16, 16], strides = [1, 1]} : vector<80x16xf32> to vector<16x16xf32>
    %615 = vector.extract_strided_slice %599 {offsets = [3, 0], sizes = [1, 16], strides = [1, 1]} : vector<5x16xf32> to vector<1x16xf32>
    %616 = vector.broadcast %615 : vector<1x16xf32> to vector<16x16xf32>
    %617 = arith.mulf %614, %616 : vector<16x16xf32>
    %618 = arith.addf %613, %617 : vector<16x16xf32>
    %619 = vector.extract_strided_slice %594 {offsets = [64, 0], sizes = [16, 16], strides = [1, 1]} : vector<80x16xf32> to vector<16x16xf32>
    %620 = vector.extract_strided_slice %599 {offsets = [4, 0], sizes = [1, 16], strides = [1, 1]} : vector<5x16xf32> to vector<1x16xf32>
    %621 = vector.broadcast %620 : vector<1x16xf32> to vector<16x16xf32>
    %622 = arith.mulf %619, %621 : vector<16x16xf32>
    %623 = arith.addf %618, %622 : vector<16x16xf32>
    %624 = arith.addf %557, %623 : vector<16x16xf32>
    %cst_171 = arith.constant 5.000000e-01 : f32
    %625 = vector.broadcast %cst_171 : f32 to vector<16x16xf32>
    %626 = arith.mulf %625, %624 : vector<16x16xf32>
    %627 = arith.addf %561, %626 : vector<16x16xf32>
    %cst_172 = arith.constant dense<0.000000e+00> : vector<16xf32>
    %628 = vector.multi_reduction <add>, %627, %cst_172 [1] : vector<16x16xf32> to vector<16xf32>
    %629 = vector.shape_cast %628 : vector<16xf32> to vector<16x1xf32>
    %630 = arith.mulf %13, %629 : vector<16x1xf32>
    %cst_173 = arith.constant dense<0.000000e+00> : vector<1xf32>
    %631 = vector.multi_reduction <add>, %630, %cst_173 [0] : vector<16x1xf32> to vector<1xf32>
    %632 = vector.shape_cast %631 : vector<1xf32> to vector<1x1xf32>
    %cst_174 = arith.constant 1.600000e+01 : f32
    %633 = vector.broadcast %cst_174 : f32 to vector<1x1xf32>
    %634 = arith.mulf %633, %14 : vector<1x1xf32>
    %635 = arith.addf %632, %634 : vector<1x1xf32>
    %636 = vector.shape_cast %635 : vector<1x1xf32> to vector<1x1x1xf32>
    %c0_175 = arith.constant 0 : index
    %c0_176 = arith.constant 0 : index
    %c0_177 = arith.constant 0 : index
    %637 = vector.load %arg17[%c0_175, %c0_176, %c0_177] : memref<1x1x1xf32, #tpu.memory_space<vmem>>, vector<1x1x1xf32>
    tpu.vector_store %arg17[%c0_175, %c0_176, %c0_177], %636 {strides = array<i32>} : memref<1x1x1xf32, #tpu.memory_space<vmem>>, vector<1x1x1xf32>,
    return
  }
  func.func @transform_0(%arg0: i32) -> (i32, i32, i32) {
    %c0_i32 = arith.constant 0 : i32
    %c0_i32_0 = arith.constant 0 : i32
    %c0_i32_1 = arith.constant 0 : i32
    return %c0_i32, %c0_i32_0, %arg0 : i32, i32, i32
  }
  func.func @transform_1(%arg0: i32) -> (i32, i32) {
    %c0_i32 = arith.constant 0 : i32
    %c0_i32_0 = arith.constant 0 : i32
    %c0_i32_1 = arith.constant 0 : i32
    return %c0_i32, %c0_i32_0 : i32, i32
  }
  func.func @transform_2(%arg0: i32) -> (i32, i32) {
    %c0_i32 = arith.constant 0 : i32
    %c0_i32_0 = arith.constant 0 : i32
    %c0_i32_1 = arith.constant 0 : i32
    return %c0_i32, %c0_i32_0 : i32, i32
  }
  func.func @transform_3(%arg0: i32) -> (i32, i32) {
    %c0_i32 = arith.constant 0 : i32
    %c0_i32_0 = arith.constant 0 : i32
    %c0_i32_1 = arith.constant 0 : i32
    return %c0_i32, %c0_i32_0 : i32, i32
  }
  func.func @transform_4(%arg0: i32) -> (i32, i32) {
    %c0_i32 = arith.constant 0 : i32
    %c0_i32_0 = arith.constant 0 : i32
    %c0_i32_1 = arith.constant 0 : i32
    return %c0_i32, %c0_i32_0 : i32, i32
  }
  func.func @transform_5(%arg0: i32) -> (i32, i32) {
    %c0_i32 = arith.constant 0 : i32
    %c0_i32_0 = arith.constant 0 : i32
    %c0_i32_1 = arith.constant 0 : i32
    return %c0_i32, %c0_i32_0 : i32, i32
  }
  func.func @transform_6(%arg0: i32) -> (i32, i32) {
    %c0_i32 = arith.constant 0 : i32
    %c0_i32_0 = arith.constant 0 : i32
    %c0_i32_1 = arith.constant 0 : i32
    return %c0_i32, %c0_i32_0 : i32, i32
  }
  func.func @transform_7(%arg0: i32) -> (i32, i32) {
    %c0_i32 = arith.constant 0 : i32
    %c0_i32_0 = arith.constant 0 : i32
    %c0_i32_1 = arith.constant 0 : i32
    return %c0_i32, %c0_i32_0 : i32, i32
  }
  func.func @transform_8(%arg0: i32) -> (i32, i32) {
    %c0_i32 = arith.constant 0 : i32
    %c0_i32_0 = arith.constant 0 : i32
    %c0_i32_1 = arith.constant 0 : i32
    return %c0_i32, %c0_i32_0 : i32, i32
  }
  func.func @transform_9(%arg0: i32) -> (i32, i32) {
    %c0_i32 = arith.constant 0 : i32
    %c0_i32_0 = arith.constant 0 : i32
    %c0_i32_1 = arith.constant 0 : i32
    return %c0_i32, %c0_i32_0 : i32, i32
  }
  func.func @transform_10(%arg0: i32) -> (i32, i32) {
    %c0_i32 = arith.constant 0 : i32
    %c0_i32_0 = arith.constant 0 : i32
    %c0_i32_1 = arith.constant 0 : i32
    return %c0_i32, %c0_i32_0 : i32, i32
  }
  func.func @transform_11(%arg0: i32) -> (i32, i32) {
    %c0_i32 = arith.constant 0 : i32
    %c0_i32_0 = arith.constant 0 : i32
    %c0_i32_1 = arith.constant 0 : i32
    return %c0_i32, %c0_i32_0 : i32, i32
  }
  func.func @transform_12(%arg0: i32) -> (i32, i32) {
    %c0_i32 = arith.constant 0 : i32
    %c0_i32_0 = arith.constant 0 : i32
    %c0_i32_1 = arith.constant 0 : i32
    return %c0_i32, %c0_i32_0 : i32, i32
  }
  func.func @transform_13(%arg0: i32) -> (i32, i32) {
    %c0_i32 = arith.constant 0 : i32
    %c0_i32_0 = arith.constant 0 : i32
    %c0_i32_1 = arith.constant 0 : i32
    return %c0_i32, %c0_i32_0 : i32, i32
  }
  func.func @transform_14(%arg0: i32) -> (i32, i32) {
    %c0_i32 = arith.constant 0 : i32
    %c0_i32_0 = arith.constant 0 : i32
    %c0_i32_1 = arith.constant 0 : i32
    return %c0_i32, %c0_i32_0 : i32, i32
  }
  func.func @transform_15(%arg0: i32) -> (i32, i32) {
    %c0_i32 = arith.constant 0 : i32
    %c0_i32_0 = arith.constant 0 : i32
    %c0_i32_1 = arith.constant 0 : i32
    return %c0_i32, %c0_i32_0 : i32, i32
  }
  func.func @transform_16(%arg0: i32) -> (i32, i32, i32) {
    %c0_i32 = arith.constant 0 : i32
    %c0_i32_0 = arith.constant 0 : i32
    %c0_i32_1 = arith.constant 0 : i32
    return %arg0, %c0_i32, %c0_i32_0 : i32, i32, i32
  }
}

</mosaic_0001>

<llo_original>
// kernel: tpu_custom_call.1
$region0: #{tpu_custom_call.1}
  #allocation0 [shape = 'u32[]', space=smem, size = 0x4, offset = 0x4, fixed_abs, tag = 'smem constant byte address 0x4 - core index']
  #allocation1 [shape = 'u32[144,128]{1,0:T(1,128)}', space=vmem, size = 0x12000, scoped, tag = 'internal scratch']
  #allocation2 [shape = 'f32[1,1]{1,0:T(1,128)S(1)}', space=vmem, size = 0x200, scoped, tag = 'scoped memory for tpu_custom_call.1']
  %s0 = inlined_call_operand.vmem [shape: f32[9,5,16], index: 0, kind: input, shape index: {}]
  %s1 = inlined_call_operand.vmem [shape: f32[32,5], index: 1, kind: input, shape index: {}]
  %s2 = inlined_call_operand.vmem [shape: f32[32,1], index: 2, kind: input, shape index: {}]
  %s3 = inlined_call_operand.vmem [shape: f32[32,32], index: 3, kind: input, shape index: {}]
  %s4 = inlined_call_operand.vmem [shape: f32[32,1], index: 4, kind: input, shape index: {}]
  %s5 = inlined_call_operand.vmem [shape: f32[16,32], index: 5, kind: input, shape index: {}]
  %s6 = inlined_call_operand.vmem [shape: f32[16,1], index: 6, kind: input, shape index: {}]
  %s7 = inlined_call_operand.vmem [shape: f32[32,1], index: 7, kind: input, shape index: {}]
  %s8 = inlined_call_operand.vmem [shape: f32[32,16], index: 8, kind: input, shape index: {}]
  %s9 = inlined_call_operand.vmem [shape: f32[32,1], index: 9, kind: input, shape index: {}]
  %s10 = inlined_call_operand.vmem [shape: f32[32,32], index: 10, kind: input, shape index: {}]
  %s11 = inlined_call_operand.vmem [shape: f32[32,1], index: 11, kind: input, shape index: {}]
  %s12 = inlined_call_operand.vmem [shape: f32[80,32], index: 12, kind: input, shape index: {}]
  %s13 = inlined_call_operand.vmem [shape: f32[80,1], index: 13, kind: input, shape index: {}]
  %s14 = inlined_call_operand.vmem [shape: f32[16,1], index: 14, kind: input, shape index: {}]
  %s15 = inlined_call_operand.<no memory space> [shape: f32[1,1], index: 15, kind: input, shape index: {}]
  %s16 = inlined_call_operand.hbm [shape: f32[1,1,1], index: 16, kind: output, shape index: {}]
  %s17 = sld [smem:[#allocation0]]
  $region74: #{tpu_custom_call.1} parent=0
    _
  %s19 = ssub.s32 1, %s17
  %s20 = scalar_select 0, %s19, %s17
  %v21 = vstv %s15
  %22 = vst [vmem:[#allocation2] sm:$0x1] %v21
  $region1: #{tpu_custom_call.1} parent=0
    #allocation3 [shape = 'u8[512]{0}', space=vmem, size = 0x400, scoped, tag = 'output window, operand 0, single buffered']
    #allocation4 [shape = 's32[1]{0}', space=sflag, size = 0x4, scoped, tag = 'scoped memory for tpu_custom_call.1']
    %23 = vsyncpa [#allocation4], 0
    // Predicated region
    $region2: #{tpu_custom_call.1} parent=1 // pred_check
      _
    $region3: #{tpu_custom_call.1} parent=1 // pred_check_branch
      %25 = sbr.rel (0) target = $region5
    $region4: #{tpu_custom_call.1} parent=1 // pred_region
      _
    $region5: #{tpu_custom_call.1} parent=1 // pred_fallthru
      _
    // Predicated region
    $region6: #{tpu_custom_call.1} parent=1 // pred_check
      _
    $region7: #{tpu_custom_call.1} parent=1 // pred_check_branch
      %27 = sbr.rel (0) target = $region9
    $region8: #{tpu_custom_call.1} parent=1 // pred_region
      _
    $region9: #{tpu_custom_call.1} parent=1 // pred_fallthru
      _
    // Predicated region
    $region10: #{tpu_custom_call.1} parent=1 // pred_check
      _
    $region11: #{tpu_custom_call.1} parent=1 // pred_check_branch
      %29 = sbr.rel (0) target = $region13
    $region12: #{tpu_custom_call.1} parent=1 // pred_region
      _
    $region13: #{tpu_custom_call.1} parent=1 // pred_fallthru
      _
    // Predicated region
    $region14: #{tpu_custom_call.1} parent=1 // pred_check
      _
    $region15: #{tpu_custom_call.1} parent=1 // pred_check_branch
      %31 = sbr.rel (0) target = $region17
    $region16: #{tpu_custom_call.1} parent=1 // pred_region
      _
    $region17: #{tpu_custom_call.1} parent=1 // pred_fallthru
      _
    // Predicated region
    $region18: #{tpu_custom_call.1} parent=1 // pred_check
      _
    $region19: #{tpu_custom_call.1} parent=1 // pred_check_branch
      %33 = sbr.rel (0) target = $region21
    $region20: #{tpu_custom_call.1} parent=1 // pred_region
      _
    $region21: #{tpu_custom_call.1} parent=1 // pred_fallthru
      _
    // Predicated region
    $region22: #{tpu_custom_call.1} parent=1 // pred_check
      _
    $region23: #{tpu_custom_call.1} parent=1 // pred_check_branch
      %35 = sbr.rel (0) target = $region25
    $region24: #{tpu_custom_call.1} parent=1 // pred_region
      _
    $region25: #{tpu_custom_call.1} parent=1 // pred_fallthru
      _
    // Predicated region
    $region26: #{tpu_custom_call.1} parent=1 // pred_check
      _
    $region27: #{tpu_custom_call.1} parent=1 // pred_check_branch
      %37 = sbr.rel (0) target = $region29
    $region28: #{tpu_custom_call.1} parent=1 // pred_region
      _
    $region29: #{tpu_custom_call.1} parent=1 // pred_fallthru
      _
    // Predicated region
    $region30: #{tpu_custom_call.1} parent=1 // pred_check
      _
    $region31: #{tpu_custom_call.1} parent=1 // pred_check_branch
      %39 = sbr.rel (0) target = $region33
    $region32: #{tpu_custom_call.1} parent=1 // pred_region
      _
    $region33: #{tpu_custom_call.1} parent=1 // pred_fallthru
      _
    // Predicated region
    $region34: #{tpu_custom_call.1} parent=1 // pred_check
      _
    $region35: #{tpu_custom_call.1} parent=1 // pred_check_branch
      %41 = sbr.rel (0) target = $region37
    $region36: #{tpu_custom_call.1} parent=1 // pred_region
      _
    $region37: #{tpu_custom_call.1} parent=1 // pred_fallthru
      _
    // Predicated region
    $region38: #{tpu_custom_call.1} parent=1 // pred_check
      _
    $region39: #{tpu_custom_call.1} parent=1 // pred_check_branch
      %43 = sbr.rel (0) target = $region41
    $region40: #{tpu_custom_call.1} parent=1 // pred_region
      _
    $region41: #{tpu_custom_call.1} parent=1 // pred_fallthru
      _
    // Predicated region
    $region42: #{tpu_custom_call.1} parent=1 // pred_check
      _
    $region43: #{tpu_custom_call.1} parent=1 // pred_check_branch
      %45 = sbr.rel (0) target = $region45
    $region44: #{tpu_custom_call.1} parent=1 // pred_region
      _
    $region45: #{tpu_custom_call.1} parent=1 // pred_fallthru
      _
    // Predicated region
    $region46: #{tpu_custom_call.1} parent=1 // pred_check
      _
    $region47: #{tpu_custom_call.1} parent=1 // pred_check_branch
      %47 = sbr.rel (0) target = $region49
    $region48: #{tpu_custom_call.1} parent=1 // pred_region
      _
    $region49: #{tpu_custom_call.1} parent=1 // pred_fallthru
      _
    // Predicated region
    $region50: #{tpu_custom_call.1} parent=1 // pred_check
      _
    $region51: #{tpu_custom_call.1} parent=1 // pred_check_branch
      %49 = sbr.rel (0) target = $region53
    $region52: #{tpu_custom_call.1} parent=1 // pred_region
      _
    $region53: #{tpu_custom_call.1} parent=1 // pred_fallthru
      _
    // Predicated region
    $region54: #{tpu_custom_call.1} parent=1 // pred_check
      _
    $region55: #{tpu_custom_call.1} parent=1 // pred_check_branch
      %51 = sbr.rel (0) target = $region57
    $region56: #{tpu_custom_call.1} parent=1 // pred_region
      _
    $region57: #{tpu_custom_call.1} parent=1 // pred_fallthru
      _
    // Predicated region
    $region58: #{tpu_custom_call.1} parent=1 // pred_check
      _
    $region59: #{tpu_custom_call.1} parent=1 // pred_check_branch
      %53 = sbr.rel (0) target = $region61
    $region60: #{tpu_custom_call.1} parent=1 // pred_region
      _
    $region61: #{tpu_custom_call.1} parent=1 // pred_fallthru
      _
    // Predicated region
    $region62: #{tpu_custom_call.1} parent=1 // pred_check
      _
    $region63: #{tpu_custom_call.1} parent=1 // pred_check_branch
      %55 = sbr.rel (0) target = $region65
    $region64: #{tpu_custom_call.1} parent=1 // pred_region
      _
    $region65: #{tpu_custom_call.1} parent=1 // pred_fallthru
      _
    %v56 = vld [vmem:[%s1] sm:$0xff]
    %v57 = vld [vmem:[%s1 + $0x8] sm:$0xff]
    %v58 = vld [vmem:[%s1 + $0x10] sm:$0xff]
    %v59 = vld [vmem:[%s1 + $0x18] sm:$0xff]
    %v60 = vld [vmem:[%s2] sm:$0xff]
    %v61 = vld [vmem:[%s2 + $0x8] sm:$0xff]
    %v62 = vld [vmem:[%s2 + $0x10] sm:$0xff]
    %v63 = vld [vmem:[%s2 + $0x18] sm:$0xff]
    %v64 = vld [vmem:[%s3] sm:$0xff]
    %v65 = vld [vmem:[%s3 + $0x8] sm:$0xff]
    %v66 = vld [vmem:[%s3 + $0x10] sm:$0xff]
    %v67 = vld [vmem:[%s3 + $0x18] sm:$0xff]
    %v68 = vld [vmem:[%s4] sm:$0xff]
    %v69 = vld [vmem:[%s4 + $0x8] sm:$0xff]
    %v70 = vld [vmem:[%s4 + $0x10] sm:$0xff]
    %v71 = vld [vmem:[%s4 + $0x18] sm:$0xff]
    %v72 = vld [vmem:[%s5] sm:$0xff]
    %v73 = vld [vmem:[%s5 + $0x8] sm:$0xff]
    %v74 = vld [vmem:[%s6] sm:$0xff]
    %v75 = vld [vmem:[%s6 + $0x8] sm:$0xff]
    %v76 = vld [vmem:[%s7] sm:$0xff]
    %v77 = vld [vmem:[%s7 + $0x8] sm:$0xff]
    %v78 = vld [vmem:[%s7 + $0x10] sm:$0xff]
    %v79 = vld [vmem:[%s7 + $0x18] sm:$0xff]
    %v80 = vld [vmem:[%s8] sm:$0xff]
    %v81 = vld [vmem:[%s8 + $0x8] sm:$0xff]
    %v82 = vld [vmem:[%s8 + $0x10] sm:$0xff]
    %v83 = vld [vmem:[%s8 + $0x18] sm:$0xff]
    %v84 = vld [vmem:[%s9] sm:$0xff]
    %v85 = vld [vmem:[%s9 + $0x8] sm:$0xff]
    %v86 = vld [vmem:[%s9 + $0x10] sm:$0xff]
    %v87 = vld [vmem:[%s9 + $0x18] sm:$0xff]
    %v88 = vld [vmem:[%s10] sm:$0xff]
    %v89 = vld [vmem:[%s10 + $0x8] sm:$0xff]
    %v90 = vld [vmem:[%s10 + $0x10] sm:$0xff]
    %v91 = vld [vmem:[%s10 + $0x18] sm:$0xff]
    %v92 = vld [vmem:[%s11] sm:$0xff]
    %v93 = vld [vmem:[%s11 + $0x8] sm:$0xff]
    %v94 = vld [vmem:[%s11 + $0x10] sm:$0xff]
    %v95 = vld [vmem:[%s11 + $0x18] sm:$0xff]
    %v96 = vld [vmem:[%s12] sm:$0xff]
    %v97 = vld [vmem:[%s12 + $0x8] sm:$0xff]
    %v98 = vld [vmem:[%s12 + $0x10] sm:$0xff]
    %v99 = vld [vmem:[%s12 + $0x18] sm:$0xff]
    %v100 = vld [vmem:[%s12 + $0x20] sm:$0xff]
    %v101 = vld [vmem:[%s12 + $0x28] sm:$0xff]
    %v102 = vld [vmem:[%s12 + $0x30] sm:$0xff]
    %v103 = vld [vmem:[%s12 + $0x38] sm:$0xff]
    %v104 = vld [vmem:[%s12 + $0x40] sm:$0xff]
    %v105 = vld [vmem:[%s12 + $0x48] sm:$0xff]
    %v106 = vld [vmem:[%s13] sm:$0xff]
    %v107 = vld [vmem:[%s13 + $0x8] sm:$0xff]
    %v108 = vld [vmem:[%s13 + $0x10] sm:$0xff]
    %v109 = vld [vmem:[%s13 + $0x18] sm:$0xff]
    %v110 = vld [vmem:[%s13 + $0x20] sm:$0xff]
    %v111 = vld [vmem:[%s13 + $0x28] sm:$0xff]
    %v112 = vld [vmem:[%s13 + $0x30] sm:$0xff]
    %v113 = vld [vmem:[%s13 + $0x38] sm:$0xff]
    %v114 = vld [vmem:[%s13 + $0x40] sm:$0xff]
    %v115 = vld [vmem:[%s13 + $0x48] sm:$0xff]
    %v116 = vld [vmem:[%s14] sm:$0xff]
    %v117 = vld [vmem:[%s14 + $0x8] sm:$0xff]
    %v118 = vld [vmem:[#allocation2] sm:$0x1]
    %v119 = vld [vmem:[%s0] sm:$0x1f]
    %121 = vset.pattern.permute.xlu0 0
    %122 = vperm.xlu0 %121, %v60
    %v123 = vpop.permute.xlu0 %122
    %126 = vset.pattern.permute.xlu0 0
    %127 = vperm.xlu0 %126, %v61
    %v128 = vpop.permute.xlu0 %127
    %131 = vset.pattern.permute.xlu0 0
    %132 = vperm.xlu0 %131, %v62
    %v133 = vpop.permute.xlu0 %132
    %136 = vset.pattern.permute.xlu0 0
    %137 = vperm.xlu0 %136, %v63
    %v138 = vpop.permute.xlu0 %137
    %vm140 = vcmask 39936
    %v142 = vsel %vm140, %v56, 0
    %v145 = vsel %vm140, %v57, 0
    %v148 = vsel %vm140, %v58, 0
    %v151 = vsel %vm140, %v59, 0
    %vm153 = vcmask 1044480
    %v155 = vsel %vm153, %v119, 0
    %157 = vmatprep.subr.mxu0 0.0
    %158 = vmatpush1.msra.mxu0 %v155
    %159 = vmatprep.subr.mxu0 0.0
    %160 = vmatpush1.msra.mxu0 0.0
    %161 = vmatprep.subr.mxu0 0.0
    %162 = vmatpush1.msra.mxu0 0.0
    %163 = vmatprep.subr.mxu0 0.0
    %164 = vmatpush1.msra.mxu0 0.0
    %165 = vmatprep.subr.mxu0 0.0
    %166 = vmatpush1.msra.mxu0 0.0
    %167 = vmatprep.subr.mxu0 0.0
    %168 = vmatpush1.msra.mxu0 0.0
    %169 = vmatprep.subr.mxu0 0.0
    %170 = vmatpush1.msra.mxu0 0.0
    %171 = vmatprep.subr.mxu0 0.0
    %172 = vmatpush1.msra.mxu0 0.0
    %173 = vmatprep.subr.mxu0 0.0
    %174 = vmatpush1.msra.mxu0 0.0
    %175 = vmatprep.subr.mxu0 0.0
    %176 = vmatpush1.msra.mxu0 0.0
    %177 = vmatprep.subr.mxu0 0.0
    %178 = vmatpush1.msra.mxu0 0.0
    %179 = vmatprep.subr.mxu0 0.0
    %180 = vmatpush1.msra.mxu0 0.0
    %181 = vmatprep.subr.mxu0 0.0
    %182 = vmatpush1.msra.mxu0 0.0
    %183 = vmatprep.subr.mxu0 0.0
    %184 = vmatpush1.msra.mxu0 0.0
    %185 = vmatprep.subr.mxu0 0.0
    %186 = vmatpush1.msra.mxu0 0.0
    %187 = vmatprep.subr.mxu0 0.0
    %188 = vmatpush1.msra.mxu0 0.0
    %189 = vmatprep.subr.mxu0 0.0
    %190 = vmatpush1.msra.mxu0 0.0
    %191 = vmatprep.subr.mxu0 0.0
    %192 = vmatpush1.msra.mxu0 0.0
    %193 = vmatprep.subr.mxu0 0.0
    %194 = vmatpush1.msra.mxu0 0.0
    %195 = vmatprep.subr.mxu0 0.0
    %196 = vmatpush1.msra.mxu0 0.0
    %197 = vmatprep.subr.mxu0 0.0
    %198 = vmatpush1.msra.mxu0 0.0
    %199 = vmatprep.subr.mxu0 0.0
    %200 = vmatpush1.msra.mxu0 0.0
    %201 = vmatprep.subr.mxu0 0.0
    %202 = vmatpush1.msra.mxu0 0.0
    %203 = vmatprep.subr.mxu0 0.0
    %204 = vmatpush1.msra.mxu0 0.0
    %205 = vmatprep.subr.mxu0 0.0
    %206 = vmatpush1.msra.mxu0 0.0
    %207 = vmatprep.subr.mxu0 0.0
    %208 = vmatpush1.msra.mxu0 0.0
    %209 = vmatprep.subr.mxu0 0.0
    %210 = vmatpush1.msra.mxu0 0.0
    %211 = vmatprep.subr.mxu0 0.0
    %212 = vmatpush1.msra.mxu0 0.0
    %213 = vmatprep.subr.mxu0 0.0
    %214 = vmatpush1.msra.mxu0 0.0
    %215 = vmatprep.subr.mxu0 0.0
    %216 = vmatpush1.msra.mxu0 0.0
    %217 = vmatprep.subr.mxu0 0.0
    %218 = vmatpush1.msra.mxu0 0.0
    %219 = vmatprep.subr.mxu0 0.0
    %220 = vmatpush1.msra.mxu0 0.0
    %221 = vmatprep.mubr.f32.mxu0 0.0
    %222 = vmatmul.mubr.f32.gmra.mrb[0].mxu0 %v142
    %v223 = vpop.f32.mrb[0].mxu0
    %v224 = vadd.f32 %v123, %v223
    %v225 = vpop.f32.mrb[0].mxu0
    %226 = vmatprep.mubr.f32.mxu0 0.0
    %227 = vmatmul.mubr.f32.gmra.mrb[0].mxu0 %v145
    %v228 = vpop.f32.mrb[0].mxu0
    %v229 = vadd.f32 %v128, %v228
    %v230 = vpop.f32.mrb[0].mxu0
    %231 = vmatprep.mubr.f32.mxu0 0.0
    %232 = vmatmul.mubr.f32.gmra.mrb[0].mxu0 %v148
    %v233 = vpop.f32.mrb[0].mxu0
    %v234 = vadd.f32 %v133, %v233
    %v235 = vpop.f32.mrb[0].mxu0
    %236 = vmatprep.mubr.f32.mxu0 0.0
    %237 = vmatmul.mubr.f32.gmra.mrb[0].mxu0 %v151
    %v238 = vpop.f32.mrb[0].mxu0
    %v239 = vadd.f32 %v138, %v238
    %v240 = vpop.f32.mrb[0].mxu0
    %241 = vdwg.mxu0
    %v242 = vmul.f32 %v224, 0.909
    %v243 = vmul.f32 %v229, 0.909
    %v244 = vmul.f32 %v234, 0.909
    %v245 = vmul.f32 %v239, 0.909
    %v246 = vxor.u32 %v224, 2147483648
    %v247 = vxor.u32 %v229, 2147483648
    %v248 = vxor.u32 %v234, 2147483648
    %v249 = vxor.u32 %v239, 2147483648
    %v250 = vmul.f32 %v246, 1.442695
    %v251 = vpow.pop %v250
    %v252 = vmul.f32 %v247, 1.442695
    %v253 = vpow.pop %v252
    %v254 = vmul.f32 %v248, 1.442695
    %v255 = vpow.pop %v254
    %v256 = vmul.f32 %v249, 1.442695
    %v257 = vpow.pop %v256
    %v258 = vadd.f32 %v251, 1.0
    %v259 = vadd.f32 %v253, 1.0
    %v260 = vadd.f32 %v255, 1.0
    %v261 = vadd.f32 %v257, 1.0
    %v262 = vrcp.pop %v258
    %v263 = vmul.f32 1.0, %v262
    %v264 = vrcp.pop %v259
    %v265 = vmul.f32 1.0, %v264
    %v266 = vrcp.pop %v260
    %v267 = vmul.f32 1.0, %v266
    %v268 = vrcp.pop %v261
    %v269 = vmul.f32 1.0, %v268
    %v270 = vmul.f32 %v242, %v263
    %v271 = vmul.f32 %v243, %v265
    %v272 = vmul.f32 %v244, %v267
    %v273 = vmul.f32 %v245, %v269
    %275 = vset.pattern.permute.xlu0 0
    %276 = vperm.xlu0 %275, %v68
    %v277 = vpop.permute.xlu0 %276
    %280 = vset.pattern.permute.xlu0 0
    %281 = vperm.xlu0 %280, %v69
    %v282 = vpop.permute.xlu0 %281
    %285 = vset.pattern.permute.xlu0 0
    %286 = vperm.xlu0 %285, %v70
    %v287 = vpop.permute.xlu0 %286
    %290 = vset.pattern.permute.xlu0 0
    %291 = vperm.xlu0 %290, %v71
    %v292 = vpop.permute.xlu0 %291
    %vm294 = vcmask 261120
    %v296 = vsel %vm294, %v64, 0
    %v299 = vsel %vm294, %v65, 0
    %v302 = vsel %vm294, %v66, 0
    %v305 = vsel %vm294, %v67, 0
    %307 = vmatprep.subr.mxu0 0.0
    %308 = vmatpush1.msra.mxu0 %v270
    %309 = vmatprep.subr.mxu0 0.0
    %310 = vmatpush1.msra.mxu0 %v271
    %311 = vmatprep.subr.mxu0 0.0
    %312 = vmatpush1.msra.mxu0 %v272
    %313 = vmatprep.subr.mxu0 0.0
    %314 = vmatpush1.msra.mxu0 %v273
    %315 = vmatprep.subr.mxu0 0.0
    %316 = vmatpush1.msra.mxu0 0.0
    %317 = vmatprep.subr.mxu0 0.0
    %318 = vmatpush1.msra.mxu0 0.0
    %319 = vmatprep.subr.mxu0 0.0
    %320 = vmatpush1.msra.mxu0 0.0
    %321 = vmatprep.subr.mxu0 0.0
    %322 = vmatpush1.msra.mxu0 0.0
    %323 = vmatprep.subr.mxu0 0.0
    %324 = vmatpush1.msra.mxu0 0.0
    %325 = vmatprep.subr.mxu0 0.0
    %326 = vmatpush1.msra.mxu0 0.0
    %327 = vmatprep.subr.mxu0 0.0
    %328 = vmatpush1.msra.mxu0 0.0
    %329 = vmatprep.subr.mxu0 0.0
    %330 = vmatpush1.msra.mxu0 0.0
    %331 = vmatprep.subr.mxu0 0.0
    %332 = vmatpush1.msra.mxu0 0.0
    %333 = vmatprep.subr.mxu0 0.0
    %334 = vmatpush1.msra.mxu0 0.0
    %335 = vmatprep.subr.mxu0 0.0
    %336 = vmatpush1.msra.mxu0 0.0
    %337 = vmatprep.subr.mxu0 0.0
    %338 = vmatpush1.msra.mxu0 0.0
    %339 = vmatprep.subr.mxu0 0.0
    %340 = vmatpush1.msra.mxu0 0.0
    %341 = vmatprep.subr.mxu0 0.0
    %342 = vmatpush1.msra.mxu0 0.0
    %343 = vmatprep.subr.mxu0 0.0
    %344 = vmatpush1.msra.mxu0 0.0
    %345 = vmatprep.subr.mxu0 0.0
    %346 = vmatpush1.msra.mxu0 0.0
    %347 = vmatprep.subr.mxu0 0.0
    %348 = vmatpush1.msra.mxu0 0.0
    %349 = vmatprep.subr.mxu0 0.0
    %350 = vmatpush1.msra.mxu0 0.0
    %351 = vmatprep.subr.mxu0 0.0
    %352 = vmatpush1.msra.mxu0 0.0
    %353 = vmatprep.subr.mxu0 0.0
    %354 = vmatpush1.msra.mxu0 0.0
    %355 = vmatprep.subr.mxu0 0.0
    %356 = vmatpush1.msra.mxu0 0.0
    %357 = vmatprep.subr.mxu0 0.0
    %358 = vmatpush1.msra.mxu0 0.0
    %359 = vmatprep.subr.mxu0 0.0
    %360 = vmatpush1.msra.mxu0 0.0
    %361 = vmatprep.subr.mxu0 0.0
    %362 = vmatpush1.msra.mxu0 0.0
    %363 = vmatprep.subr.mxu0 0.0
    %364 = vmatpush1.msra.mxu0 0.0
    %365 = vmatprep.subr.mxu0 0.0
    %366 = vmatpush1.msra.mxu0 0.0
    %367 = vmatprep.subr.mxu0 0.0
    %368 = vmatpush1.msra.mxu0 0.0
    %369 = vmatprep.subr.mxu0 0.0
    %370 = vmatpush1.msra.mxu0 0.0
    %371 = vmatprep.mubr.f32.mxu0 0.0
    %372 = vmatmul.mubr.f32.gmra.mrb[0].mxu0 %v296
    %v373 = vpop.f32.mrb[0].mxu0
    %v374 = vadd.f32 %v277, %v373
    %v375 = vpop.f32.mrb[0].mxu0
    %376 = vmatprep.mubr.f32.mxu0 0.0
    %377 = vmatmul.mubr.f32.gmra.mrb[0].mxu0 %v299
    %v378 = vpop.f32.mrb[0].mxu0
    %v379 = vadd.f32 %v282, %v378
    %v380 = vpop.f32.mrb[0].mxu0
    %381 = vmatprep.mubr.f32.mxu0 0.0
    %382 = vmatmul.mubr.f32.gmra.mrb[0].mxu0 %v302
    %v383 = vpop.f32.mrb[0].mxu0
    %v384 = vadd.f32 %v287, %v383
    %v385 = vpop.f32.mrb[0].mxu0
    %386 = vmatprep.mubr.f32.mxu0 0.0
    %387 = vmatmul.mubr.f32.gmra.mrb[0].mxu0 %v305
    %v388 = vpop.f32.mrb[0].mxu0
    %v389 = vadd.f32 %v292, %v388
    %v390 = vpop.f32.mrb[0].mxu0
    %391 = vdwg.mxu0
    %v392 = vmul.f32 %v374, 0.909
    %v393 = vmul.f32 %v379, 0.909
    %v394 = vmul.f32 %v384, 0.909
    %v395 = vmul.f32 %v389, 0.909
    %v396 = vxor.u32 %v374, 2147483648
    %v397 = vxor.u32 %v379, 2147483648
    %v398 = vxor.u32 %v384, 2147483648
    %v399 = vxor.u32 %v389, 2147483648
    %v400 = vmul.f32 %v396, 1.442695
    %v401 = vpow.pop %v400
    %v402 = vmul.f32 %v397, 1.442695
    %v403 = vpow.pop %v402
    %v404 = vmul.f32 %v398, 1.442695
    %v405 = vpow.pop %v404
    %v406 = vmul.f32 %v399, 1.442695
    %v407 = vpow.pop %v406
    %v408 = vadd.f32 %v401, 1.0
    %v409 = vadd.f32 %v403, 1.0
    %v410 = vadd.f32 %v405, 1.0
    %v411 = vadd.f32 %v407, 1.0
    %v412 = vrcp.pop %v408
    %v413 = vmul.f32 1.0, %v412
    %v414 = vrcp.pop %v409
    %v415 = vmul.f32 1.0, %v414
    %v416 = vrcp.pop %v410
    %v417 = vmul.f32 1.0, %v416
    %v418 = vrcp.pop %v411
    %v419 = vmul.f32 1.0, %v418
    %v420 = vmul.f32 %v392, %v413
    %v421 = vmul.f32 %v393, %v415
    %v422 = vmul.f32 %v394, %v417
    %v423 = vmul.f32 %v395, %v419
    %425 = vset.pattern.permute.xlu0 0
    %426 = vperm.xlu0 %425, %v74
    %v427 = vpop.permute.xlu0 %426
    %430 = vset.pattern.permute.xlu0 0
    %431 = vperm.xlu0 %430, %v75
    %v432 = vpop.permute.xlu0 %431
    %v435 = vsel %vm294, %v72, 0
    %v438 = vsel %vm294, %v73, 0
    %440 = vmatprep.subr.mxu0 0.0
    %441 = vmatpush1.msra.mxu0 %v420
    %442 = vmatprep.subr.mxu0 0.0
    %443 = vmatpush1.msra.mxu0 %v421
    %444 = vmatprep.subr.mxu0 0.0
    %445 = vmatpush1.msra.mxu0 %v422
    %446 = vmatprep.subr.mxu0 0.0
    %447 = vmatpush1.msra.mxu0 %v423
    %448 = vmatprep.subr.mxu0 0.0
    %449 = vmatpush1.msra.mxu0 0.0
    %450 = vmatprep.subr.mxu0 0.0
    %451 = vmatpush1.msra.mxu0 0.0
    %452 = vmatprep.subr.mxu0 0.0
    %453 = vmatpush1.msra.mxu0 0.0
    %454 = vmatprep.subr.mxu0 0.0
    %455 = vmatpush1.msra.mxu0 0.0
    %456 = vmatprep.subr.mxu0 0.0
    %457 = vmatpush1.msra.mxu0 0.0
    %458 = vmatprep.subr.mxu0 0.0
    %459 = vmatpush1.msra.mxu0 0.0
    %460 = vmatprep.subr.mxu0 0.0
    %461 = vmatpush1.msra.mxu0 0.0
    %462 = vmatprep.subr.mxu0 0.0
    %463 = vmatpush1.msra.mxu0 0.0
    %464 = vmatprep.subr.mxu0 0.0
    %465 = vmatpush1.msra.mxu0 0.0
    %466 = vmatprep.subr.mxu0 0.0
    %467 = vmatpush1.msra.mxu0 0.0
    %468 = vmatprep.subr.mxu0 0.0
    %469 = vmatpush1.msra.mxu0 0.0
    %470 = vmatprep.subr.mxu0 0.0
    %471 = vmatpush1.msra.mxu0 0.0
    %472 = vmatprep.subr.mxu0 0.0
    %473 = vmatpush1.msra.mxu0 0.0
    %474 = vmatprep.subr.mxu0 0.0
    %475 = vmatpush1.msra.mxu0 0.0
    %476 = vmatprep.subr.mxu0 0.0
    %477 = vmatpush1.msra.mxu0 0.0
    %478 = vmatprep.subr.mxu0 0.0
    %479 = vmatpush1.msra.mxu0 0.0
    %480 = vmatprep.subr.mxu0 0.0
    %481 = vmatpush1.msra.mxu0 0.0
    %482 = vmatprep.subr.mxu0 0.0
    %483 = vmatpush1.msra.mxu0 0.0
    %484 = vmatprep.subr.mxu0 0.0
    %485 = vmatpush1.msra.mxu0 0.0
    %486 = vmatprep.subr.mxu0 0.0
    %487 = vmatpush1.msra.mxu0 0.0
    %488 = vmatprep.subr.mxu0 0.0
    %489 = vmatpush1.msra.mxu0 0.0
    %490 = vmatprep.subr.mxu0 0.0
    %491 = vmatpush1.msra.mxu0 0.0
    %492 = vmatprep.subr.mxu0 0.0
    %493 = vmatpush1.msra.mxu0 0.0
    %494 = vmatprep.subr.mxu0 0.0
    %495 = vmatpush1.msra.mxu0 0.0
    %496 = vmatprep.subr.mxu0 0.0
    %497 = vmatpush1.msra.mxu0 0.0
    %498 = vmatprep.subr.mxu0 0.0
    %499 = vmatpush1.msra.mxu0 0.0
    %500 = vmatprep.subr.mxu0 0.0
    %501 = vmatpush1.msra.mxu0 0.0
    %502 = vmatprep.subr.mxu0 0.0
    %503 = vmatpush1.msra.mxu0 0.0
    %504 = vmatprep.mubr.f32.mxu0 0.0
    %505 = vmatmul.mubr.f32.gmra.mrb[0].mxu0 %v435
    %v506 = vpop.f32.mrb[0].mxu0
    %v507 = vadd.f32 %v427, %v506
    %v508 = vpop.f32.mrb[0].mxu0
    %509 = vmatprep.mubr.f32.mxu0 0.0
    %510 = vmatmul.mubr.f32.gmra.mrb[0].mxu0 %v438
    %v511 = vpop.f32.mrb[0].mxu0
    %v512 = vadd.f32 %v432, %v511
    %v513 = vpop.f32.mrb[0].mxu0
    %514 = vdwg.mxu0
    %v515 = vmul.f32 %v76, 0.0
    %v516 = vmul.f32 %v77, 0.0
    %v517 = vmul.f32 %v78, 0.0
    %v518 = vmul.f32 %v79, 0.0
    %v519 = vadd.f32 %v515, %v84
    %v520 = vadd.f32 %v516, %v85
    %v521 = vadd.f32 %v517, %v86
    %v522 = vadd.f32 %v518, %v87
    %524 = vset.pattern.permute.xlu0 0
    %525 = vperm.xlu0 %524, %v519
    %v526 = vpop.permute.xlu0 %525
    %529 = vset.pattern.permute.xlu0 0
    %530 = vperm.xlu0 %529, %v520
    %v531 = vpop.permute.xlu0 %530
    %534 = vset.pattern.permute.xlu0 0
    %535 = vperm.xlu0 %534, %v521
    %v536 = vpop.permute.xlu0 %535
    %539 = vset.pattern.permute.xlu0 0
    %540 = vperm.xlu0 %539, %v522
    %v541 = vpop.permute.xlu0 %540
    %vm543 = vcmask 130048
    %v545 = vsel %vm543, %v80, 0
    %v548 = vsel %vm543, %v81, 0
    %v551 = vsel %vm543, %v82, 0
    %v554 = vsel %vm543, %v83, 0
    %556 = vmatprep.subr.mxu0 0.0
    %557 = vmatpush1.msra.mxu0 %v507
    %558 = vmatprep.subr.mxu0 0.0
    %559 = vmatpush1.msra.mxu0 %v512
    %560 = vmatprep.subr.mxu0 0.0
    %561 = vmatpush1.msra.mxu0 0.0
    %562 = vmatprep.subr.mxu0 0.0
    %563 = vmatpush1.msra.mxu0 0.0
    %564 = vmatprep.subr.mxu0 0.0
    %565 = vmatpush1.msra.mxu0 0.0
    %566 = vmatprep.subr.mxu0 0.0
    %567 = vmatpush1.msra.mxu0 0.0
    %568 = vmatprep.subr.mxu0 0.0
    %569 = vmatpush1.msra.mxu0 0.0
    %570 = vmatprep.subr.mxu0 0.0
    %571 = vmatpush1.msra.mxu0 0.0
    %572 = vmatprep.subr.mxu0 0.0
    %573 = vmatpush1.msra.mxu0 0.0
    %574 = vmatprep.subr.mxu0 0.0
    %575 = vmatpush1.msra.mxu0 0.0
    %576 = vmatprep.subr.mxu0 0.0
    %577 = vmatpush1.msra.mxu0 0.0
    %578 = vmatprep.subr.mxu0 0.0
    %579 = vmatpush1.msra.mxu0 0.0
    %580 = vmatprep.subr.mxu0 0.0
    %581 = vmatpush1.msra.mxu0 0.0
    %582 = vmatprep.subr.mxu0 0.0
    %583 = vmatpush1.msra.mxu0 0.0
    %584 = vmatprep.subr.mxu0 0.0
    %585 = vmatpush1.msra.mxu0 0.0
    %586 = vmatprep.subr.mxu0 0.0
    %587 = vmatpush1.msra.mxu0 0.0
    %588 = vmatprep.subr.mxu0 0.0
    %589 = vmatpush1.msra.mxu0 0.0
    %590 = vmatprep.subr.mxu0 0.0
    %591 = vmatpush1.msra.mxu0 0.0
    %592 = vmatprep.subr.mxu0 0.0
    %593 = vmatpush1.msra.mxu0 0.0
    %594 = vmatprep.subr.mxu0 0.0
    %595 = vmatpush1.msra.mxu0 0.0
    %596 = vmatprep.subr.mxu0 0.0
    %597 = vmatpush1.msra.mxu0 0.0
    %598 = vmatprep.subr.mxu0 0.0
    %599 = vmatpush1.msra.mxu0 0.0
    %600 = vmatprep.subr.mxu0 0.0
    %601 = vmatpush1.msra.mxu0 0.0
    %602 = vmatprep.subr.mxu0 0.0
    %603 = vmatpush1.msra.mxu0 0.0
    %604 = vmatprep.subr.mxu0 0.0
    %605 = vmatpush1.msra.mxu0 0.0
    %606 = vmatprep.subr.mxu0 0.0
    %607 = vmatpush1.msra.mxu0 0.0
    %608 = vmatprep.subr.mxu0 0.0
    %609 = vmatpush1.msra.mxu0 0.0
    %610 = vmatprep.subr.mxu0 0.0
    %611 = vmatpush1.msra.mxu0 0.0
    %612 = vmatprep.subr.mxu0 0.0
    %613 = vmatpush1.msra.mxu0 0.0
    %614 = vmatprep.subr.mxu0 0.0
    %615 = vmatpush1.msra.mxu0 0.0
    %616 = vmatprep.subr.mxu0 0.0
    %617 = vmatpush1.msra.mxu0 0.0
    %618 = vmatprep.subr.mxu0 0.0
    %619 = vmatpush1.msra.mxu0 0.0
    %620 = vmatprep.mubr.f32.mxu0 0.0
    %621 = vmatmul.mubr.f32.gmra.mrb[0].mxu0 %v545
    %v622 = vpop.f32.mrb[0].mxu0
    %v623 = vadd.f32 %v526, %v622
    %v624 = vpop.f32.mrb[0].mxu0
    %625 = vmatprep.mubr.f32.mxu0 0.0
    %626 = vmatmul.mubr.f32.gmra.mrb[0].mxu0 %v548
    %v627 = vpop.f32.mrb[0].mxu0
    %v628 = vadd.f32 %v531, %v627
    %v629 = vpop.f32.mrb[0].mxu0
    %630 = vmatprep.mubr.f32.mxu0 0.0
    %631 = vmatmul.mubr.f32.gmra.mrb[0].mxu0 %v551
    %v632 = vpop.f32.mrb[0].mxu0
    %v633 = vadd.f32 %v536, %v632
    %v634 = vpop.f32.mrb[0].mxu0
    %635 = vmatprep.mubr.f32.mxu0 0.0
    %636 = vmatmul.mubr.f32.gmra.mrb[0].mxu0 %v554
    %v637 = vpop.f32.mrb[0].mxu0
    %v638 = vadd.f32 %v541, %v637
    %v639 = vpop.f32.mrb[0].mxu0
    %640 = vdwg.mxu0
    %v641 = vmul.f32 %v623, 0.909
    %v642 = vmul.f32 %v628, 0.909
    %v643 = vmul.f32 %v633, 0.909
    %v644 = vmul.f32 %v638, 0.909
    %v645 = vxor.u32 %v623, 2147483648
    %v646 = vxor.u32 %v628, 2147483648
    %v647 = vxor.u32 %v633, 2147483648
    %v648 = vxor.u32 %v638, 2147483648
    %v649 = vmul.f32 %v645, 1.442695
    %v650 = vpow.pop %v649
    %v651 = vmul.f32 %v646, 1.442695
    %v652 = vpow.pop %v651
    %v653 = vmul.f32 %v647, 1.442695
    %v654 = vpow.pop %v653
    %v655 = vmul.f32 %v648, 1.442695
    %v656 = vpow.pop %v655
    %v657 = vadd.f32 %v650, 1.0
    %v658 = vadd.f32 %v652, 1.0
    %v659 = vadd.f32 %v654, 1.0
    %v660 = vadd.f32 %v656, 1.0
    %v661 = vrcp.pop %v657
    %v662 = vmul.f32 1.0, %v661
    %v663 = vrcp.pop %v658
    %v664 = vmul.f32 1.0, %v663
    %v665 = vrcp.pop %v659
    %v666 = vmul.f32 1.0, %v665
    %v667 = vrcp.pop %v660
    %v668 = vmul.f32 1.0, %v667
    %v669 = vmul.f32 %v641, %v662
    %v670 = vmul.f32 %v642, %v664
    %v671 = vmul.f32 %v643, %v666
    %v672 = vmul.f32 %v644, %v668
    %674 = vset.pattern.permute.xlu0 0
    %675 = vperm.xlu0 %674, %v92
    %v676 = vpop.permute.xlu0 %675
    %679 = vset.pattern.permute.xlu0 0
    %680 = vperm.xlu0 %679, %v93
    %v681 = vpop.permute.xlu0 %680
    %684 = vset.pattern.permute.xlu0 0
    %685 = vperm.xlu0 %684, %v94
    %v686 = vpop.permute.xlu0 %685
    %689 = vset.pattern.permute.xlu0 0
    %690 = vperm.xlu0 %689, %v95
    %v691 = vpop.permute.xlu0 %690
    %v694 = vsel %vm294, %v88, 0
    %v697 = vsel %vm294, %v89, 0
    %v700 = vsel %vm294, %v90, 0
    %v703 = vsel %vm294, %v91, 0
    %705 = vmatprep.subr.mxu0 0.0
    %706 = vmatpush1.msra.mxu0 %v669
    %707 = vmatprep.subr.mxu0 0.0
    %708 = vmatpush1.msra.mxu0 %v670
    %709 = vmatprep.subr.mxu0 0.0
    %710 = vmatpush1.msra.mxu0 %v671
    %711 = vmatprep.subr.mxu0 0.0
    %712 = vmatpush1.msra.mxu0 %v672
    %713 = vmatprep.subr.mxu0 0.0
    %714 = vmatpush1.msra.mxu0 0.0
    %715 = vmatprep.subr.mxu0 0.0
    %716 = vmatpush1.msra.mxu0 0.0
    %717 = vmatprep.subr.mxu0 0.0
    %718 = vmatpush1.msra.mxu0 0.0
    %719 = vmatprep.subr.mxu0 0.0
    %720 = vmatpush1.msra.mxu0 0.0
    %721 = vmatprep.subr.mxu0 0.0
    %722 = vmatpush1.msra.mxu0 0.0
    %723 = vmatprep.subr.mxu0 0.0
    %724 = vmatpush1.msra.mxu0 0.0
    %725 = vmatprep.subr.mxu0 0.0
    %726 = vmatpush1.msra.mxu0 0.0
    %727 = vmatprep.subr.mxu0 0.0
    %728 = vmatpush1.msra.mxu0 0.0
    %729 = vmatprep.subr.mxu0 0.0
    %730 = vmatpush1.msra.mxu0 0.0
    %731 = vmatprep.subr.mxu0 0.0
    %732 = vmatpush1.msra.mxu0 0.0
    %733 = vmatprep.subr.mxu0 0.0
    %734 = vmatpush1.msra.mxu0 0.0
    %735 = vmatprep.subr.mxu0 0.0
    %736 = vmatpush1.msra.mxu0 0.0
    %737 = vmatprep.subr.mxu0 0.0
    %738 = vmatpush1.msra.mxu0 0.0
    %739 = vmatprep.subr.mxu0 0.0
    %740 = vmatpush1.msra.mxu0 0.0
    %741 = vmatprep.subr.mxu0 0.0
    %742 = vmatpush1.msra.mxu0 0.0
    %743 = vmatprep.subr.mxu0 0.0
    %744 = vmatpush1.msra.mxu0 0.0
    %745 = vmatprep.subr.mxu0 0.0
    %746 = vmatpush1.msra.mxu0 0.0
    %747 = vmatprep.subr.mxu0 0.0
    %748 = vmatpush1.msra.mxu0 0.0
    %749 = vmatprep.subr.mxu0 0.0
    %750 = vmatpush1.msra.mxu0 0.0
    %751 = vmatprep.subr.mxu0 0.0
    %752 = vmatpush1.msra.mxu0 0.0
    %753 = vmatprep.subr.mxu0 0.0
    %754 = vmatpush1.msra.mxu0 0.0
    %755 = vmatprep.subr.mxu0 0.0
    %756 = vmatpush1.msra.mxu0 0.0
    %757 = vmatprep.subr.mxu0 0.0
    %758 = vmatpush1.msra.mxu0 0.0
    %759 = vmatprep.subr.mxu0 0.0
    %760 = vmatpush1.msra.mxu0 0.0
    %761 = vmatprep.subr.mxu0 0.0
    %762 = vmatpush1.msra.mxu0 0.0
    %763 = vmatprep.subr.mxu0 0.0
    %764 = vmatpush1.msra.mxu0 0.0
    %765 = vmatprep.subr.mxu0 0.0
    %766 = vmatpush1.msra.mxu0 0.0
    %767 = vmatprep.subr.mxu0 0.0
    %768 = vmatpush1.msra.mxu0 0.0
    %769 = vmatprep.mubr.f32.mxu0 0.0
    %770 = vmatmul.mubr.f32.gmra.mrb[0].mxu0 %v694
    %v771 = vpop.f32.mrb[0].mxu0
    %v772 = vadd.f32 %v676, %v771
    %v773 = vpop.f32.mrb[0].mxu0
    %774 = vmatprep.mubr.f32.mxu0 0.0
    %775 = vmatmul.mubr.f32.gmra.mrb[0].mxu0 %v697
    %v776 = vpop.f32.mrb[0].mxu0
    %v777 = vadd.f32 %v681, %v776
    %v778 = vpop.f32.mrb[0].mxu0
    %779 = vmatprep.mubr.f32.mxu0 0.0
    %780 = vmatmul.mubr.f32.gmra.mrb[0].mxu0 %v700
    %v781 = vpop.f32.mrb[0].mxu0
    %v782 = vadd.f32 %v686, %v781
    %v783 = vpop.f32.mrb[0].mxu0
    %784 = vmatprep.mubr.f32.mxu0 0.0
    %785 = vmatmul.mubr.f32.gmra.mrb[0].mxu0 %v703
    %v786 = vpop.f32.mrb[0].mxu0
    %v787 = vadd.f32 %v691, %v786
    %v788 = vpop.f32.mrb[0].mxu0
    %789 = vdwg.mxu0
    %v790 = vmul.f32 %v772, 0.909
    %v791 = vmul.f32 %v777, 0.909
    %v792 = vmul.f32 %v782, 0.909
    %v793 = vmul.f32 %v787, 0.909
    %v794 = vxor.u32 %v772, 2147483648
    %v795 = vxor.u32 %v777, 2147483648
    %v796 = vxor.u32 %v782, 2147483648
    %v797 = vxor.u32 %v787, 2147483648
    %v798 = vmul.f32 %v794, 1.442695
    %v799 = vpow.pop %v798
    %v800 = vmul.f32 %v795, 1.442695
    %v801 = vpow.pop %v800
    %v802 = vmul.f32 %v796, 1.442695
    %v803 = vpow.pop %v802
    %v804 = vmul.f32 %v797, 1.442695
    %v805 = vpow.pop %v804
    %v806 = vadd.f32 %v799, 1.0
    %v807 = vadd.f32 %v801, 1.0
    %v808 = vadd.f32 %v803, 1.0
    %v809 = vadd.f32 %v805, 1.0
    %v810 = vrcp.pop %v806
    %v811 = vmul.f32 1.0, %v810
    %v812 = vrcp.pop %v807
    %v813 = vmul.f32 1.0, %v812
    %v814 = vrcp.pop %v808
    %v815 = vmul.f32 1.0, %v814
    %v816 = vrcp.pop %v809
    %v817 = vmul.f32 1.0, %v816
    %v818 = vmul.f32 %v790, %v811
    %v819 = vmul.f32 %v791, %v813
    %v820 = vmul.f32 %v792, %v815
    %v821 = vmul.f32 %v793, %v817
    %823 = vset.pattern.permute.xlu0 0
    %824 = vperm.xlu0 %823, %v106
    %v825 = vpop.permute.xlu0 %824
    %828 = vset.pattern.permute.xlu0 0
    %829 = vperm.xlu0 %828, %v107
    %v830 = vpop.permute.xlu0 %829
    %833 = vset.pattern.permute.xlu0 0
    %834 = vperm.xlu0 %833, %v108
    %v835 = vpop.permute.xlu0 %834
    %838 = vset.pattern.permute.xlu0 0
    %839 = vperm.xlu0 %838, %v109
    %v840 = vpop.permute.xlu0 %839
    %843 = vset.pattern.permute.xlu0 0
    %844 = vperm.xlu0 %843, %v110
    %v845 = vpop.permute.xlu0 %844
    %848 = vset.pattern.permute.xlu0 0
    %849 = vperm.xlu0 %848, %v111
    %v850 = vpop.permute.xlu0 %849
    %853 = vset.pattern.permute.xlu0 0
    %854 = vperm.xlu0 %853, %v112
    %v855 = vpop.permute.xlu0 %854
    %858 = vset.pattern.permute.xlu0 0
    %859 = vperm.xlu0 %858, %v113
    %v860 = vpop.permute.xlu0 %859
    %863 = vset.pattern.permute.xlu0 0
    %864 = vperm.xlu0 %863, %v114
    %v865 = vpop.permute.xlu0 %864
    %868 = vset.pattern.permute.xlu0 0
    %869 = vperm.xlu0 %868, %v115
    %v870 = vpop.permute.xlu0 %869
    %v873 = vsel %vm294, %v96, 0
    %v876 = vsel %vm294, %v97, 0
    %v879 = vsel %vm294, %v98, 0
    %v882 = vsel %vm294, %v99, 0
    %v885 = vsel %vm294, %v100, 0
    %v888 = vsel %vm294, %v101, 0
    %v891 = vsel %vm294, %v102, 0
    %v894 = vsel %vm294, %v103, 0
    %v897 = vsel %vm294, %v104, 0
    %v900 = vsel %vm294, %v105, 0
    %902 = vmatprep.subr.mxu0 0.0
    %903 = vmatpush1.msra.mxu0 %v818
    %904 = vmatprep.subr.mxu0 0.0
    %905 = vmatpush1.msra.mxu0 %v819
    %906 = vmatprep.subr.mxu0 0.0
    %907 = vmatpush1.msra.mxu0 %v820
    %908 = vmatprep.subr.mxu0 0.0
    %909 = vmatpush1.msra.mxu0 %v821
    %910 = vmatprep.subr.mxu0 0.0
    %911 = vmatpush1.msra.mxu0 0.0
    %912 = vmatprep.subr.mxu0 0.0
    %913 = vmatpush1.msra.mxu0 0.0
    %914 = vmatprep.subr.mxu0 0.0
    %915 = vmatpush1.msra.mxu0 0.0
    %916 = vmatprep.subr.mxu0 0.0
    %917 = vmatpush1.msra.mxu0 0.0
    %918 = vmatprep.subr.mxu0 0.0
    %919 = vmatpush1.msra.mxu0 0.0
    %920 = vmatprep.subr.mxu0 0.0
    %921 = vmatpush1.msra.mxu0 0.0
    %922 = vmatprep.subr.mxu0 0.0
    %923 = vmatpush1.msra.mxu0 0.0
    %924 = vmatprep.subr.mxu0 0.0
    %925 = vmatpush1.msra.mxu0 0.0
    %926 = vmatprep.subr.mxu0 0.0
    %927 = vmatpush1.msra.mxu0 0.0
    %928 = vmatprep.subr.mxu0 0.0
    %929 = vmatpush1.msra.mxu0 0.0
    %930 = vmatprep.subr.mxu0 0.0
    %931 = vmatpush1.msra.mxu0 0.0
    %932 = vmatprep.subr.mxu0 0.0
    %933 = vmatpush1.msra.mxu0 0.0
    %934 = vmatprep.subr.mxu0 0.0
    %935 = vmatpush1.msra.mxu0 0.0
    %936 = vmatprep.subr.mxu0 0.0
    %937 = vmatpush1.msra.mxu0 0.0
    %938 = vmatprep.subr.mxu0 0.0
    %939 = vmatpush1.msra.mxu0 0.0
    %940 = vmatprep.subr.mxu0 0.0
    %941 = vmatpush1.msra.mxu0 0.0
    %942 = vmatprep.subr.mxu0 0.0
    %943 = vmatpush1.msra.mxu0 0.0
    %944 = vmatprep.subr.mxu0 0.0
    %945 = vmatpush1.msra.mxu0 0.0
    %946 = vmatprep.subr.mxu0 0.0
    %947 = vmatpush1.msra.mxu0 0.0
    %948 = vmatprep.subr.mxu0 0.0
    %949 = vmatpush1.msra.mxu0 0.0
    %950 = vmatprep.subr.mxu0 0.0
    %951 = vmatpush1.msra.mxu0 0.0
    %952 = vmatprep.subr.mxu0 0.0
    %953 = vmatpush1.msra.mxu0 0.0
    %954 = vmatprep.subr.mxu0 0.0
    %955 = vmatpush1.msra.mxu0 0.0
    %956 = vmatprep.subr.mxu0 0.0
    %957 = vmatpush1.msra.mxu0 0.0
    %958 = vmatprep.subr.mxu0 0.0
    %959 = vmatpush1.msra.mxu0 0.0
    %960 = vmatprep.subr.mxu0 0.0
    %961 = vmatpush1.msra.mxu0 0.0
    %962 = vmatprep.subr.mxu0 0.0
    %963 = vmatpush1.msra.mxu0 0.0
    %964 = vmatprep.subr.mxu0 0.0
    %965 = vmatpush1.msra.mxu0 0.0
    %966 = vmatprep.mubr.f32.mxu0 0.0
    %967 = vmatmul.mubr.f32.gmra.mrb[0].mxu0 %v873
    %v968 = vpop.f32.mrb[0].mxu0
    %v969 = vadd.f32 %v825, %v968
    %v970 = vpop.f32.mrb[0].mxu0
    %971 = vmatprep.mubr.f32.mxu0 0.0
    %972 = vmatmul.mubr.f32.gmra.mrb[0].mxu0 %v876
    %v973 = vpop.f32.mrb[0].mxu0
    %v974 = vadd.f32 %v830, %v973
    %v975 = vpop.f32.mrb[0].mxu0
    %976 = vmatprep.mubr.f32.mxu0 0.0
    %977 = vmatmul.mubr.f32.gmra.mrb[0].mxu0 %v879
    %v978 = vpop.f32.mrb[0].mxu0
    %v979 = vadd.f32 %v835, %v978
    %v980 = vpop.f32.mrb[0].mxu0
    %981 = vmatprep.mubr.f32.mxu0 0.0
    %982 = vmatmul.mubr.f32.gmra.mrb[0].mxu0 %v882
    %v983 = vpop.f32.mrb[0].mxu0
    %v984 = vadd.f32 %v840, %v983
    %v985 = vpop.f32.mrb[0].mxu0
    %986 = vmatprep.mubr.f32.mxu0 0.0
    %987 = vmatmul.mubr.f32.gmra.mrb[0].mxu0 %v885
    %v988 = vpop.f32.mrb[0].mxu0
    %v989 = vadd.f32 %v845, %v988
    %v990 = vpop.f32.mrb[0].mxu0
    %991 = vmatprep.mubr.f32.mxu0 0.0
    %992 = vmatmul.mubr.f32.gmra.mrb[0].mxu0 %v888
    %v993 = vpop.f32.mrb[0].mxu0
    %v994 = vadd.f32 %v850, %v993
    %v995 = vpop.f32.mrb[0].mxu0
    %996 = vmatprep.mubr.f32.mxu0 0.0
    %997 = vmatmul.mubr.f32.gmra.mrb[0].mxu0 %v891
    %v998 = vpop.f32.mrb[0].mxu0
    %v999 = vadd.f32 %v855, %v998
    %v1000 = vpop.f32.mrb[0].mxu0
    %1001 = vmatprep.mubr.f32.mxu0 0.0
    %1002 = vmatmul.mubr.f32.gmra.mrb[0].mxu0 %v894
    %v1003 = vpop.f32.mrb[0].mxu0
    %v1004 = vadd.f32 %v860, %v1003
    %v1005 = vpop.f32.mrb[0].mxu0
    %1006 = vmatprep.mubr.f32.mxu0 0.0
    %1007 = vmatmul.mubr.f32.gmra.mrb[0].mxu0 %v897
    %v1008 = vpop.f32.mrb[0].mxu0
    %v1009 = vadd.f32 %v865, %v1008
    %v1010 = vpop.f32.mrb[0].mxu0
    %1011 = vmatprep.mubr.f32.mxu0 0.0
    %1012 = vmatmul.mubr.f32.gmra.mrb[0].mxu0 %v900
    %v1013 = vpop.f32.mrb[0].mxu0
    %v1014 = vadd.f32 %v870, %v1013
    %v1015 = vpop.f32.mrb[0].mxu0
    %1016 = vdwg.mxu0
    %v1017 = vtanh.pop %v969
    %v1018 = vtanh.pop %v974
    %v1019 = vtanh.pop %v979
    %v1020 = vtanh.pop %v984
    %v1021 = vtanh.pop %v989
    %v1022 = vtanh.pop %v994
    %v1023 = vtanh.pop %v999
    %v1024 = vtanh.pop %v1004
    %v1025 = vtanh.pop %v1009
    %v1026 = vtanh.pop %v1014
    %s1027 = scalar_lea.vmem %s0, 8
    %v1028 = vld [vmem:[%s1027] sm:$0x1f]
    %v1029 = vsub.f32 %v1028, %v119
    %v1030 = vlaneseq
    %v1031 = vshrl.u32 %v1030, 7
    %v1032 = vsub.s32 0, %v1031
    %v1033 = vrot.slane %v1029, %v1032
    %v1034 = vmul.f32 %v1017, %v1033
    %v1035 = vmul.f32 %v1018, %v1033
    %v1036 = vlaneseq
    %v1037 = vshrl.u32 %v1036, 7
    %v1038 = vsub.s32 1, %v1037
    %v1039 = vrot.slane %v1029, %v1038
    %v1040 = vmul.f32 %v1019, %v1039
    %v1041 = vmul.f32 %v1020, %v1039
    %v1042 = vadd.f32 %v1034, %v1040
    %v1043 = vadd.f32 %v1035, %v1041
    %v1044 = vlaneseq
    %v1045 = vshrl.u32 %v1044, 7
    %v1046 = vsub.s32 2, %v1045
    %v1047 = vrot.slane %v1029, %v1046
    %v1048 = vmul.f32 %v1021, %v1047
    %v1049 = vmul.f32 %v1022, %v1047
    %v1050 = vadd.f32 %v1042, %v1048
    %v1051 = vadd.f32 %v1043, %v1049
    %v1052 = vlaneseq
    %v1053 = vshrl.u32 %v1052, 7
    %v1054 = vsub.s32 3, %v1053
    %v1055 = vrot.slane %v1029, %v1054
    %v1056 = vmul.f32 %v1023, %v1055
    %v1057 = vmul.f32 %v1024, %v1055
    %v1058 = vadd.f32 %v1050, %v1056
    %v1059 = vadd.f32 %v1051, %v1057
    %v1060 = vlaneseq
    %v1061 = vshrl.u32 %v1060, 7
    %v1062 = vsub.s32 4, %v1061
    %v1063 = vrot.slane %v1029, %v1062
    %v1064 = vmul.f32 %v1025, %v1063
    %v1065 = vmul.f32 %v1026, %v1063
    %v1066 = vadd.f32 %v1058, %v1064
    %v1067 = vadd.f32 %v1059, %v1065
    %v1068 = vmul.f32 %v507, 2.0
    %v1069 = vmul.f32 %v512, 2.0
    %v1070 = vsub.f32 %v1068, %v507
    %v1071 = vsub.f32 %v1069, %v512
    %v1072 = vadd.f32 %v1070, %v1066
    %v1073 = vadd.f32 %v1071, %v1067
    %v1074 = vadd.f32 %v76, %v84
    %v1075 = vadd.f32 %v77, %v85
    %v1076 = vadd.f32 %v78, %v86
    %v1077 = vadd.f32 %v79, %v87
    %1079 = vset.pattern.permute.xlu0 0
    %1080 = vperm.xlu0 %1079, %v1074
    %v1081 = vpop.permute.xlu0 %1080
    %1084 = vset.pattern.permute.xlu0 0
    %1085 = vperm.xlu0 %1084, %v1075
    %v1086 = vpop.permute.xlu0 %1085
    %1089 = vset.pattern.permute.xlu0 0
    %1090 = vperm.xlu0 %1089, %v1076
    %v1091 = vpop.permute.xlu0 %1090
    %1094 = vset.pattern.permute.xlu0 0
    %1095 = vperm.xlu0 %1094, %v1077
    %v1096 = vpop.permute.xlu0 %1095
    %1098 = vmatprep.subr.mxu0 0.0
    %1099 = vmatpush1.msra.mxu0 %v1072
    %1100 = vmatprep.subr.mxu0 0.0
    %1101 = vmatpush1.msra.mxu0 %v1073
    %1102 = vmatprep.subr.mxu0 0.0
    %1103 = vmatpush1.msra.mxu0 0.0
    %1104 = vmatprep.subr.mxu0 0.0
    %1105 = vmatpush1.msra.mxu0 0.0
    %1106 = vmatprep.subr.mxu0 0.0
    %1107 = vmatpush1.msra.mxu0 0.0
    %1108 = vmatprep.subr.mxu0 0.0
    %1109 = vmatpush1.msra.mxu0 0.0
    %1110 = vmatprep.subr.mxu0 0.0
    %1111 = vmatpush1.msra.mxu0 0.0
    %1112 = vmatprep.subr.mxu0 0.0
    %1113 = vmatpush1.msra.mxu0 0.0
    %1114 = vmatprep.subr.mxu0 0.0
    %1115 = vmatpush1.msra.mxu0 0.0
    %1116 = vmatprep.subr.mxu0 0.0
    %1117 = vmatpush1.msra.mxu0 0.0
    %1118 = vmatprep.subr.mxu0 0.0
    %1119 = vmatpush1.msra.mxu0 0.0
    %1120 = vmatprep.subr.mxu0 0.0
    %1121 = vmatpush1.msra.mxu0 0.0
    %1122 = vmatprep.subr.mxu0 0.0
    %1123 = vmatpush1.msra.mxu0 0.0
    %1124 = vmatprep.subr.mxu0 0.0
    %1125 = vmatpush1.msra.mxu0 0.0
    %1126 = vmatprep.subr.mxu0 0.0
    %1127 = vmatpush1.msra.mxu0 0.0
    %1128 = vmatprep.subr.mxu0 0.0
    %1129 = vmatpush1.msra.mxu0 0.0
    %1130 = vmatprep.subr.mxu0 0.0
    %1131 = vmatpush1.msra.mxu0 0.0
    %1132 = vmatprep.subr.mxu0 0.0
    %1133 = vmatpush1.msra.mxu0 0.0
    %1134 = vmatprep.subr.mxu0 0.0
    %1135 = vmatpush1.msra.mxu0 0.0
    %1136 = vmatprep.subr.mxu0 0.0
    %1137 = vmatpush1.msra.mxu0 0.0
    %1138 = vmatprep.subr.mxu0 0.0
    %1139 = vmatpush1.msra.mxu0 0.0
    %1140 = vmatprep.subr.mxu0 0.0
    %1141 = vmatpush1.msra.mxu0 0.0
    %1142 = vmatprep.subr.mxu0 0.0
    %1143 = vmatpush1.msra.mxu0 0.0
    %1144 = vmatprep.subr.mxu0 0.0
    %1145 = vmatpush1.msra.mxu0 0.0
    %1146 = vmatprep.subr.mxu0 0.0
    %1147 = vmatpush1.msra.mxu0 0.0
    %1148 = vmatprep.subr.mxu0 0.0
    %1149 = vmatpush1.msra.mxu0 0.0
    %1150 = vmatprep.subr.mxu0 0.0
    %1151 = vmatpush1.msra.mxu0 0.0
    %1152 = vmatprep.subr.mxu0 0.0
    %1153 = vmatpush1.msra.mxu0 0.0
    %1154 = vmatprep.subr.mxu0 0.0
    %1155 = vmatpush1.msra.mxu0 0.0
    %1156 = vmatprep.subr.mxu0 0.0
    %1157 = vmatpush1.msra.mxu0 0.0
    %1158 = vmatprep.subr.mxu0 0.0
    %1159 = vmatpush1.msra.mxu0 0.0
    %1160 = vmatprep.subr.mxu0 0.0
    %1161 = vmatpush1.msra.mxu0 0.0
    %1162 = vmatprep.mubr.f32.mxu0 0.0
    %1163 = vmatmul.mubr.f32.gmra.mrb[0].mxu0 %v545
    %v1164 = vpop.f32.mrb[0].mxu0
    %v1165 = vadd.f32 %v1081, %v1164
    %v1166 = vpop.f32.mrb[0].mxu0
    %1167 = vmatprep.mubr.f32.mxu0 0.0
    %1168 = vmatmul.mubr.f32.gmra.mrb[0].mxu0 %v548
    %v1169 = vpop.f32.mrb[0].mxu0
    %v1170 = vadd.f32 %v1086, %v1169
    %v1171 = vpop.f32.mrb[0].mxu0
    %1172 = vmatprep.mubr.f32.mxu0 0.0
    %1173 = vmatmul.mubr.f32.gmra.mrb[0].mxu0 %v551
    %v1174 = vpop.f32.mrb[0].mxu0
    %v1175 = vadd.f32 %v1091, %v1174
    %v1176 = vpop.f32.mrb[0].mxu0
    %1177 = vmatprep.mubr.f32.mxu0 0.0
    %1178 = vmatmul.mubr.f32.gmra.mrb[0].mxu0 %v554
    %v1179 = vpop.f32.mrb[0].mxu0
    %v1180 = vadd.f32 %v1096, %v1179
    %v1181 = vpop.f32.mrb[0].mxu0
    %1182 = vdwg.mxu0
    %v1183 = vmul.f32 %v1165, 0.909
    %v1184 = vmul.f32 %v1170, 0.909
    %v1185 = vmul.f32 %v1175, 0.909
    %v1186 = vmul.f32 %v1180, 0.909
    %v1187 = vxor.u32 %v1165, 2147483648
    %v1188 = vxor.u32 %v1170, 2147483648
    %v1189 = vxor.u32 %v1175, 2147483648
    %v1190 = vxor.u32 %v1180, 2147483648
    %v1191 = vmul.f32 %v1187, 1.442695
    %v1192 = vpow.pop %v1191
    %v1193 = vmul.f32 %v1188, 1.442695
    %v1194 = vpow.pop %v1193
    %v1195 = vmul.f32 %v1189, 1.442695
    %v1196 = vpow.pop %v1195
    %v1197 = vmul.f32 %v1190, 1.442695
    %v1198 = vpow.pop %v1197
    %v1199 = vadd.f32 %v1192, 1.0
    %v1200 = vadd.f32 %v1194, 1.0
    %v1201 = vadd.f32 %v1196, 1.0
    %v1202 = vadd.f32 %v1198, 1.0
    %v1203 = vrcp.pop %v1199
    %v1204 = vmul.f32 1.0, %v1203
    %v1205 = vrcp.pop %v1200
    %v1206 = vmul.f32 1.0, %v1205
    %v1207 = vrcp.pop %v1201
    %v1208 = vmul.f32 1.0, %v1207
    %v1209 = vrcp.pop %v1202
    %v1210 = vmul.f32 1.0, %v1209
    %v1211 = vmul.f32 %v1183, %v1204
    %v1212 = vmul.f32 %v1184, %v1206
    %v1213 = vmul.f32 %v1185, %v1208
    %v1214 = vmul.f32 %v1186, %v1210
    %1215 = vmatprep.subr.mxu0 0.0
    %1216 = vmatpush1.msra.mxu0 %v1211
    %1217 = vmatprep.subr.mxu0 0.0
    %1218 = vmatpush1.msra.mxu0 %v1212
    %1219 = vmatprep.subr.mxu0 0.0
    %1220 = vmatpush1.msra.mxu0 %v1213
    %1221 = vmatprep.subr.mxu0 0.0
    %1222 = vmatpush1.msra.mxu0 %v1214
    %1223 = vmatprep.subr.mxu0 0.0
    %1224 = vmatpush1.msra.mxu0 0.0
    %1225 = vmatprep.subr.mxu0 0.0
    %1226 = vmatpush1.msra.mxu0 0.0
    %1227 = vmatprep.subr.mxu0 0.0
    %1228 = vmatpush1.msra.mxu0 0.0
    %1229 = vmatprep.subr.mxu0 0.0
    %1230 = vmatpush1.msra.mxu0 0.0
    %1231 = vmatprep.subr.mxu0 0.0
    %1232 = vmatpush1.msra.mxu0 0.0
    %1233 = vmatprep.subr.mxu0 0.0
    %1234 = vmatpush1.msra.mxu0 0.0
    %1235 = vmatprep.subr.mxu0 0.0
    %1236 = vmatpush1.msra.mxu0 0.0
    %1237 = vmatprep.subr.mxu0 0.0
    %1238 = vmatpush1.msra.mxu0 0.0
    %1239 = vmatprep.subr.mxu0 0.0
    %1240 = vmatpush1.msra.mxu0 0.0
    %1241 = vmatprep.subr.mxu0 0.0
    %1242 = vmatpush1.msra.mxu0 0.0
    %1243 = vmatprep.subr.mxu0 0.0
    %1244 = vmatpush1.msra.mxu0 0.0
    %1245 = vmatprep.subr.mxu0 0.0
    %1246 = vmatpush1.msra.mxu0 0.0
    %1247 = vmatprep.subr.mxu0 0.0
    %1248 = vmatpush1.msra.mxu0 0.0
    %1249 = vmatprep.subr.mxu0 0.0
    %1250 = vmatpush1.msra.mxu0 0.0
    %1251 = vmatprep.subr.mxu0 0.0
    %1252 = vmatpush1.msra.mxu0 0.0
    %1253 = vmatprep.subr.mxu0 0.0
    %1254 = vmatpush1.msra.mxu0 0.0
    %1255 = vmatprep.subr.mxu0 0.0
    %1256 = vmatpush1.msra.mxu0 0.0
    %1257 = vmatprep.subr.mxu0 0.0
    %1258 = vmatpush1.msra.mxu0 0.0
    %1259 = vmatprep.subr.mxu0 0.0
    %1260 = vmatpush1.msra.mxu0 0.0
    %1261 = vmatprep.subr.mxu0 0.0
    %1262 = vmatpush1.msra.mxu0 0.0
    %1263 = vmatprep.subr.mxu0 0.0
    %1264 = vmatpush1.msra.mxu0 0.0
    %1265 = vmatprep.subr.mxu0 0.0
    %1266 = vmatpush1.msra.mxu0 0.0
    %1267 = vmatprep.subr.mxu0 0.0
    %1268 = vmatpush1.msra.mxu0 0.0
    %1269 = vmatprep.subr.mxu0 0.0
    %1270 = vmatpush1.msra.mxu0 0.0
    %1271 = vmatprep.subr.mxu0 0.0
    %1272 = vmatpush1.msra.mxu0 0.0
    %1273 = vmatprep.subr.mxu0 0.0
    %1274 = vmatpush1.msra.mxu0 0.0
    %1275 = vmatprep.subr.mxu0 0.0
    %1276 = vmatpush1.msra.mxu0 0.0
    %1277 = vmatprep.subr.mxu0 0.0
    %1278 = vmatpush1.msra.mxu0 0.0
    %1279 = vmatprep.mubr.f32.mxu0 0.0
    %1280 = vmatmul.mubr.f32.gmra.mrb[0].mxu0 %v694
    %v1281 = vpop.f32.mrb[0].mxu0
    %v1282 = vadd.f32 %v676, %v1281
    %v1283 = vpop.f32.mrb[0].mxu0
    %1284 = vmatprep.mubr.f32.mxu0 0.0
    %1285 = vmatmul.mubr.f32.gmra.mrb[0].mxu0 %v697
    %v1286 = vpop.f32.mrb[0].mxu0
    %v1287 = vadd.f32 %v681, %v1286
    %v1288 = vpop.f32.mrb[0].mxu0
    %1289 = vmatprep.mubr.f32.mxu0 0.0
    %1290 = vmatmul.mubr.f32.gmra.mrb[0].mxu0 %v700
    %v1291 = vpop.f32.mrb[0].mxu0
    %v1292 = vadd.f32 %v686, %v1291
    %v1293 = vpop.f32.mrb[0].mxu0
    %1294 = vmatprep.mubr.f32.mxu0 0.0
    %1295 = vmatmul.mubr.f32.gmra.mrb[0].mxu0 %v703
    %v1296 = vpop.f32.mrb[0].mxu0
    %v1297 = vadd.f32 %v691, %v1296
    %v1298 = vpop.f32.mrb[0].mxu0
    %1299 = vdwg.mxu0
    %v1300 = vmul.f32 %v1282, 0.909
    %v1301 = vmul.f32 %v1287, 0.909
    %v1302 = vmul.f32 %v1292, 0.909
    %v1303 = vmul.f32 %v1297, 0.909
    %v1304 = vxor.u32 %v1282, 2147483648
    %v1305 = vxor.u32 %v1287, 2147483648
    %v1306 = vxor.u32 %v1292, 2147483648
    %v1307 = vxor.u32 %v1297, 2147483648
    %v1308 = vmul.f32 %v1304, 1.442695
    %v1309 = vpow.pop %v1308
    %v1310 = vmul.f32 %v1305, 1.442695
    %v1311 = vpow.pop %v1310
    %v1312 = vmul.f32 %v1306, 1.442695
    %v1313 = vpow.pop %v1312
    %v1314 = vmul.f32 %v1307, 1.442695
    %v1315 = vpow.pop %v1314
    %v1316 = vadd.f32 %v1309, 1.0
    %v1317 = vadd.f32 %v1311, 1.0
    %v1318 = vadd.f32 %v1313, 1.0
    %v1319 = vadd.f32 %v1315, 1.0
    %v1320 = vrcp.pop %v1316
    %v1321 = vmul.f32 1.0, %v1320
    %v1322 = vrcp.pop %v1317
    %v1323 = vmul.f32 1.0, %v1322
    %v1324 = vrcp.pop %v1318
    %v1325 = vmul.f32 1.0, %v1324
    %v1326 = vrcp.pop %v1319
    %v1327 = vmul.f32 1.0, %v1326
    %v1328 = vmul.f32 %v1300, %v1321
    %v1329 = vmul.f32 %v1301, %v1323
    %v1330 = vmul.f32 %v1302, %v1325
    %v1331 = vmul.f32 %v1303, %v1327
    %1332 = vmatprep.subr.mxu0 0.0
    %1333 = vmatpush1.msra.mxu0 %v1328
    %1334 = vmatprep.subr.mxu0 0.0
    %1335 = vmatpush1.msra.mxu0 %v1329
    %1336 = vmatprep.subr.mxu0 0.0
    %1337 = vmatpush1.msra.mxu0 %v1330
    %1338 = vmatprep.subr.mxu0 0.0
    %1339 = vmatpush1.msra.mxu0 %v1331
    %1340 = vmatprep.subr.mxu0 0.0
    %1341 = vmatpush1.msra.mxu0 0.0
    %1342 = vmatprep.subr.mxu0 0.0
    %1343 = vmatpush1.msra.mxu0 0.0
    %1344 = vmatprep.subr.mxu0 0.0
    %1345 = vmatpush1.msra.mxu0 0.0
    %1346 = vmatprep.subr.mxu0 0.0
    %1347 = vmatpush1.msra.mxu0 0.0
    %1348 = vmatprep.subr.mxu0 0.0
    %1349 = vmatpush1.msra.mxu0 0.0
    %1350 = vmatprep.subr.mxu0 0.0
    %1351 = vmatpush1.msra.mxu0 0.0
    %1352 = vmatprep.subr.mxu0 0.0
    %1353 = vmatpush1.msra.mxu0 0.0
    %1354 = vmatprep.subr.mxu0 0.0
    %1355 = vmatpush1.msra.mxu0 0.0
    %1356 = vmatprep.subr.mxu0 0.0
    %1357 = vmatpush1.msra.mxu0 0.0
    %1358 = vmatprep.subr.mxu0 0.0
    %1359 = vmatpush1.msra.mxu0 0.0
    %1360 = vmatprep.subr.mxu0 0.0
    %1361 = vmatpush1.msra.mxu0 0.0
    %1362 = vmatprep.subr.mxu0 0.0
    %1363 = vmatpush1.msra.mxu0 0.0
    %1364 = vmatprep.subr.mxu0 0.0
    %1365 = vmatpush1.msra.mxu0 0.0
    %1366 = vmatprep.subr.mxu0 0.0
    %1367 = vmatpush1.msra.mxu0 0.0
    %1368 = vmatprep.subr.mxu0 0.0
    %1369 = vmatpush1.msra.mxu0 0.0
    %1370 = vmatprep.subr.mxu0 0.0
    %1371 = vmatpush1.msra.mxu0 0.0
    %1372 = vmatprep.subr.mxu0 0.0
    %1373 = vmatpush1.msra.mxu0 0.0
    %1374 = vmatprep.subr.mxu0 0.0
    %1375 = vmatpush1.msra.mxu0 0.0
    %1376 = vmatprep.subr.mxu0 0.0
    %1377 = vmatpush1.msra.mxu0 0.0
    %1378 = vmatprep.subr.mxu0 0.0
    %1379 = vmatpush1.msra.mxu0 0.0
    %1380 = vmatprep.subr.mxu0 0.0
    %1381 = vmatpush1.msra.mxu0 0.0
    %1382 = vmatprep.subr.mxu0 0.0
    %1383 = vmatpush1.msra.mxu0 0.0
    %1384 = vmatprep.subr.mxu0 0.0
    %1385 = vmatpush1.msra.mxu0 0.0
    %1386 = vmatprep.subr.mxu0 0.0
    %1387 = vmatpush1.msra.mxu0 0.0
    %1388 = vmatprep.subr.mxu0 0.0
    %1389 = vmatpush1.msra.mxu0 0.0
    %1390 = vmatprep.subr.mxu0 0.0
    %1391 = vmatpush1.msra.mxu0 0.0
    %1392 = vmatprep.subr.mxu0 0.0
    %1393 = vmatpush1.msra.mxu0 0.0
    %1394 = vmatprep.subr.mxu0 0.0
    %1395 = vmatpush1.msra.mxu0 0.0
    %1396 = vmatprep.mubr.f32.mxu0 0.0
    %1397 = vmatmul.mubr.f32.gmra.mrb[0].mxu0 %v873
    %v1398 = vpop.f32.mrb[0].mxu0
    %v1399 = vadd.f32 %v825, %v1398
    %v1400 = vpop.f32.mrb[0].mxu0
    %1401 = vmatprep.mubr.f32.mxu0 0.0
    %1402 = vmatmul.mubr.f32.gmra.mrb[0].mxu0 %v876
    %v1403 = vpop.f32.mrb[0].mxu0
    %v1404 = vadd.f32 %v830, %v1403
    %v1405 = vpop.f32.mrb[0].mxu0
    %1406 = vmatprep.mubr.f32.mxu0 0.0
    %1407 = vmatmul.mubr.f32.gmra.mrb[0].mxu0 %v879
    %v1408 = vpop.f32.mrb[0].mxu0
    %v1409 = vadd.f32 %v835, %v1408
    %v1410 = vpop.f32.mrb[0].mxu0
    %1411 = vmatprep.mubr.f32.mxu0 0.0
    %1412 = vmatmul.mubr.f32.gmra.mrb[0].mxu0 %v882
    %v1413 = vpop.f32.mrb[0].mxu0
    %v1414 = vadd.f32 %v840, %v1413
    %v1415 = vpop.f32.mrb[0].mxu0
    %1416 = vmatprep.mubr.f32.mxu0 0.0
    %1417 = vmatmul.mubr.f32.gmra.mrb[0].mxu0 %v885
    %v1418 = vpop.f32.mrb[0].mxu0
    %v1419 = vadd.f32 %v845, %v1418
    %v1420 = vpop.f32.mrb[0].mxu0
    %1421 = vmatprep.mubr.f32.mxu0 0.0
    %1422 = vmatmul.mubr.f32.gmra.mrb[0].mxu0 %v888
    %v1423 = vpop.f32.mrb[0].mxu0
    %v1424 = vadd.f32 %v850, %v1423
    %v1425 = vpop.f32.mrb[0].mxu0
    %1426 = vmatprep.mubr.f32.mxu0 0.0
    %1427 = vmatmul.mubr.f32.gmra.mrb[0].mxu0 %v891
    %v1428 = vpop.f32.mrb[0].mxu0
    %v1429 = vadd.f32 %v855, %v1428
    %v1430 = vpop.f32.mrb[0].mxu0
    %1431 = vmatprep.mubr.f32.mxu0 0.0
    %1432 = vmatmul.mubr.f32.gmra.mrb[0].mxu0 %v894
    %v1433 = vpop.f32.mrb[0].mxu0
    %v1434 = vadd.f32 %v860, %v1433
    %v1435 = vpop.f32.mrb[0].mxu0
    %1436 = vmatprep.mubr.f32.mxu0 0.0
    %1437 = vmatmul.mubr.f32.gmra.mrb[0].mxu0 %v897
    %v1438 = vpop.f32.mrb[0].mxu0
    %v1439 = vadd.f32 %v865, %v1438
    %v1440 = vpop.f32.mrb[0].mxu0
    %1441 = vmatprep.mubr.f32.mxu0 0.0
    %1442 = vmatmul.mubr.f32.gmra.mrb[0].mxu0 %v900
    %v1443 = vpop.f32.mrb[0].mxu0
    %v1444 = vadd.f32 %v870, %v1443
    %v1445 = vpop.f32.mrb[0].mxu0
    %1446 = vdwg.mxu0
    %v1447 = vtanh.pop %v1399
    %v1448 = vtanh.pop %v1404
    %v1449 = vtanh.pop %v1409
    %v1450 = vtanh.pop %v1414
    %v1451 = vtanh.pop %v1419
    %v1452 = vtanh.pop %v1424
    %v1453 = vtanh.pop %v1429
    %v1454 = vtanh.pop %v1434
    %v1455 = vtanh.pop %v1439
    %v1456 = vtanh.pop %v1444
    %v1457 = vmul.f32 %v1447, %v1033
    %v1458 = vmul.f32 %v1448, %v1033
    %v1459 = vmul.f32 %v1449, %v1039
    %v1460 = vmul.f32 %v1450, %v1039
    %v1461 = vadd.f32 %v1457, %v1459
    %v1462 = vadd.f32 %v1458, %v1460
    %v1463 = vmul.f32 %v1451, %v1047
    %v1464 = vmul.f32 %v1452, %v1047
    %v1465 = vadd.f32 %v1461, %v1463
    %v1466 = vadd.f32 %v1462, %v1464
    %v1467 = vmul.f32 %v1453, %v1055
    %v1468 = vmul.f32 %v1454, %v1055
    %v1469 = vadd.f32 %v1465, %v1467
    %v1470 = vadd.f32 %v1466, %v1468
    %v1471 = vmul.f32 %v1455, %v1063
    %v1472 = vmul.f32 %v1456, %v1063
    %v1473 = vadd.f32 %v1469, %v1471
    %v1474 = vadd.f32 %v1470, %v1472
    %v1475 = vadd.f32 %v1066, %v1473
    %v1476 = vadd.f32 %v1067, %v1474
    %v1477 = vmul.f32 %v1475, 0.5
    %v1478 = vmul.f32 %v1476, 0.5
    %v1479 = vadd.f32 %v507, %v1477
    %v1480 = vadd.f32 %v512, %v1478
    %v1481 = vmul.f32 %v1479, 2.0
    %v1482 = vmul.f32 %v1480, 2.0
    %v1483 = vsub.f32 %v1481, %v1072
    %v1484 = vsub.f32 %v1482, %v1073
    %v1485 = vadd.f32 %v1483, %v1473
    %v1486 = vadd.f32 %v1484, %v1474
    %v1487 = vmul.f32 %v76, 2.0
    %v1488 = vmul.f32 %v77, 2.0
    %v1489 = vmul.f32 %v78, 2.0
    %v1490 = vmul.f32 %v79, 2.0
    %v1491 = vadd.f32 %v1487, %v84
    %v1492 = vadd.f32 %v1488, %v85
    %v1493 = vadd.f32 %v1489, %v86
    %v1494 = vadd.f32 %v1490, %v87
    %1496 = vset.pattern.permute.xlu0 0
    %1497 = vperm.xlu0 %1496, %v1491
    %v1498 = vpop.permute.xlu0 %1497
    %1501 = vset.pattern.permute.xlu0 0
    %1502 = vperm.xlu0 %1501, %v1492
    %v1503 = vpop.permute.xlu0 %1502
    %1506 = vset.pattern.permute.xlu0 0
    %1507 = vperm.xlu0 %1506, %v1493
    %v1508 = vpop.permute.xlu0 %1507
    %1511 = vset.pattern.permute.xlu0 0
    %1512 = vperm.xlu0 %1511, %v1494
    %v1513 = vpop.permute.xlu0 %1512
    %1515 = vmatprep.subr.mxu0 0.0
    %1516 = vmatpush1.msra.mxu0 %v1485
    %1517 = vmatprep.subr.mxu0 0.0
    %1518 = vmatpush1.msra.mxu0 %v1486
    %1519 = vmatprep.subr.mxu0 0.0
    %1520 = vmatpush1.msra.mxu0 0.0
    %1521 = vmatprep.subr.mxu0 0.0
    %1522 = vmatpush1.msra.mxu0 0.0
    %1523 = vmatprep.subr.mxu0 0.0
    %1524 = vmatpush1.msra.mxu0 0.0
    %1525 = vmatprep.subr.mxu0 0.0
    %1526 = vmatpush1.msra.mxu0 0.0
    %1527 = vmatprep.subr.mxu0 0.0
    %1528 = vmatpush1.msra.mxu0 0.0
    %1529 = vmatprep.subr.mxu0 0.0
    %1530 = vmatpush1.msra.mxu0 0.0
    %1531 = vmatprep.subr.mxu0 0.0
    %1532 = vmatpush1.msra.mxu0 0.0
    %1533 = vmatprep.subr.mxu0 0.0
    %1534 = vmatpush1.msra.mxu0 0.0
    %1535 = vmatprep.subr.mxu0 0.0
    %1536 = vmatpush1.msra.mxu0 0.0
    %1537 = vmatprep.subr.mxu0 0.0
    %1538 = vmatpush1.msra.mxu0 0.0
    %1539 = vmatprep.subr.mxu0 0.0
    %1540 = vmatpush1.msra.mxu0 0.0
    %1541 = vmatprep.subr.mxu0 0.0
    %1542 = vmatpush1.msra.mxu0 0.0
    %1543 = vmatprep.subr.mxu0 0.0
    %1544 = vmatpush1.msra.mxu0 0.0
    %1545 = vmatprep.subr.mxu0 0.0
    %1546 = vmatpush1.msra.mxu0 0.0
    %1547 = vmatprep.subr.mxu0 0.0
    %1548 = vmatpush1.msra.mxu0 0.0
    %1549 = vmatprep.subr.mxu0 0.0
    %1550 = vmatpush1.msra.mxu0 0.0
    %1551 = vmatprep.subr.mxu0 0.0
    %1552 = vmatpush1.msra.mxu0 0.0
    %1553 = vmatprep.subr.mxu0 0.0
    %1554 = vmatpush1.msra.mxu0 0.0
    %1555 = vmatprep.subr.mxu0 0.0
    %1556 = vmatpush1.msra.mxu0 0.0
    %1557 = vmatprep.subr.mxu0 0.0
    %1558 = vmatpush1.msra.mxu0 0.0
    %1559 = vmatprep.subr.mxu0 0.0
    %1560 = vmatpush1.msra.mxu0 0.0
    %1561 = vmatprep.subr.mxu0 0.0
    %1562 = vmatpush1.msra.mxu0 0.0
    %1563 = vmatprep.subr.mxu0 0.0
    %1564 = vmatpush1.msra.mxu0 0.0
    %1565 = vmatprep.subr.mxu0 0.0
    %1566 = vmatpush1.msra.mxu0 0.0
    %1567 = vmatprep.subr.mxu0 0.0
    %1568 = vmatpush1.msra.mxu0 0.0
    %1569 = vmatprep.subr.mxu0 0.0
    %1570 = vmatpush1.msra.mxu0 0.0
    %1571 = vmatprep.subr.mxu0 0.0
    %1572 = vmatpush1.msra.mxu0 0.0
    %1573 = vmatprep.subr.mxu0 0.0
    %1574 = vmatpush1.msra.mxu0 0.0
    %1575 = vmatprep.subr.mxu0 0.0
    %1576 = vmatpush1.msra.mxu0 0.0
    %1577 = vmatprep.subr.mxu0 0.0
    %1578 = vmatpush1.msra.mxu0 0.0
    %1579 = vmatprep.mubr.f32.mxu0 0.0
    %1580 = vmatmul.mubr.f32.gmra.mrb[0].mxu0 %v545
    %v1581 = vpop.f32.mrb[0].mxu0
    %v1582 = vadd.f32 %v1498, %v1581
    %v1583 = vpop.f32.mrb[0].mxu0
    %1584 = vmatprep.mubr.f32.mxu0 0.0
    %1585 = vmatmul.mubr.f32.gmra.mrb[0].mxu0 %v548
    %v1586 = vpop.f32.mrb[0].mxu0
    %v1587 = vadd.f32 %v1503, %v1586
    %v1588 = vpop.f32.mrb[0].mxu0
    %1589 = vmatprep.mubr.f32.mxu0 0.0
    %1590 = vmatmul.mubr.f32.gmra.mrb[0].mxu0 %v551
    %v1591 = vpop.f32.mrb[0].mxu0
    %v1592 = vadd.f32 %v1508, %v1591
    %v1593 = vpop.f32.mrb[0].mxu0
    %1594 = vmatprep.mubr.f32.mxu0 0.0
    %1595 = vmatmul.mubr.f32.gmra.mrb[0].mxu0 %v554
    %v1596 = vpop.f32.mrb[0].mxu0
    %v1597 = vadd.f32 %v1513, %v1596
    %v1598 = vpop.f32.mrb[0].mxu0
    %1599 = vdwg.mxu0
    %v1600 = vmul.f32 %v1582, 0.909
    %v1601 = vmul.f32 %v1587, 0.909
    %v1602 = vmul.f32 %v1592, 0.909
    %v1603 = vmul.f32 %v1597, 0.909
    %v1604 = vxor.u32 %v1582, 2147483648
    %v1605 = vxor.u32 %v1587, 2147483648
    %v1606 = vxor.u32 %v1592, 2147483648
    %v1607 = vxor.u32 %v1597, 2147483648
    %v1608 = vmul.f32 %v1604, 1.442695
    %v1609 = vpow.pop %v1608
    %v1610 = vmul.f32 %v1605, 1.442695
    %v1611 = vpow.pop %v1610
    %v1612 = vmul.f32 %v1606, 1.442695
    %v1613 = vpow.pop %v1612
    %v1614 = vmul.f32 %v1607, 1.442695
    %v1615 = vpow.pop %v1614
    %v1616 = vadd.f32 %v1609, 1.0
    %v1617 = vadd.f32 %v1611, 1.0
    %v1618 = vadd.f32 %v1613, 1.0
    %v1619 = vadd.f32 %v1615, 1.0
    %v1620 = vrcp.pop %v1616
    %v1621 = vmul.f32 1.0, %v1620
    %v1622 = vrcp.pop %v1617
    %v1623 = vmul.f32 1.0, %v1622
    %v1624 = vrcp.pop %v1618
    %v1625 = vmul.f32 1.0, %v1624
    %v1626 = vrcp.pop %v1619
    %v1627 = vmul.f32 1.0, %v1626
    %v1628 = vmul.f32 %v1600, %v1621
    %v1629 = vmul.f32 %v1601, %v1623
    %v1630 = vmul.f32 %v1602, %v1625
    %v1631 = vmul.f32 %v1603, %v1627
    %1632 = vmatprep.subr.mxu0 0.0
    %1633 = vmatpush1.msra.mxu0 %v1628
    %1634 = vmatprep.subr.mxu0 0.0
    %1635 = vmatpush1.msra.mxu0 %v1629
    %1636 = vmatprep.subr.mxu0 0.0
    %1637 = vmatpush1.msra.mxu0 %v1630
    %1638 = vmatprep.subr.mxu0 0.0
    %1639 = vmatpush1.msra.mxu0 %v1631
    %1640 = vmatprep.subr.mxu0 0.0
    %1641 = vmatpush1.msra.mxu0 0.0
    %1642 = vmatprep.subr.mxu0 0.0
    %1643 = vmatpush1.msra.mxu0 0.0
    %1644 = vmatprep.subr.mxu0 0.0
    %1645 = vmatpush1.msra.mxu0 0.0
    %1646 = vmatprep.subr.mxu0 0.0
    %1647 = vmatpush1.msra.mxu0 0.0
    %1648 = vmatprep.subr.mxu0 0.0
    %1649 = vmatpush1.msra.mxu0 0.0
    %1650 = vmatprep.subr.mxu0 0.0
    %1651 = vmatpush1.msra.mxu0 0.0
    %1652 = vmatprep.subr.mxu0 0.0
    %1653 = vmatpush1.msra.mxu0 0.0
    %1654 = vmatprep.subr.mxu0 0.0
    %1655 = vmatpush1.msra.mxu0 0.0
    %1656 = vmatprep.subr.mxu0 0.0
    %1657 = vmatpush1.msra.mxu0 0.0
    %1658 = vmatprep.subr.mxu0 0.0
    %1659 = vmatpush1.msra.mxu0 0.0
    %1660 = vmatprep.subr.mxu0 0.0
    %1661 = vmatpush1.msra.mxu0 0.0
    %1662 = vmatprep.subr.mxu0 0.0
    %1663 = vmatpush1.msra.mxu0 0.0
    %1664 = vmatprep.subr.mxu0 0.0
    %1665 = vmatpush1.msra.mxu0 0.0
    %1666 = vmatprep.subr.mxu0 0.0
    %1667 = vmatpush1.msra.mxu0 0.0
    %1668 = vmatprep.subr.mxu0 0.0
    %1669 = vmatpush1.msra.mxu0 0.0
    %1670 = vmatprep.subr.mxu0 0.0
    %1671 = vmatpush1.msra.mxu0 0.0
    %1672 = vmatprep.subr.mxu0 0.0
    %1673 = vmatpush1.msra.mxu0 0.0
    %1674 = vmatprep.subr.mxu0 0.0
    %1675 = vmatpush1.msra.mxu0 0.0
    %1676 = vmatprep.subr.mxu0 0.0
    %1677 = vmatpush1.msra.mxu0 0.0
    %1678 = vmatprep.subr.mxu0 0.0
    %1679 = vmatpush1.msra.mxu0 0.0
    %1680 = vmatprep.subr.mxu0 0.0
    %1681 = vmatpush1.msra.mxu0 0.0
    %1682 = vmatprep.subr.mxu0 0.0
    %1683 = vmatpush1.msra.mxu0 0.0
    %1684 = vmatprep.subr.mxu0 0.0
    %1685 = vmatpush1.msra.mxu0 0.0
    %1686 = vmatprep.subr.mxu0 0.0
    %1687 = vmatpush1.msra.mxu0 0.0
    %1688 = vmatprep.subr.mxu0 0.0
    %1689 = vmatpush1.msra.mxu0 0.0
    %1690 = vmatprep.subr.mxu0 0.0
    %1691 = vmatpush1.msra.mxu0 0.0
    %1692 = vmatprep.subr.mxu0 0.0
    %1693 = vmatpush1.msra.mxu0 0.0
    %1694 = vmatprep.subr.mxu0 0.0
    %1695 = vmatpush1.msra.mxu0 0.0
    %1696 = vmatprep.mubr.f32.mxu0 0.0
    %1697 = vmatmul.mubr.f32.gmra.mrb[0].mxu0 %v694
    %v1698 = vpop.f32.mrb[0].mxu0
    %v1699 = vadd.f32 %v676, %v1698
    %v1700 = vpop.f32.mrb[0].mxu0
    %1701 = vmatprep.mubr.f32.mxu0 0.0
    %1702 = vmatmul.mubr.f32.gmra.mrb[0].mxu0 %v697
    %v1703 = vpop.f32.mrb[0].mxu0
    %v1704 = vadd.f32 %v681, %v1703
    %v1705 = vpop.f32.mrb[0].mxu0
    %1706 = vmatprep.mubr.f32.mxu0 0.0
    %1707 = vmatmul.mubr.f32.gmra.mrb[0].mxu0 %v700
    %v1708 = vpop.f32.mrb[0].mxu0
    %v1709 = vadd.f32 %v686, %v1708
    %v1710 = vpop.f32.mrb[0].mxu0
    %1711 = vmatprep.mubr.f32.mxu0 0.0
    %1712 = vmatmul.mubr.f32.gmra.mrb[0].mxu0 %v703
    %v1713 = vpop.f32.mrb[0].mxu0
    %v1714 = vadd.f32 %v691, %v1713
    %v1715 = vpop.f32.mrb[0].mxu0
    %1716 = vdwg.mxu0
    %v1717 = vmul.f32 %v1699, 0.909
    %v1718 = vmul.f32 %v1704, 0.909
    %v1719 = vmul.f32 %v1709, 0.909
    %v1720 = vmul.f32 %v1714, 0.909
    %v1721 = vxor.u32 %v1699, 2147483648
    %v1722 = vxor.u32 %v1704, 2147483648
    %v1723 = vxor.u32 %v1709, 2147483648
    %v1724 = vxor.u32 %v1714, 2147483648
    %v1725 = vmul.f32 %v1721, 1.442695
    %v1726 = vpow.pop %v1725
    %v1727 = vmul.f32 %v1722, 1.442695
    %v1728 = vpow.pop %v1727
    %v1729 = vmul.f32 %v1723, 1.442695
    %v1730 = vpow.pop %v1729
    %v1731 = vmul.f32 %v1724, 1.442695
    %v1732 = vpow.pop %v1731
    %v1733 = vadd.f32 %v1726, 1.0
    %v1734 = vadd.f32 %v1728, 1.0
    %v1735 = vadd.f32 %v1730, 1.0
    %v1736 = vadd.f32 %v1732, 1.0
    %v1737 = vrcp.pop %v1733
    %v1738 = vmul.f32 1.0, %v1737
    %v1739 = vrcp.pop %v1734
    %v1740 = vmul.f32 1.0, %v1739
    %v1741 = vrcp.pop %v1735
    %v1742 = vmul.f32 1.0, %v1741
    %v1743 = vrcp.pop %v1736
    %v1744 = vmul.f32 1.0, %v1743
    %v1745 = vmul.f32 %v1717, %v1738
    %v1746 = vmul.f32 %v1718, %v1740
    %v1747 = vmul.f32 %v1719, %v1742
    %v1748 = vmul.f32 %v1720, %v1744
    %1749 = vmatprep.subr.mxu0 0.0
    %1750 = vmatpush1.msra.mxu0 %v1745
    %1751 = vmatprep.subr.mxu0 0.0
    %1752 = vmatpush1.msra.mxu0 %v1746
    %1753 = vmatprep.subr.mxu0 0.0
    %1754 = vmatpush1.msra.mxu0 %v1747
    %1755 = vmatprep.subr.mxu0 0.0
    %1756 = vmatpush1.msra.mxu0 %v1748
    %1757 = vmatprep.subr.mxu0 0.0
    %1758 = vmatpush1.msra.mxu0 0.0
    %1759 = vmatprep.subr.mxu0 0.0
    %1760 = vmatpush1.msra.mxu0 0.0
    %1761 = vmatprep.subr.mxu0 0.0
    %1762 = vmatpush1.msra.mxu0 0.0
    %1763 = vmatprep.subr.mxu0 0.0
    %1764 = vmatpush1.msra.mxu0 0.0
    %1765 = vmatprep.subr.mxu0 0.0
    %1766 = vmatpush1.msra.mxu0 0.0
    %1767 = vmatprep.subr.mxu0 0.0
    %1768 = vmatpush1.msra.mxu0 0.0
    %1769 = vmatprep.subr.mxu0 0.0
    %1770 = vmatpush1.msra.mxu0 0.0
    %1771 = vmatprep.subr.mxu0 0.0
    %1772 = vmatpush1.msra.mxu0 0.0
    %1773 = vmatprep.subr.mxu0 0.0
    %1774 = vmatpush1.msra.mxu0 0.0
    %1775 = vmatprep.subr.mxu0 0.0
    %1776 = vmatpush1.msra.mxu0 0.0
    %1777 = vmatprep.subr.mxu0 0.0
    %1778 = vmatpush1.msra.mxu0 0.0
    %1779 = vmatprep.subr.mxu0 0.0
    %1780 = vmatpush1.msra.mxu0 0.0
    %1781 = vmatprep.subr.mxu0 0.0
    %1782 = vmatpush1.msra.mxu0 0.0
    %1783 = vmatprep.subr.mxu0 0.0
    %1784 = vmatpush1.msra.mxu0 0.0
    %1785 = vmatprep.subr.mxu0 0.0
    %1786 = vmatpush1.msra.mxu0 0.0
    %1787 = vmatprep.subr.mxu0 0.0
    %1788 = vmatpush1.msra.mxu0 0.0
    %1789 = vmatprep.subr.mxu0 0.0
    %1790 = vmatpush1.msra.mxu0 0.0
    %1791 = vmatprep.subr.mxu0 0.0
    %1792 = vmatpush1.msra.mxu0 0.0
    %1793 = vmatprep.subr.mxu0 0.0
    %1794 = vmatpush1.msra.mxu0 0.0
    %1795 = vmatprep.subr.mxu0 0.0
    %1796 = vmatpush1.msra.mxu0 0.0
    %1797 = vmatprep.subr.mxu0 0.0
    %1798 = vmatpush1.msra.mxu0 0.0
    %1799 = vmatprep.subr.mxu0 0.0
    %1800 = vmatpush1.msra.mxu0 0.0
    %1801 = vmatprep.subr.mxu0 0.0
    %1802 = vmatpush1.msra.mxu0 0.0
    %1803 = vmatprep.subr.mxu0 0.0
    %1804 = vmatpush1.msra.mxu0 0.0
    %1805 = vmatprep.subr.mxu0 0.0
    %1806 = vmatpush1.msra.mxu0 0.0
    %1807 = vmatprep.subr.mxu0 0.0
    %1808 = vmatpush1.msra.mxu0 0.0
    %1809 = vmatprep.subr.mxu0 0.0
    %1810 = vmatpush1.msra.mxu0 0.0
    %1811 = vmatprep.subr.mxu0 0.0
    %1812 = vmatpush1.msra.mxu0 0.0
    %1813 = vmatprep.mubr.f32.mxu0 0.0
    %1814 = vmatmul.mubr.f32.gmra.mrb[0].mxu0 %v873
    %v1815 = vpop.f32.mrb[0].mxu0
    %v1816 = vadd.f32 %v825, %v1815
    %v1817 = vpop.f32.mrb[0].mxu0
    %1818 = vmatprep.mubr.f32.mxu0 0.0
    %1819 = vmatmul.mubr.f32.gmra.mrb[0].mxu0 %v876
    %v1820 = vpop.f32.mrb[0].mxu0
    %v1821 = vadd.f32 %v830, %v1820
    %v1822 = vpop.f32.mrb[0].mxu0
    %1823 = vmatprep.mubr.f32.mxu0 0.0
    %1824 = vmatmul.mubr.f32.gmra.mrb[0].mxu0 %v879
    %v1825 = vpop.f32.mrb[0].mxu0
    %v1826 = vadd.f32 %v835, %v1825
    %v1827 = vpop.f32.mrb[0].mxu0
    %1828 = vmatprep.mubr.f32.mxu0 0.0
    %1829 = vmatmul.mubr.f32.gmra.mrb[0].mxu0 %v882
    %v1830 = vpop.f32.mrb[0].mxu0
    %v1831 = vadd.f32 %v840, %v1830
    %v1832 = vpop.f32.mrb[0].mxu0
    %1833 = vmatprep.mubr.f32.mxu0 0.0
    %1834 = vmatmul.mubr.f32.gmra.mrb[0].mxu0 %v885
    %v1835 = vpop.f32.mrb[0].mxu0
    %v1836 = vadd.f32 %v845, %v1835
    %v1837 = vpop.f32.mrb[0].mxu0
    %1838 = vmatprep.mubr.f32.mxu0 0.0
    %1839 = vmatmul.mubr.f32.gmra.mrb[0].mxu0 %v888
    %v1840 = vpop.f32.mrb[0].mxu0
    %v1841 = vadd.f32 %v850, %v1840
    %v1842 = vpop.f32.mrb[0].mxu0
    %1843 = vmatprep.mubr.f32.mxu0 0.0
    %1844 = vmatmul.mubr.f32.gmra.mrb[0].mxu0 %v891
    %v1845 = vpop.f32.mrb[0].mxu0
    %v1846 = vadd.f32 %v855, %v1845
    %v1847 = vpop.f32.mrb[0].mxu0
    %1848 = vmatprep.mubr.f32.mxu0 0.0
    %1849 = vmatmul.mubr.f32.gmra.mrb[0].mxu0 %v894
    %v1850 = vpop.f32.mrb[0].mxu0
    %v1851 = vadd.f32 %v860, %v1850
    %v1852 = vpop.f32.mrb[0].mxu0
    %1853 = vmatprep.mubr.f32.mxu0 0.0
    %1854 = vmatmul.mubr.f32.gmra.mrb[0].mxu0 %v897
    %v1855 = vpop.f32.mrb[0].mxu0
    %v1856 = vadd.f32 %v865, %v1855
    %v1857 = vpop.f32.mrb[0].mxu0
    %1858 = vmatprep.mubr.f32.mxu0 0.0
    %1859 = vmatmul.mubr.f32.gmra.mrb[0].mxu0 %v900
    %v1860 = vpop.f32.mrb[0].mxu0
    %v1861 = vadd.f32 %v870, %v1860
    %v1862 = vpop.f32.mrb[0].mxu0
    %1863 = vdwg.mxu0
    %v1864 = vtanh.pop %v1816
    %v1865 = vtanh.pop %v1821
    %v1866 = vtanh.pop %v1826
    %v1867 = vtanh.pop %v1831
    %v1868 = vtanh.pop %v1836
    %v1869 = vtanh.pop %v1841
    %v1870 = vtanh.pop %v1846
    %v1871 = vtanh.pop %v1851
    %v1872 = vtanh.pop %v1856
    %v1873 = vtanh.pop %v1861
    %s1874 = scalar_lea.vmem %s0, 16
    %v1875 = vld [vmem:[%s1874] sm:$0x1f]
    %v1876 = vsub.f32 %v1875, %v1028
    %v1877 = vlaneseq
    %v1878 = vshrl.u32 %v1877, 7
    %v1879 = vsub.s32 0, %v1878
    %v1880 = vrot.slane %v1876, %v1879
    %v1881 = vmul.f32 %v1864, %v1880
    %v1882 = vmul.f32 %v1865, %v1880
    %v1883 = vlaneseq
    %v1884 = vshrl.u32 %v1883, 7
    %v1885 = vsub.s32 1, %v1884
    %v1886 = vrot.slane %v1876, %v1885
    %v1887 = vmul.f32 %v1866, %v1886
    %v1888 = vmul.f32 %v1867, %v1886
    %v1889 = vadd.f32 %v1881, %v1887
    %v1890 = vadd.f32 %v1882, %v1888
    %v1891 = vlaneseq
    %v1892 = vshrl.u32 %v1891, 7
    %v1893 = vsub.s32 2, %v1892
    %v1894 = vrot.slane %v1876, %v1893
    %v1895 = vmul.f32 %v1868, %v1894
    %v1896 = vmul.f32 %v1869, %v1894
    %v1897 = vadd.f32 %v1889, %v1895
    %v1898 = vadd.f32 %v1890, %v1896
    %v1899 = vlaneseq
    %v1900 = vshrl.u32 %v1899, 7
    %v1901 = vsub.s32 3, %v1900
    %v1902 = vrot.slane %v1876, %v1901
    %v1903 = vmul.f32 %v1870, %v1902
    %v1904 = vmul.f32 %v1871, %v1902
    %v1905 = vadd.f32 %v1897, %v1903
    %v1906 = vadd.f32 %v1898, %v1904
    %v1907 = vlaneseq
    %v1908 = vshrl.u32 %v1907, 7
    %v1909 = vsub.s32 4, %v1908
    %v1910 = vrot.slane %v1876, %v1909
    %v1911 = vmul.f32 %v1872, %v1910
    %v1912 = vmul.f32 %v1873, %v1910
    %v1913 = vadd.f32 %v1905, %v1911
    %v1914 = vadd.f32 %v1906, %v1912
    %v1915 = vadd.f32 %v1473, %v1913
    %v1916 = vadd.f32 %v1474, %v1914
    %v1917 = vmul.f32 %v1915, 0.5
    %v1918 = vmul.f32 %v1916, 0.5
    %v1919 = vadd.f32 %v1479, %v1917
    %v1920 = vadd.f32 %v1480, %v1918
    %v1921 = vmul.f32 %v1919, 2.0
    %v1922 = vmul.f32 %v1920, 2.0
    %v1923 = vsub.f32 %v1921, %v1485
    %v1924 = vsub.f32 %v1922, %v1486
    %v1925 = vadd.f32 %v1923, %v1913
    %v1926 = vadd.f32 %v1924, %v1914
    %v1927 = vmul.f32 %v76, 3.0
    %v1928 = vmul.f32 %v77, 3.0
    %v1929 = vmul.f32 %v78, 3.0
    %v1930 = vmul.f32 %v79, 3.0
    %v1931 = vadd.f32 %v1927, %v84
    %v1932 = vadd.f32 %v1928, %v85
    %v1933 = vadd.f32 %v1929, %v86
    %v1934 = vadd.f32 %v1930, %v87
    %1936 = vset.pattern.permute.xlu0 0
    %1937 = vperm.xlu0 %1936, %v1931
    %v1938 = vpop.permute.xlu0 %1937
    %1941 = vset.pattern.permute.xlu0 0
    %1942 = vperm.xlu0 %1941, %v1932
    %v1943 = vpop.permute.xlu0 %1942
    %1946 = vset.pattern.permute.xlu0 0
    %1947 = vperm.xlu0 %1946, %v1933
    %v1948 = vpop.permute.xlu0 %1947
    %1951 = vset.pattern.permute.xlu0 0
    %1952 = vperm.xlu0 %1951, %v1934
    %v1953 = vpop.permute.xlu0 %1952
    %1955 = vmatprep.subr.mxu0 0.0
    %1956 = vmatpush1.msra.mxu0 %v1925
    %1957 = vmatprep.subr.mxu0 0.0
    %1958 = vmatpush1.msra.mxu0 %v1926
    %1959 = vmatprep.subr.mxu0 0.0
    %1960 = vmatpush1.msra.mxu0 0.0
    %1961 = vmatprep.subr.mxu0 0.0
    %1962 = vmatpush1.msra.mxu0 0.0
    %1963 = vmatprep.subr.mxu0 0.0
    %1964 = vmatpush1.msra.mxu0 0.0
    %1965 = vmatprep.subr.mxu0 0.0
    %1966 = vmatpush1.msra.mxu0 0.0
    %1967 = vmatprep.subr.mxu0 0.0
    %1968 = vmatpush1.msra.mxu0 0.0
    %1969 = vmatprep.subr.mxu0 0.0
    %1970 = vmatpush1.msra.mxu0 0.0
    %1971 = vmatprep.subr.mxu0 0.0
    %1972 = vmatpush1.msra.mxu0 0.0
    %1973 = vmatprep.subr.mxu0 0.0
    %1974 = vmatpush1.msra.mxu0 0.0
    %1975 = vmatprep.subr.mxu0 0.0
    %1976 = vmatpush1.msra.mxu0 0.0
    %1977 = vmatprep.subr.mxu0 0.0
    %1978 = vmatpush1.msra.mxu0 0.0
    %1979 = vmatprep.subr.mxu0 0.0
    %1980 = vmatpush1.msra.mxu0 0.0
    %1981 = vmatprep.subr.mxu0 0.0
    %1982 = vmatpush1.msra.mxu0 0.0
    %1983 = vmatprep.subr.mxu0 0.0
    %1984 = vmatpush1.msra.mxu0 0.0
    %1985 = vmatprep.subr.mxu0 0.0
    %1986 = vmatpush1.msra.mxu0 0.0
    %1987 = vmatprep.subr.mxu0 0.0
    %1988 = vmatpush1.msra.mxu0 0.0
    %1989 = vmatprep.subr.mxu0 0.0
    %1990 = vmatpush1.msra.mxu0 0.0
    %1991 = vmatprep.subr.mxu0 0.0
    %1992 = vmatpush1.msra.mxu0 0.0
    %1993 = vmatprep.subr.mxu0 0.0
    %1994 = vmatpush1.msra.mxu0 0.0
    %1995 = vmatprep.subr.mxu0 0.0
    %1996 = vmatpush1.msra.mxu0 0.0
    %1997 = vmatprep.subr.mxu0 0.0
    %1998 = vmatpush1.msra.mxu0 0.0
    %1999 = vmatprep.subr.mxu0 0.0
    %2000 = vmatpush1.msra.mxu0 0.0
    %2001 = vmatprep.subr.mxu0 0.0
    %2002 = vmatpush1.msra.mxu0 0.0
    %2003 = vmatprep.subr.mxu0 0.0
    %2004 = vmatpush1.msra.mxu0 0.0
    %2005 = vmatprep.subr.mxu0 0.0
    %2006 = vmatpush1.msra.mxu0 0.0
    %2007 = vmatprep.subr.mxu0 0.0
    %2008 = vmatpush1.msra.mxu0 0.0
    %2009 = vmatprep.subr.mxu0 0.0
    %2010 = vmatpush1.msra.mxu0 0.0
    %2011 = vmatprep.subr.mxu0 0.0
    %2012 = vmatpush1.msra.mxu0 0.0
    %2013 = vmatprep.subr.mxu0 0.0
    %2014 = vmatpush1.msra.mxu0 0.0
    %2015 = vmatprep.subr.mxu0 0.0
    %2016 = vmatpush1.msra.mxu0 0.0
    %2017 = vmatprep.subr.mxu0 0.0
    %2018 = vmatpush1.msra.mxu0 0.0
    %2019 = vmatprep.mubr.f32.mxu0 0.0
    %2020 = vmatmul.mubr.f32.gmra.mrb[0].mxu0 %v545
    %v2021 = vpop.f32.mrb[0].mxu0
    %v2022 = vadd.f32 %v1938, %v2021
    %v2023 = vpop.f32.mrb[0].mxu0
    %2024 = vmatprep.mubr.f32.mxu0 0.0
    %2025 = vmatmul.mubr.f32.gmra.mrb[0].mxu0 %v548
    %v2026 = vpop.f32.mrb[0].mxu0
    %v2027 = vadd.f32 %v1943, %v2026
    %v2028 = vpop.f32.mrb[0].mxu0
    %2029 = vmatprep.mubr.f32.mxu0 0.0
    %2030 = vmatmul.mubr.f32.gmra.mrb[0].mxu0 %v551
    %v2031 = vpop.f32.mrb[0].mxu0
    %v2032 = vadd.f32 %v1948, %v2031
    %v2033 = vpop.f32.mrb[0].mxu0
    %2034 = vmatprep.mubr.f32.mxu0 0.0
    %2035 = vmatmul.mubr.f32.gmra.mrb[0].mxu0 %v554
    %v2036 = vpop.f32.mrb[0].mxu0
    %v2037 = vadd.f32 %v1953, %v2036
    %v2038 = vpop.f32.mrb[0].mxu0
    %2039 = vdwg.mxu0
    %v2040 = vmul.f32 %v2022, 0.909
    %v2041 = vmul.f32 %v2027, 0.909
    %v2042 = vmul.f32 %v2032, 0.909
    %v2043 = vmul.f32 %v2037, 0.909
    %v2044 = vxor.u32 %v2022, 2147483648
    %v2045 = vxor.u32 %v2027, 2147483648
    %v2046 = vxor.u32 %v2032, 2147483648
    %v2047 = vxor.u32 %v2037, 2147483648
    %v2048 = vmul.f32 %v2044, 1.442695
    %v2049 = vpow.pop %v2048
    %v2050 = vmul.f32 %v2045, 1.442695
    %v2051 = vpow.pop %v2050
    %v2052 = vmul.f32 %v2046, 1.442695
    %v2053 = vpow.pop %v2052
    %v2054 = vmul.f32 %v2047, 1.442695
    %v2055 = vpow.pop %v2054
    %v2056 = vadd.f32 %v2049, 1.0
    %v2057 = vadd.f32 %v2051, 1.0
    %v2058 = vadd.f32 %v2053, 1.0
    %v2059 = vadd.f32 %v2055, 1.0
    %v2060 = vrcp.pop %v2056
    %v2061 = vmul.f32 1.0, %v2060
    %v2062 = vrcp.pop %v2057
    %v2063 = vmul.f32 1.0, %v2062
    %v2064 = vrcp.pop %v2058
    %v2065 = vmul.f32 1.0, %v2064
    %v2066 = vrcp.pop %v2059
    %v2067 = vmul.f32 1.0, %v2066
    %v2068 = vmul.f32 %v2040, %v2061
    %v2069 = vmul.f32 %v2041, %v2063
    %v2070 = vmul.f32 %v2042, %v2065
    %v2071 = vmul.f32 %v2043, %v2067
    %2072 = vmatprep.subr.mxu0 0.0
    %2073 = vmatpush1.msra.mxu0 %v2068
    %2074 = vmatprep.subr.mxu0 0.0
    %2075 = vmatpush1.msra.mxu0 %v2069
    %2076 = vmatprep.subr.mxu0 0.0
    %2077 = vmatpush1.msra.mxu0 %v2070
    %2078 = vmatprep.subr.mxu0 0.0
    %2079 = vmatpush1.msra.mxu0 %v2071
    %2080 = vmatprep.subr.mxu0 0.0
    %2081 = vmatpush1.msra.mxu0 0.0
    %2082 = vmatprep.subr.mxu0 0.0
    %2083 = vmatpush1.msra.mxu0 0.0
    %2084 = vmatprep.subr.mxu0 0.0
    %2085 = vmatpush1.msra.mxu0 0.0
    %2086 = vmatprep.subr.mxu0 0.0
    %2087 = vmatpush1.msra.mxu0 0.0
    %2088 = vmatprep.subr.mxu0 0.0
    %2089 = vmatpush1.msra.mxu0 0.0
    %2090 = vmatprep.subr.mxu0 0.0
    %2091 = vmatpush1.msra.mxu0 0.0
    %2092 = vmatprep.subr.mxu0 0.0
    %2093 = vmatpush1.msra.mxu0 0.0
    %2094 = vmatprep.subr.mxu0 0.0
    %2095 = vmatpush1.msra.mxu0 0.0
    %2096 = vmatprep.subr.mxu0 0.0
    %2097 = vmatpush1.msra.mxu0 0.0
    %2098 = vmatprep.subr.mxu0 0.0
    %2099 = vmatpush1.msra.mxu0 0.0
    %2100 = vmatprep.subr.mxu0 0.0
    %2101 = vmatpush1.msra.mxu0 0.0
    %2102 = vmatprep.subr.mxu0 0.0
    %2103 = vmatpush1.msra.mxu0 0.0
    %2104 = vmatprep.subr.mxu0 0.0
    %2105 = vmatpush1.msra.mxu0 0.0
    %2106 = vmatprep.subr.mxu0 0.0
    %2107 = vmatpush1.msra.mxu0 0.0
    %2108 = vmatprep.subr.mxu0 0.0
    %2109 = vmatpush1.msra.mxu0 0.0
    %2110 = vmatprep.subr.mxu0 0.0
    %2111 = vmatpush1.msra.mxu0 0.0
    %2112 = vmatprep.subr.mxu0 0.0
    %2113 = vmatpush1.msra.mxu0 0.0
    %2114 = vmatprep.subr.mxu0 0.0
    %2115 = vmatpush1.msra.mxu0 0.0
    %2116 = vmatprep.subr.mxu0 0.0
    %2117 = vmatpush1.msra.mxu0 0.0
    %2118 = vmatprep.subr.mxu0 0.0
    %2119 = vmatpush1.msra.mxu0 0.0
    %2120 = vmatprep.subr.mxu0 0.0
    %2121 = vmatpush1.msra.mxu0 0.0
    %2122 = vmatprep.subr.mxu0 0.0
    %2123 = vmatpush1.msra.mxu0 0.0
    %2124 = vmatprep.subr.mxu0 0.0
    %2125 = vmatpush1.msra.mxu0 0.0
    %2126 = vmatprep.subr.mxu0 0.0
    %2127 = vmatpush1.msra.mxu0 0.0
    %2128 = vmatprep.subr.mxu0 0.0
    %2129 = vmatpush1.msra.mxu0 0.0
    %2130 = vmatprep.subr.mxu0 0.0
    %2131 = vmatpush1.msra.mxu0 0.0
    %2132 = vmatprep.subr.mxu0 0.0
    %2133 = vmatpush1.msra.mxu0 0.0
    %2134 = vmatprep.subr.mxu0 0.0
    %2135 = vmatpush1.msra.mxu0 0.0
    %2136 = vmatprep.mubr.f32.mxu0 0.0
    %2137 = vmatmul.mubr.f32.gmra.mrb[0].mxu0 %v694
    %v2138 = vpop.f32.mrb[0].mxu0
    %v2139 = vadd.f32 %v676, %v2138
    %v2140 = vpop.f32.mrb[0].mxu0
    %2141 = vmatprep.mubr.f32.mxu0 0.0
    %2142 = vmatmul.mubr.f32.gmra.mrb[0].mxu0 %v697
    %v2143 = vpop.f32.mrb[0].mxu0
    %v2144 = vadd.f32 %v681, %v2143
    %v2145 = vpop.f32.mrb[0].mxu0
    %2146 = vmatprep.mubr.f32.mxu0 0.0
    %2147 = vmatmul.mubr.f32.gmra.mrb[0].mxu0 %v700
    %v2148 = vpop.f32.mrb[0].mxu0
    %v2149 = vadd.f32 %v686, %v2148
    %v2150 = vpop.f32.mrb[0].mxu0
    %2151 = vmatprep.mubr.f32.mxu0 0.0
    %2152 = vmatmul.mubr.f32.gmra.mrb[0].mxu0 %v703
    %v2153 = vpop.f32.mrb[0].mxu0
    %v2154 = vadd.f32 %v691, %v2153
    %v2155 = vpop.f32.mrb[0].mxu0
    %2156 = vdwg.mxu0
    %v2157 = vmul.f32 %v2139, 0.909
    %v2158 = vmul.f32 %v2144, 0.909
    %v2159 = vmul.f32 %v2149, 0.909
    %v2160 = vmul.f32 %v2154, 0.909
    %v2161 = vxor.u32 %v2139, 2147483648
    %v2162 = vxor.u32 %v2144, 2147483648
    %v2163 = vxor.u32 %v2149, 2147483648
    %v2164 = vxor.u32 %v2154, 2147483648
    %v2165 = vmul.f32 %v2161, 1.442695
    %v2166 = vpow.pop %v2165
    %v2167 = vmul.f32 %v2162, 1.442695
    %v2168 = vpow.pop %v2167
    %v2169 = vmul.f32 %v2163, 1.442695
    %v2170 = vpow.pop %v2169
    %v2171 = vmul.f32 %v2164, 1.442695
    %v2172 = vpow.pop %v2171
    %v2173 = vadd.f32 %v2166, 1.0
    %v2174 = vadd.f32 %v2168, 1.0
    %v2175 = vadd.f32 %v2170, 1.0
    %v2176 = vadd.f32 %v2172, 1.0
    %v2177 = vrcp.pop %v2173
    %v2178 = vmul.f32 1.0, %v2177
    %v2179 = vrcp.pop %v2174
    %v2180 = vmul.f32 1.0, %v2179
    %v2181 = vrcp.pop %v2175
    %v2182 = vmul.f32 1.0, %v2181
    %v2183 = vrcp.pop %v2176
    %v2184 = vmul.f32 1.0, %v2183
    %v2185 = vmul.f32 %v2157, %v2178
    %v2186 = vmul.f32 %v2158, %v2180
    %v2187 = vmul.f32 %v2159, %v2182
    %v2188 = vmul.f32 %v2160, %v2184
    %2189 = vmatprep.subr.mxu0 0.0
    %2190 = vmatpush1.msra.mxu0 %v2185
    %2191 = vmatprep.subr.mxu0 0.0
    %2192 = vmatpush1.msra.mxu0 %v2186
    %2193 = vmatprep.subr.mxu0 0.0
    %2194 = vmatpush1.msra.mxu0 %v2187
    %2195 = vmatprep.subr.mxu0 0.0
    %2196 = vmatpush1.msra.mxu0 %v2188
    %2197 = vmatprep.subr.mxu0 0.0
    %2198 = vmatpush1.msra.mxu0 0.0
    %2199 = vmatprep.subr.mxu0 0.0
    %2200 = vmatpush1.msra.mxu0 0.0
    %2201 = vmatprep.subr.mxu0 0.0
    %2202 = vmatpush1.msra.mxu0 0.0
    %2203 = vmatprep.subr.mxu0 0.0
    %2204 = vmatpush1.msra.mxu0 0.0
    %2205 = vmatprep.subr.mxu0 0.0
    %2206 = vmatpush1.msra.mxu0 0.0
    %2207 = vmatprep.subr.mxu0 0.0
    %2208 = vmatpush1.msra.mxu0 0.0
    %2209 = vmatprep.subr.mxu0 0.0
    %2210 = vmatpush1.msra.mxu0 0.0
    %2211 = vmatprep.subr.mxu0 0.0
    %2212 = vmatpush1.msra.mxu0 0.0
    %2213 = vmatprep.subr.mxu0 0.0
    %2214 = vmatpush1.msra.mxu0 0.0
    %2215 = vmatprep.subr.mxu0 0.0
    %2216 = vmatpush1.msra.mxu0 0.0
    %2217 = vmatprep.subr.mxu0 0.0
    %2218 = vmatpush1.msra.mxu0 0.0
    %2219 = vmatprep.subr.mxu0 0.0
    %2220 = vmatpush1.msra.mxu0 0.0
    %2221 = vmatprep.subr.mxu0 0.0
    %2222 = vmatpush1.msra.mxu0 0.0
    %2223 = vmatprep.subr.mxu0 0.0
    %2224 = vmatpush1.msra.mxu0 0.0
    %2225 = vmatprep.subr.mxu0 0.0
    %2226 = vmatpush1.msra.mxu0 0.0
    %2227 = vmatprep.subr.mxu0 0.0
    %2228 = vmatpush1.msra.mxu0 0.0
    %2229 = vmatprep.subr.mxu0 0.0
    %2230 = vmatpush1.msra.mxu0 0.0
    %2231 = vmatprep.subr.mxu0 0.0
    %2232 = vmatpush1.msra.mxu0 0.0
    %2233 = vmatprep.subr.mxu0 0.0
    %2234 = vmatpush1.msra.mxu0 0.0
    %2235 = vmatprep.subr.mxu0 0.0
    %2236 = vmatpush1.msra.mxu0 0.0
    %2237 = vmatprep.subr.mxu0 0.0
    %2238 = vmatpush1.msra.mxu0 0.0
    %2239 = vmatprep.subr.mxu0 0.0
    %2240 = vmatpush1.msra.mxu0 0.0
    %2241 = vmatprep.subr.mxu0 0.0
    %2242 = vmatpush1.msra.mxu0 0.0
    %2243 = vmatprep.subr.mxu0 0.0
    %2244 = vmatpush1.msra.mxu0 0.0
    %2245 = vmatprep.subr.mxu0 0.0
    %2246 = vmatpush1.msra.mxu0 0.0
    %2247 = vmatprep.subr.mxu0 0.0
    %2248 = vmatpush1.msra.mxu0 0.0
    %2249 = vmatprep.subr.mxu0 0.0
    %2250 = vmatpush1.msra.mxu0 0.0
    %2251 = vmatprep.subr.mxu0 0.0
    %2252 = vmatpush1.msra.mxu0 0.0
    %2253 = vmatprep.mubr.f32.mxu0 0.0
    %2254 = vmatmul.mubr.f32.gmra.mrb[0].mxu0 %v873
    %v2255 = vpop.f32.mrb[0].mxu0
    %v2256 = vadd.f32 %v825, %v2255
    %v2257 = vpop.f32.mrb[0].mxu0
    %2258 = vmatprep.mubr.f32.mxu0 0.0
    %2259 = vmatmul.mubr.f32.gmra.mrb[0].mxu0 %v876
    %v2260 = vpop.f32.mrb[0].mxu0
    %v2261 = vadd.f32 %v830, %v2260
    %v2262 = vpop.f32.mrb[0].mxu0
    %2263 = vmatprep.mubr.f32.mxu0 0.0
    %2264 = vmatmul.mubr.f32.gmra.mrb[0].mxu0 %v879
    %v2265 = vpop.f32.mrb[0].mxu0
    %v2266 = vadd.f32 %v835, %v2265
    %v2267 = vpop.f32.mrb[0].mxu0
    %2268 = vmatprep.mubr.f32.mxu0 0.0
    %2269 = vmatmul.mubr.f32.gmra.mrb[0].mxu0 %v882
    %v2270 = vpop.f32.mrb[0].mxu0
    %v2271 = vadd.f32 %v840, %v2270
    %v2272 = vpop.f32.mrb[0].mxu0
    %2273 = vmatprep.mubr.f32.mxu0 0.0
    %2274 = vmatmul.mubr.f32.gmra.mrb[0].mxu0 %v885
    %v2275 = vpop.f32.mrb[0].mxu0
    %v2276 = vadd.f32 %v845, %v2275
    %v2277 = vpop.f32.mrb[0].mxu0
    %2278 = vmatprep.mubr.f32.mxu0 0.0
    %2279 = vmatmul.mubr.f32.gmra.mrb[0].mxu0 %v888
    %v2280 = vpop.f32.mrb[0].mxu0
    %v2281 = vadd.f32 %v850, %v2280
    %v2282 = vpop.f32.mrb[0].mxu0
    %2283 = vmatprep.mubr.f32.mxu0 0.0
    %2284 = vmatmul.mubr.f32.gmra.mrb[0].mxu0 %v891
    %v2285 = vpop.f32.mrb[0].mxu0
    %v2286 = vadd.f32 %v855, %v2285
    %v2287 = vpop.f32.mrb[0].mxu0
    %2288 = vmatprep.mubr.f32.mxu0 0.0
    %2289 = vmatmul.mubr.f32.gmra.mrb[0].mxu0 %v894
    %v2290 = vpop.f32.mrb[0].mxu0
    %v2291 = vadd.f32 %v860, %v2290
    %v2292 = vpop.f32.mrb[0].mxu0
    %2293 = vmatprep.mubr.f32.mxu0 0.0
    %2294 = vmatmul.mubr.f32.gmra.mrb[0].mxu0 %v897
    %v2295 = vpop.f32.mrb[0].mxu0
    %v2296 = vadd.f32 %v865, %v2295
    %v2297 = vpop.f32.mrb[0].mxu0
    %2298 = vmatprep.mubr.f32.mxu0 0.0
    %2299 = vmatmul.mubr.f32.gmra.mrb[0].mxu0 %v900
    %v2300 = vpop.f32.mrb[0].mxu0
    %v2301 = vadd.f32 %v870, %v2300
    %v2302 = vpop.f32.mrb[0].mxu0
    %2303 = vdwg.mxu0
    %v2304 = vtanh.pop %v2256
    %v2305 = vtanh.pop %v2261
    %v2306 = vtanh.pop %v2266
    %v2307 = vtanh.pop %v2271
    %v2308 = vtanh.pop %v2276
    %v2309 = vtanh.pop %v2281
    %v2310 = vtanh.pop %v2286
    %v2311 = vtanh.pop %v2291
    %v2312 = vtanh.pop %v2296
    %v2313 = vtanh.pop %v2301
    %s2314 = scalar_lea.vmem %s0, 24
    %v2315 = vld [vmem:[%s2314] sm:$0x1f]
    %v2316 = vsub.f32 %v2315, %v1875
    %v2317 = vlaneseq
    %v2318 = vshrl.u32 %v2317, 7
    %v2319 = vsub.s32 0, %v2318
    %v2320 = vrot.slane %v2316, %v2319
    %v2321 = vmul.f32 %v2304, %v2320
    %v2322 = vmul.f32 %v2305, %v2320
    %v2323 = vlaneseq
    %v2324 = vshrl.u32 %v2323, 7
    %v2325 = vsub.s32 1, %v2324
    %v2326 = vrot.slane %v2316, %v2325
    %v2327 = vmul.f32 %v2306, %v2326
    %v2328 = vmul.f32 %v2307, %v2326
    %v2329 = vadd.f32 %v2321, %v2327
    %v2330 = vadd.f32 %v2322, %v2328
    %v2331 = vlaneseq
    %v2332 = vshrl.u32 %v2331, 7
    %v2333 = vsub.s32 2, %v2332
    %v2334 = vrot.slane %v2316, %v2333
    %v2335 = vmul.f32 %v2308, %v2334
    %v2336 = vmul.f32 %v2309, %v2334
    %v2337 = vadd.f32 %v2329, %v2335
    %v2338 = vadd.f32 %v2330, %v2336
    %v2339 = vlaneseq
    %v2340 = vshrl.u32 %v2339, 7
    %v2341 = vsub.s32 3, %v2340
    %v2342 = vrot.slane %v2316, %v2341
    %v2343 = vmul.f32 %v2310, %v2342
    %v2344 = vmul.f32 %v2311, %v2342
    %v2345 = vadd.f32 %v2337, %v2343
    %v2346 = vadd.f32 %v2338, %v2344
    %v2347 = vlaneseq
    %v2348 = vshrl.u32 %v2347, 7
    %v2349 = vsub.s32 4, %v2348
    %v2350 = vrot.slane %v2316, %v2349
    %v2351 = vmul.f32 %v2312, %v2350
    %v2352 = vmul.f32 %v2313, %v2350
    %v2353 = vadd.f32 %v2345, %v2351
    %v2354 = vadd.f32 %v2346, %v2352
    %v2355 = vadd.f32 %v1913, %v2353
    %v2356 = vadd.f32 %v1914, %v2354
    %v2357 = vmul.f32 %v2355, 0.5
    %v2358 = vmul.f32 %v2356, 0.5
    %v2359 = vadd.f32 %v1919, %v2357
    %v2360 = vadd.f32 %v1920, %v2358
    %v2361 = vmul.f32 %v2359, 2.0
    %v2362 = vmul.f32 %v2360, 2.0
    %v2363 = vsub.f32 %v2361, %v1925
    %v2364 = vsub.f32 %v2362, %v1926
    %v2365 = vadd.f32 %v2363, %v2353
    %v2366 = vadd.f32 %v2364, %v2354
    %v2367 = vmul.f32 %v76, 4.0
    %v2368 = vmul.f32 %v77, 4.0
    %v2369 = vmul.f32 %v78, 4.0
    %v2370 = vmul.f32 %v79, 4.0
    %v2371 = vadd.f32 %v2367, %v84
    %v2372 = vadd.f32 %v2368, %v85
    %v2373 = vadd.f32 %v2369, %v86
    %v2374 = vadd.f32 %v2370, %v87
    %2376 = vset.pattern.permute.xlu0 0
    %2377 = vperm.xlu0 %2376, %v2371
    %v2378 = vpop.permute.xlu0 %2377
    %2381 = vset.pattern.permute.xlu0 0
    %2382 = vperm.xlu0 %2381, %v2372
    %v2383 = vpop.permute.xlu0 %2382
    %2386 = vset.pattern.permute.xlu0 0
    %2387 = vperm.xlu0 %2386, %v2373
    %v2388 = vpop.permute.xlu0 %2387
    %2391 = vset.pattern.permute.xlu0 0
    %2392 = vperm.xlu0 %2391, %v2374
    %v2393 = vpop.permute.xlu0 %2392
    %2395 = vmatprep.subr.mxu0 0.0
    %2396 = vmatpush1.msra.mxu0 %v2365
    %2397 = vmatprep.subr.mxu0 0.0
    %2398 = vmatpush1.msra.mxu0 %v2366
    %2399 = vmatprep.subr.mxu0 0.0
    %2400 = vmatpush1.msra.mxu0 0.0
    %2401 = vmatprep.subr.mxu0 0.0
    %2402 = vmatpush1.msra.mxu0 0.0
    %2403 = vmatprep.subr.mxu0 0.0
    %2404 = vmatpush1.msra.mxu0 0.0
    %2405 = vmatprep.subr.mxu0 0.0
    %2406 = vmatpush1.msra.mxu0 0.0
    %2407 = vmatprep.subr.mxu0 0.0
    %2408 = vmatpush1.msra.mxu0 0.0
    %2409 = vmatprep.subr.mxu0 0.0
    %2410 = vmatpush1.msra.mxu0 0.0
    %2411 = vmatprep.subr.mxu0 0.0
    %2412 = vmatpush1.msra.mxu0 0.0
    %2413 = vmatprep.subr.mxu0 0.0
    %2414 = vmatpush1.msra.mxu0 0.0
    %2415 = vmatprep.subr.mxu0 0.0
    %2416 = vmatpush1.msra.mxu0 0.0
    %2417 = vmatprep.subr.mxu0 0.0
    %2418 = vmatpush1.msra.mxu0 0.0
    %2419 = vmatprep.subr.mxu0 0.0
    %2420 = vmatpush1.msra.mxu0 0.0
    %2421 = vmatprep.subr.mxu0 0.0
    %2422 = vmatpush1.msra.mxu0 0.0
    %2423 = vmatprep.subr.mxu0 0.0
    %2424 = vmatpush1.msra.mxu0 0.0
    %2425 = vmatprep.subr.mxu0 0.0
    %2426 = vmatpush1.msra.mxu0 0.0
    %2427 = vmatprep.subr.mxu0 0.0
    %2428 = vmatpush1.msra.mxu0 0.0
    %2429 = vmatprep.subr.mxu0 0.0
    %2430 = vmatpush1.msra.mxu0 0.0
    %2431 = vmatprep.subr.mxu0 0.0
    %2432 = vmatpush1.msra.mxu0 0.0
    %2433 = vmatprep.subr.mxu0 0.0
    %2434 = vmatpush1.msra.mxu0 0.0
    %2435 = vmatprep.subr.mxu0 0.0
    %2436 = vmatpush1.msra.mxu0 0.0
    %2437 = vmatprep.subr.mxu0 0.0
    %2438 = vmatpush1.msra.mxu0 0.0
    %2439 = vmatprep.subr.mxu0 0.0
    %2440 = vmatpush1.msra.mxu0 0.0
    %2441 = vmatprep.subr.mxu0 0.0
    %2442 = vmatpush1.msra.mxu0 0.0
    %2443 = vmatprep.subr.mxu0 0.0
    %2444 = vmatpush1.msra.mxu0 0.0
    %2445 = vmatprep.subr.mxu0 0.0
    %2446 = vmatpush1.msra.mxu0 0.0
    %2447 = vmatprep.subr.mxu0 0.0
    %2448 = vmatpush1.msra.mxu0 0.0
    %2449 = vmatprep.subr.mxu0 0.0
    %2450 = vmatpush1.msra.mxu0 0.0
    %2451 = vmatprep.subr.mxu0 0.0
    %2452 = vmatpush1.msra.mxu0 0.0
    %2453 = vmatprep.subr.mxu0 0.0
    %2454 = vmatpush1.msra.mxu0 0.0
    %2455 = vmatprep.subr.mxu0 0.0
    %2456 = vmatpush1.msra.mxu0 0.0
    %2457 = vmatprep.subr.mxu0 0.0
    %2458 = vmatpush1.msra.mxu0 0.0
    %2459 = vmatprep.mubr.f32.mxu0 0.0
    %2460 = vmatmul.mubr.f32.gmra.mrb[0].mxu0 %v545
    %v2461 = vpop.f32.mrb[0].mxu0
    %v2462 = vadd.f32 %v2378, %v2461
    %v2463 = vpop.f32.mrb[0].mxu0
    %2464 = vmatprep.mubr.f32.mxu0 0.0
    %2465 = vmatmul.mubr.f32.gmra.mrb[0].mxu0 %v548
    %v2466 = vpop.f32.mrb[0].mxu0
    %v2467 = vadd.f32 %v2383, %v2466
    %v2468 = vpop.f32.mrb[0].mxu0
    %2469 = vmatprep.mubr.f32.mxu0 0.0
    %2470 = vmatmul.mubr.f32.gmra.mrb[0].mxu0 %v551
    %v2471 = vpop.f32.mrb[0].mxu0
    %v2472 = vadd.f32 %v2388, %v2471
    %v2473 = vpop.f32.mrb[0].mxu0
    %2474 = vmatprep.mubr.f32.mxu0 0.0
    %2475 = vmatmul.mubr.f32.gmra.mrb[0].mxu0 %v554
    %v2476 = vpop.f32.mrb[0].mxu0
    %v2477 = vadd.f32 %v2393, %v2476
    %v2478 = vpop.f32.mrb[0].mxu0
    %2479 = vdwg.mxu0
    %v2480 = vmul.f32 %v2462, 0.909
    %v2481 = vmul.f32 %v2467, 0.909
    %v2482 = vmul.f32 %v2472, 0.909
    %v2483 = vmul.f32 %v2477, 0.909
    %v2484 = vxor.u32 %v2462, 2147483648
    %v2485 = vxor.u32 %v2467, 2147483648
    %v2486 = vxor.u32 %v2472, 2147483648
    %v2487 = vxor.u32 %v2477, 2147483648
    %v2488 = vmul.f32 %v2484, 1.442695
    %v2489 = vpow.pop %v2488
    %v2490 = vmul.f32 %v2485, 1.442695
    %v2491 = vpow.pop %v2490
    %v2492 = vmul.f32 %v2486, 1.442695
    %v2493 = vpow.pop %v2492
    %v2494 = vmul.f32 %v2487, 1.442695
    %v2495 = vpow.pop %v2494
    %v2496 = vadd.f32 %v2489, 1.0
    %v2497 = vadd.f32 %v2491, 1.0
    %v2498 = vadd.f32 %v2493, 1.0
    %v2499 = vadd.f32 %v2495, 1.0
    %v2500 = vrcp.pop %v2496
    %v2501 = vmul.f32 1.0, %v2500
    %v2502 = vrcp.pop %v2497
    %v2503 = vmul.f32 1.0, %v2502
    %v2504 = vrcp.pop %v2498
    %v2505 = vmul.f32 1.0, %v2504
    %v2506 = vrcp.pop %v2499
    %v2507 = vmul.f32 1.0, %v2506
    %v2508 = vmul.f32 %v2480, %v2501
    %v2509 = vmul.f32 %v2481, %v2503
    %v2510 = vmul.f32 %v2482, %v2505
    %v2511 = vmul.f32 %v2483, %v2507
    %2512 = vmatprep.subr.mxu0 0.0
    %2513 = vmatpush1.msra.mxu0 %v2508
    %2514 = vmatprep.subr.mxu0 0.0
    %2515 = vmatpush1.msra.mxu0 %v2509
    %2516 = vmatprep.subr.mxu0 0.0
    %2517 = vmatpush1.msra.mxu0 %v2510
    %2518 = vmatprep.subr.mxu0 0.0
    %2519 = vmatpush1.msra.mxu0 %v2511
    %2520 = vmatprep.subr.mxu0 0.0
    %2521 = vmatpush1.msra.mxu0 0.0
    %2522 = vmatprep.subr.mxu0 0.0
    %2523 = vmatpush1.msra.mxu0 0.0
    %2524 = vmatprep.subr.mxu0 0.0
    %2525 = vmatpush1.msra.mxu0 0.0
    %2526 = vmatprep.subr.mxu0 0.0
    %2527 = vmatpush1.msra.mxu0 0.0
    %2528 = vmatprep.subr.mxu0 0.0
    %2529 = vmatpush1.msra.mxu0 0.0
    %2530 = vmatprep.subr.mxu0 0.0
    %2531 = vmatpush1.msra.mxu0 0.0
    %2532 = vmatprep.subr.mxu0 0.0
    %2533 = vmatpush1.msra.mxu0 0.0
    %2534 = vmatprep.subr.mxu0 0.0
    %2535 = vmatpush1.msra.mxu0 0.0
    %2536 = vmatprep.subr.mxu0 0.0
    %2537 = vmatpush1.msra.mxu0 0.0
    %2538 = vmatprep.subr.mxu0 0.0
    %2539 = vmatpush1.msra.mxu0 0.0
    %2540 = vmatprep.subr.mxu0 0.0
    %2541 = vmatpush1.msra.mxu0 0.0
    %2542 = vmatprep.subr.mxu0 0.0
    %2543 = vmatpush1.msra.mxu0 0.0
    %2544 = vmatprep.subr.mxu0 0.0
    %2545 = vmatpush1.msra.mxu0 0.0
    %2546 = vmatprep.subr.mxu0 0.0
    %2547 = vmatpush1.msra.mxu0 0.0
    %2548 = vmatprep.subr.mxu0 0.0
    %2549 = vmatpush1.msra.mxu0 0.0
    %2550 = vmatprep.subr.mxu0 0.0
    %2551 = vmatpush1.msra.mxu0 0.0
    %2552 = vmatprep.subr.mxu0 0.0
    %2553 = vmatpush1.msra.mxu0 0.0
    %2554 = vmatprep.subr.mxu0 0.0
    %2555 = vmatpush1.msra.mxu0 0.0
    %2556 = vmatprep.subr.mxu0 0.0
    %2557 = vmatpush1.msra.mxu0 0.0
    %2558 = vmatprep.subr.mxu0 0.0
    %2559 = vmatpush1.msra.mxu0 0.0
    %2560 = vmatprep.subr.mxu0 0.0
    %2561 = vmatpush1.msra.mxu0 0.0
    %2562 = vmatprep.subr.mxu0 0.0
    %2563 = vmatpush1.msra.mxu0 0.0
    %2564 = vmatprep.subr.mxu0 0.0
    %2565 = vmatpush1.msra.mxu0 0.0
    %2566 = vmatprep.subr.mxu0 0.0
    %2567 = vmatpush1.msra.mxu0 0.0
    %2568 = vmatprep.subr.mxu0 0.0
    %2569 = vmatpush1.msra.mxu0 0.0
    %2570 = vmatprep.subr.mxu0 0.0
    %2571 = vmatpush1.msra.mxu0 0.0
    %2572 = vmatprep.subr.mxu0 0.0
    %2573 = vmatpush1.msra.mxu0 0.0
    %2574 = vmatprep.subr.mxu0 0.0
    %2575 = vmatpush1.msra.mxu0 0.0
    %2576 = vmatprep.mubr.f32.mxu0 0.0
    %2577 = vmatmul.mubr.f32.gmra.mrb[0].mxu0 %v694
    %v2578 = vpop.f32.mrb[0].mxu0
    %v2579 = vadd.f32 %v676, %v2578
    %v2580 = vpop.f32.mrb[0].mxu0
    %2581 = vmatprep.mubr.f32.mxu0 0.0
    %2582 = vmatmul.mubr.f32.gmra.mrb[0].mxu0 %v697
    %v2583 = vpop.f32.mrb[0].mxu0
    %v2584 = vadd.f32 %v681, %v2583
    %v2585 = vpop.f32.mrb[0].mxu0
    %2586 = vmatprep.mubr.f32.mxu0 0.0
    %2587 = vmatmul.mubr.f32.gmra.mrb[0].mxu0 %v700
    %v2588 = vpop.f32.mrb[0].mxu0
    %v2589 = vadd.f32 %v686, %v2588
    %v2590 = vpop.f32.mrb[0].mxu0
    %2591 = vmatprep.mubr.f32.mxu0 0.0
    %2592 = vmatmul.mubr.f32.gmra.mrb[0].mxu0 %v703
    %v2593 = vpop.f32.mrb[0].mxu0
    %v2594 = vadd.f32 %v691, %v2593
    %v2595 = vpop.f32.mrb[0].mxu0
    %2596 = vdwg.mxu0
    %v2597 = vmul.f32 %v2579, 0.909
    %v2598 = vmul.f32 %v2584, 0.909
    %v2599 = vmul.f32 %v2589, 0.909
    %v2600 = vmul.f32 %v2594, 0.909
    %v2601 = vxor.u32 %v2579, 2147483648
    %v2602 = vxor.u32 %v2584, 2147483648
    %v2603 = vxor.u32 %v2589, 2147483648
    %v2604 = vxor.u32 %v2594, 2147483648
    %v2605 = vmul.f32 %v2601, 1.442695
    %v2606 = vpow.pop %v2605
    %v2607 = vmul.f32 %v2602, 1.442695
    %v2608 = vpow.pop %v2607
    %v2609 = vmul.f32 %v2603, 1.442695
    %v2610 = vpow.pop %v2609
    %v2611 = vmul.f32 %v2604, 1.442695
    %v2612 = vpow.pop %v2611
    %v2613 = vadd.f32 %v2606, 1.0
    %v2614 = vadd.f32 %v2608, 1.0
    %v2615 = vadd.f32 %v2610, 1.0
    %v2616 = vadd.f32 %v2612, 1.0
    %v2617 = vrcp.pop %v2613
    %v2618 = vmul.f32 1.0, %v2617
    %v2619 = vrcp.pop %v2614
    %v2620 = vmul.f32 1.0, %v2619
    %v2621 = vrcp.pop %v2615
    %v2622 = vmul.f32 1.0, %v2621
    %v2623 = vrcp.pop %v2616
    %v2624 = vmul.f32 1.0, %v2623
    %v2625 = vmul.f32 %v2597, %v2618
    %v2626 = vmul.f32 %v2598, %v2620
    %v2627 = vmul.f32 %v2599, %v2622
    %v2628 = vmul.f32 %v2600, %v2624
    %2629 = vmatprep.subr.mxu0 0.0
    %2630 = vmatpush1.msra.mxu0 %v2625
    %2631 = vmatprep.subr.mxu0 0.0
    %2632 = vmatpush1.msra.mxu0 %v2626
    %2633 = vmatprep.subr.mxu0 0.0
    %2634 = vmatpush1.msra.mxu0 %v2627
    %2635 = vmatprep.subr.mxu0 0.0
    %2636 = vmatpush1.msra.mxu0 %v2628
    %2637 = vmatprep.subr.mxu0 0.0
    %2638 = vmatpush1.msra.mxu0 0.0
    %2639 = vmatprep.subr.mxu0 0.0
    %2640 = vmatpush1.msra.mxu0 0.0
    %2641 = vmatprep.subr.mxu0 0.0
    %2642 = vmatpush1.msra.mxu0 0.0
    %2643 = vmatprep.subr.mxu0 0.0
    %2644 = vmatpush1.msra.mxu0 0.0
    %2645 = vmatprep.subr.mxu0 0.0
    %2646 = vmatpush1.msra.mxu0 0.0
    %2647 = vmatprep.subr.mxu0 0.0
    %2648 = vmatpush1.msra.mxu0 0.0
    %2649 = vmatprep.subr.mxu0 0.0
    %2650 = vmatpush1.msra.mxu0 0.0
    %2651 = vmatprep.subr.mxu0 0.0
    %2652 = vmatpush1.msra.mxu0 0.0
    %2653 = vmatprep.subr.mxu0 0.0
    %2654 = vmatpush1.msra.mxu0 0.0
    %2655 = vmatprep.subr.mxu0 0.0
    %2656 = vmatpush1.msra.mxu0 0.0
    %2657 = vmatprep.subr.mxu0 0.0
    %2658 = vmatpush1.msra.mxu0 0.0
    %2659 = vmatprep.subr.mxu0 0.0
    %2660 = vmatpush1.msra.mxu0 0.0
    %2661 = vmatprep.subr.mxu0 0.0
    %2662 = vmatpush1.msra.mxu0 0.0
    %2663 = vmatprep.subr.mxu0 0.0
    %2664 = vmatpush1.msra.mxu0 0.0
    %2665 = vmatprep.subr.mxu0 0.0
    %2666 = vmatpush1.msra.mxu0 0.0
    %2667 = vmatprep.subr.mxu0 0.0
    %2668 = vmatpush1.msra.mxu0 0.0
    %2669 = vmatprep.subr.mxu0 0.0
    %2670 = vmatpush1.msra.mxu0 0.0
    %2671 = vmatprep.subr.mxu0 0.0
    %2672 = vmatpush1.msra.mxu0 0.0
    %2673 = vmatprep.subr.mxu0 0.0
    %2674 = vmatpush1.msra.mxu0 0.0
    %2675 = vmatprep.subr.mxu0 0.0
    %2676 = vmatpush1.msra.mxu0 0.0
    %2677 = vmatprep.subr.mxu0 0.0
    %2678 = vmatpush1.msra.mxu0 0.0
    %2679 = vmatprep.subr.mxu0 0.0
    %2680 = vmatpush1.msra.mxu0 0.0
    %2681 = vmatprep.subr.mxu0 0.0
    %2682 = vmatpush1.msra.mxu0 0.0
    %2683 = vmatprep.subr.mxu0 0.0
    %2684 = vmatpush1.msra.mxu0 0.0
    %2685 = vmatprep.subr.mxu0 0.0
    %2686 = vmatpush1.msra.mxu0 0.0
    %2687 = vmatprep.subr.mxu0 0.0
    %2688 = vmatpush1.msra.mxu0 0.0
    %2689 = vmatprep.subr.mxu0 0.0
    %2690 = vmatpush1.msra.mxu0 0.0
    %2691 = vmatprep.subr.mxu0 0.0
    %2692 = vmatpush1.msra.mxu0 0.0
    %2693 = vmatprep.mubr.f32.mxu0 0.0
    %2694 = vmatmul.mubr.f32.gmra.mrb[0].mxu0 %v873
    %v2695 = vpop.f32.mrb[0].mxu0
    %v2696 = vadd.f32 %v825, %v2695
    %v2697 = vpop.f32.mrb[0].mxu0
    %2698 = vmatprep.mubr.f32.mxu0 0.0
    %2699 = vmatmul.mubr.f32.gmra.mrb[0].mxu0 %v876
    %v2700 = vpop.f32.mrb[0].mxu0
    %v2701 = vadd.f32 %v830, %v2700
    %v2702 = vpop.f32.mrb[0].mxu0
    %2703 = vmatprep.mubr.f32.mxu0 0.0
    %2704 = vmatmul.mubr.f32.gmra.mrb[0].mxu0 %v879
    %v2705 = vpop.f32.mrb[0].mxu0
    %v2706 = vadd.f32 %v835, %v2705
    %v2707 = vpop.f32.mrb[0].mxu0
    %2708 = vmatprep.mubr.f32.mxu0 0.0
    %2709 = vmatmul.mubr.f32.gmra.mrb[0].mxu0 %v882
    %v2710 = vpop.f32.mrb[0].mxu0
    %v2711 = vadd.f32 %v840, %v2710
    %v2712 = vpop.f32.mrb[0].mxu0
    %2713 = vmatprep.mubr.f32.mxu0 0.0
    %2714 = vmatmul.mubr.f32.gmra.mrb[0].mxu0 %v885
    %v2715 = vpop.f32.mrb[0].mxu0
    %v2716 = vadd.f32 %v845, %v2715
    %v2717 = vpop.f32.mrb[0].mxu0
    %2718 = vmatprep.mubr.f32.mxu0 0.0
    %2719 = vmatmul.mubr.f32.gmra.mrb[0].mxu0 %v888
    %v2720 = vpop.f32.mrb[0].mxu0
    %v2721 = vadd.f32 %v850, %v2720
    %v2722 = vpop.f32.mrb[0].mxu0
    %2723 = vmatprep.mubr.f32.mxu0 0.0
    %2724 = vmatmul.mubr.f32.gmra.mrb[0].mxu0 %v891
    %v2725 = vpop.f32.mrb[0].mxu0
    %v2726 = vadd.f32 %v855, %v2725
    %v2727 = vpop.f32.mrb[0].mxu0
    %2728 = vmatprep.mubr.f32.mxu0 0.0
    %2729 = vmatmul.mubr.f32.gmra.mrb[0].mxu0 %v894
    %v2730 = vpop.f32.mrb[0].mxu0
    %v2731 = vadd.f32 %v860, %v2730
    %v2732 = vpop.f32.mrb[0].mxu0
    %2733 = vmatprep.mubr.f32.mxu0 0.0
    %2734 = vmatmul.mubr.f32.gmra.mrb[0].mxu0 %v897
    %v2735 = vpop.f32.mrb[0].mxu0
    %v2736 = vadd.f32 %v865, %v2735
    %v2737 = vpop.f32.mrb[0].mxu0
    %2738 = vmatprep.mubr.f32.mxu0 0.0
    %2739 = vmatmul.mubr.f32.gmra.mrb[0].mxu0 %v900
    %v2740 = vpop.f32.mrb[0].mxu0
    %v2741 = vadd.f32 %v870, %v2740
    %v2742 = vpop.f32.mrb[0].mxu0
    %2743 = vdwg.mxu0
    %v2744 = vtanh.pop %v2696
    %v2745 = vtanh.pop %v2701
    %v2746 = vtanh.pop %v2706
    %v2747 = vtanh.pop %v2711
    %v2748 = vtanh.pop %v2716
    %v2749 = vtanh.pop %v2721
    %v2750 = vtanh.pop %v2726
    %v2751 = vtanh.pop %v2731
    %v2752 = vtanh.pop %v2736
    %v2753 = vtanh.pop %v2741
    %s2754 = scalar_lea.vmem %s0, 32
    %v2755 = vld [vmem:[%s2754] sm:$0x1f]
    %v2756 = vsub.f32 %v2755, %v2315
    %v2757 = vlaneseq
    %v2758 = vshrl.u32 %v2757, 7
    %v2759 = vsub.s32 0, %v2758
    %v2760 = vrot.slane %v2756, %v2759
    %v2761 = vmul.f32 %v2744, %v2760
    %v2762 = vmul.f32 %v2745, %v2760
    %v2763 = vlaneseq
    %v2764 = vshrl.u32 %v2763, 7
    %v2765 = vsub.s32 1, %v2764
    %v2766 = vrot.slane %v2756, %v2765
    %v2767 = vmul.f32 %v2746, %v2766
    %v2768 = vmul.f32 %v2747, %v2766
    %v2769 = vadd.f32 %v2761, %v2767
    %v2770 = vadd.f32 %v2762, %v2768
    %v2771 = vlaneseq
    %v2772 = vshrl.u32 %v2771, 7
    %v2773 = vsub.s32 2, %v2772
    %v2774 = vrot.slane %v2756, %v2773
    %v2775 = vmul.f32 %v2748, %v2774
    %v2776 = vmul.f32 %v2749, %v2774
    %v2777 = vadd.f32 %v2769, %v2775
    %v2778 = vadd.f32 %v2770, %v2776
    %v2779 = vlaneseq
    %v2780 = vshrl.u32 %v2779, 7
    %v2781 = vsub.s32 3, %v2780
    %v2782 = vrot.slane %v2756, %v2781
    %v2783 = vmul.f32 %v2750, %v2782
    %v2784 = vmul.f32 %v2751, %v2782
    %v2785 = vadd.f32 %v2777, %v2783
    %v2786 = vadd.f32 %v2778, %v2784
    %v2787 = vlaneseq
    %v2788 = vshrl.u32 %v2787, 7
    %v2789 = vsub.s32 4, %v2788
    %v2790 = vrot.slane %v2756, %v2789
    %v2791 = vmul.f32 %v2752, %v2790
    %v2792 = vmul.f32 %v2753, %v2790
    %v2793 = vadd.f32 %v2785, %v2791
    %v2794 = vadd.f32 %v2786, %v2792
    %v2795 = vadd.f32 %v2353, %v2793
    %v2796 = vadd.f32 %v2354, %v2794
    %v2797 = vmul.f32 %v2795, 0.5
    %v2798 = vmul.f32 %v2796, 0.5
    %v2799 = vadd.f32 %v2359, %v2797
    %v2800 = vadd.f32 %v2360, %v2798
    %v2801 = vmul.f32 %v2799, 2.0
    %v2802 = vmul.f32 %v2800, 2.0
    %v2803 = vsub.f32 %v2801, %v2365
    %v2804 = vsub.f32 %v2802, %v2366
    %v2805 = vadd.f32 %v2803, %v2793
    %v2806 = vadd.f32 %v2804, %v2794
    %v2807 = vmul.f32 %v76, 5.0
    %v2808 = vmul.f32 %v77, 5.0
    %v2809 = vmul.f32 %v78, 5.0
    %v2810 = vmul.f32 %v79, 5.0
    %v2811 = vadd.f32 %v2807, %v84
    %v2812 = vadd.f32 %v2808, %v85
    %v2813 = vadd.f32 %v2809, %v86
    %v2814 = vadd.f32 %v2810, %v87
    %2816 = vset.pattern.permute.xlu0 0
    %2817 = vperm.xlu0 %2816, %v2811
    %v2818 = vpop.permute.xlu0 %2817
    %2821 = vset.pattern.permute.xlu0 0
    %2822 = vperm.xlu0 %2821, %v2812
    %v2823 = vpop.permute.xlu0 %2822
    %2826 = vset.pattern.permute.xlu0 0
    %2827 = vperm.xlu0 %2826, %v2813
    %v2828 = vpop.permute.xlu0 %2827
    %2831 = vset.pattern.permute.xlu0 0
    %2832 = vperm.xlu0 %2831, %v2814
    %v2833 = vpop.permute.xlu0 %2832
    %2835 = vmatprep.subr.mxu0 0.0
    %2836 = vmatpush1.msra.mxu0 %v2805
    %2837 = vmatprep.subr.mxu0 0.0
    %2838 = vmatpush1.msra.mxu0 %v2806
    %2839 = vmatprep.subr.mxu0 0.0
    %2840 = vmatpush1.msra.mxu0 0.0
    %2841 = vmatprep.subr.mxu0 0.0
    %2842 = vmatpush1.msra.mxu0 0.0
    %2843 = vmatprep.subr.mxu0 0.0
    %2844 = vmatpush1.msra.mxu0 0.0
    %2845 = vmatprep.subr.mxu0 0.0
    %2846 = vmatpush1.msra.mxu0 0.0
    %2847 = vmatprep.subr.mxu0 0.0
    %2848 = vmatpush1.msra.mxu0 0.0
    %2849 = vmatprep.subr.mxu0 0.0
    %2850 = vmatpush1.msra.mxu0 0.0
    %2851 = vmatprep.subr.mxu0 0.0
    %2852 = vmatpush1.msra.mxu0 0.0
    %2853 = vmatprep.subr.mxu0 0.0
    %2854 = vmatpush1.msra.mxu0 0.0
    %2855 = vmatprep.subr.mxu0 0.0
    %2856 = vmatpush1.msra.mxu0 0.0
    %2857 = vmatprep.subr.mxu0 0.0
    %2858 = vmatpush1.msra.mxu0 0.0
    %2859 = vmatprep.subr.mxu0 0.0
    %2860 = vmatpush1.msra.mxu0 0.0
    %2861 = vmatprep.subr.mxu0 0.0
    %2862 = vmatpush1.msra.mxu0 0.0
    %2863 = vmatprep.subr.mxu0 0.0
    %2864 = vmatpush1.msra.mxu0 0.0
    %2865 = vmatprep.subr.mxu0 0.0
    %2866 = vmatpush1.msra.mxu0 0.0
    %2867 = vmatprep.subr.mxu0 0.0
    %2868 = vmatpush1.msra.mxu0 0.0
    %2869 = vmatprep.subr.mxu0 0.0
    %2870 = vmatpush1.msra.mxu0 0.0
    %2871 = vmatprep.subr.mxu0 0.0
    %2872 = vmatpush1.msra.mxu0 0.0
    %2873 = vmatprep.subr.mxu0 0.0
    %2874 = vmatpush1.msra.mxu0 0.0
    %2875 = vmatprep.subr.mxu0 0.0
    %2876 = vmatpush1.msra.mxu0 0.0
    %2877 = vmatprep.subr.mxu0 0.0
    %2878 = vmatpush1.msra.mxu0 0.0
    %2879 = vmatprep.subr.mxu0 0.0
    %2880 = vmatpush1.msra.mxu0 0.0
    %2881 = vmatprep.subr.mxu0 0.0
    %2882 = vmatpush1.msra.mxu0 0.0
    %2883 = vmatprep.subr.mxu0 0.0
    %2884 = vmatpush1.msra.mxu0 0.0
    %2885 = vmatprep.subr.mxu0 0.0
    %2886 = vmatpush1.msra.mxu0 0.0
    %2887 = vmatprep.subr.mxu0 0.0
    %2888 = vmatpush1.msra.mxu0 0.0
    %2889 = vmatprep.subr.mxu0 0.0
    %2890 = vmatpush1.msra.mxu0 0.0
    %2891 = vmatprep.subr.mxu0 0.0
    %2892 = vmatpush1.msra.mxu0 0.0
    %2893 = vmatprep.subr.mxu0 0.0
    %2894 = vmatpush1.msra.mxu0 0.0
    %2895 = vmatprep.subr.mxu0 0.0
    %2896 = vmatpush1.msra.mxu0 0.0
    %2897 = vmatprep.subr.mxu0 0.0
    %2898 = vmatpush1.msra.mxu0 0.0
    %2899 = vmatprep.mubr.f32.mxu0 0.0
    %2900 = vmatmul.mubr.f32.gmra.mrb[0].mxu0 %v545
    %v2901 = vpop.f32.mrb[0].mxu0
    %v2902 = vadd.f32 %v2818, %v2901
    %v2903 = vpop.f32.mrb[0].mxu0
    %2904 = vmatprep.mubr.f32.mxu0 0.0
    %2905 = vmatmul.mubr.f32.gmra.mrb[0].mxu0 %v548
    %v2906 = vpop.f32.mrb[0].mxu0
    %v2907 = vadd.f32 %v2823, %v2906
    %v2908 = vpop.f32.mrb[0].mxu0
    %2909 = vmatprep.mubr.f32.mxu0 0.0
    %2910 = vmatmul.mubr.f32.gmra.mrb[0].mxu0 %v551
    %v2911 = vpop.f32.mrb[0].mxu0
    %v2912 = vadd.f32 %v2828, %v2911
    %v2913 = vpop.f32.mrb[0].mxu0
    %2914 = vmatprep.mubr.f32.mxu0 0.0
    %2915 = vmatmul.mubr.f32.gmra.mrb[0].mxu0 %v554
    %v2916 = vpop.f32.mrb[0].mxu0
    %v2917 = vadd.f32 %v2833, %v2916
    %v2918 = vpop.f32.mrb[0].mxu0
    %2919 = vdwg.mxu0
    %v2920 = vmul.f32 %v2902, 0.909
    %v2921 = vmul.f32 %v2907, 0.909
    %v2922 = vmul.f32 %v2912, 0.909
    %v2923 = vmul.f32 %v2917, 0.909
    %v2924 = vxor.u32 %v2902, 2147483648
    %v2925 = vxor.u32 %v2907, 2147483648
    %v2926 = vxor.u32 %v2912, 2147483648
    %v2927 = vxor.u32 %v2917, 2147483648
    %v2928 = vmul.f32 %v2924, 1.442695
    %v2929 = vpow.pop %v2928
    %v2930 = vmul.f32 %v2925, 1.442695
    %v2931 = vpow.pop %v2930
    %v2932 = vmul.f32 %v2926, 1.442695
    %v2933 = vpow.pop %v2932
    %v2934 = vmul.f32 %v2927, 1.442695
    %v2935 = vpow.pop %v2934
    %v2936 = vadd.f32 %v2929, 1.0
    %v2937 = vadd.f32 %v2931, 1.0
    %v2938 = vadd.f32 %v2933, 1.0
    %v2939 = vadd.f32 %v2935, 1.0
    %v2940 = vrcp.pop %v2936
    %v2941 = vmul.f32 1.0, %v2940
    %v2942 = vrcp.pop %v2937
    %v2943 = vmul.f32 1.0, %v2942
    %v2944 = vrcp.pop %v2938
    %v2945 = vmul.f32 1.0, %v2944
    %v2946 = vrcp.pop %v2939
    %v2947 = vmul.f32 1.0, %v2946
    %v2948 = vmul.f32 %v2920, %v2941
    %v2949 = vmul.f32 %v2921, %v2943
    %v2950 = vmul.f32 %v2922, %v2945
    %v2951 = vmul.f32 %v2923, %v2947
    %2952 = vmatprep.subr.mxu0 0.0
    %2953 = vmatpush1.msra.mxu0 %v2948
    %2954 = vmatprep.subr.mxu0 0.0
    %2955 = vmatpush1.msra.mxu0 %v2949
    %2956 = vmatprep.subr.mxu0 0.0
    %2957 = vmatpush1.msra.mxu0 %v2950
    %2958 = vmatprep.subr.mxu0 0.0
    %2959 = vmatpush1.msra.mxu0 %v2951
    %2960 = vmatprep.subr.mxu0 0.0
    %2961 = vmatpush1.msra.mxu0 0.0
    %2962 = vmatprep.subr.mxu0 0.0
    %2963 = vmatpush1.msra.mxu0 0.0
    %2964 = vmatprep.subr.mxu0 0.0
    %2965 = vmatpush1.msra.mxu0 0.0
    %2966 = vmatprep.subr.mxu0 0.0
    %2967 = vmatpush1.msra.mxu0 0.0
    %2968 = vmatprep.subr.mxu0 0.0
    %2969 = vmatpush1.msra.mxu0 0.0
    %2970 = vmatprep.subr.mxu0 0.0
    %2971 = vmatpush1.msra.mxu0 0.0
    %2972 = vmatprep.subr.mxu0 0.0
    %2973 = vmatpush1.msra.mxu0 0.0
    %2974 = vmatprep.subr.mxu0 0.0
    %2975 = vmatpush1.msra.mxu0 0.0
    %2976 = vmatprep.subr.mxu0 0.0
    %2977 = vmatpush1.msra.mxu0 0.0
    %2978 = vmatprep.subr.mxu0 0.0
    %2979 = vmatpush1.msra.mxu0 0.0
    %2980 = vmatprep.subr.mxu0 0.0
    %2981 = vmatpush1.msra.mxu0 0.0
    %2982 = vmatprep.subr.mxu0 0.0
    %2983 = vmatpush1.msra.mxu0 0.0
    %2984 = vmatprep.subr.mxu0 0.0
    %2985 = vmatpush1.msra.mxu0 0.0
    %2986 = vmatprep.subr.mxu0 0.0
    %2987 = vmatpush1.msra.mxu0 0.0
    %2988 = vmatprep.subr.mxu0 0.0
    %2989 = vmatpush1.msra.mxu0 0.0
    %2990 = vmatprep.subr.mxu0 0.0
    %2991 = vmatpush1.msra.mxu0 0.0
    %2992 = vmatprep.subr.mxu0 0.0
    %2993 = vmatpush1.msra.mxu0 0.0
    %2994 = vmatprep.subr.mxu0 0.0
    %2995 = vmatpush1.msra.mxu0 0.0
    %2996 = vmatprep.subr.mxu0 0.0
    %2997 = vmatpush1.msra.mxu0 0.0
    %2998 = vmatprep.subr.mxu0 0.0
    %2999 = vmatpush1.msra.mxu0 0.0
    %3000 = vmatprep.subr.mxu0 0.0
    %3001 = vmatpush1.msra.mxu0 0.0
    %3002 = vmatprep.subr.mxu0 0.0
    %3003 = vmatpush1.msra.mxu0 0.0
    %3004 = vmatprep.subr.mxu0 0.0
    %3005 = vmatpush1.msra.mxu0 0.0
    %3006 = vmatprep.subr.mxu0 0.0
    %3007 = vmatpush1.msra.mxu0 0.0
    %3008 = vmatprep.subr.mxu0 0.0
    %3009 = vmatpush1.msra.mxu0 0.0
    %3010 = vmatprep.subr.mxu0 0.0
    %3011 = vmatpush1.msra.mxu0 0.0
    %3012 = vmatprep.subr.mxu0 0.0
    %3013 = vmatpush1.msra.mxu0 0.0
    %3014 = vmatprep.subr.mxu0 0.0
    %3015 = vmatpush1.msra.mxu0 0.0
    %3016 = vmatprep.mubr.f32.mxu0 0.0
    %3017 = vmatmul.mubr.f32.gmra.mrb[0].mxu0 %v694
    %v3018 = vpop.f32.mrb[0].mxu0
    %v3019 = vadd.f32 %v676, %v3018
    %v3020 = vpop.f32.mrb[0].mxu0
    %3021 = vmatprep.mubr.f32.mxu0 0.0
    %3022 = vmatmul.mubr.f32.gmra.mrb[0].mxu0 %v697
    %v3023 = vpop.f32.mrb[0].mxu0
    %v3024 = vadd.f32 %v681, %v3023
    %v3025 = vpop.f32.mrb[0].mxu0
    %3026 = vmatprep.mubr.f32.mxu0 0.0
    %3027 = vmatmul.mubr.f32.gmra.mrb[0].mxu0 %v700
    %v3028 = vpop.f32.mrb[0].mxu0
    %v3029 = vadd.f32 %v686, %v3028
    %v3030 = vpop.f32.mrb[0].mxu0
    %3031 = vmatprep.mubr.f32.mxu0 0.0
    %3032 = vmatmul.mubr.f32.gmra.mrb[0].mxu0 %v703
    %v3033 = vpop.f32.mrb[0].mxu0
    %v3034 = vadd.f32 %v691, %v3033
    %v3035 = vpop.f32.mrb[0].mxu0
    %3036 = vdwg.mxu0
    %v3037 = vmul.f32 %v3019, 0.909
    %v3038 = vmul.f32 %v3024, 0.909
    %v3039 = vmul.f32 %v3029, 0.909
    %v3040 = vmul.f32 %v3034, 0.909
    %v3041 = vxor.u32 %v3019, 2147483648
    %v3042 = vxor.u32 %v3024, 2147483648
    %v3043 = vxor.u32 %v3029, 2147483648
    %v3044 = vxor.u32 %v3034, 2147483648
    %v3045 = vmul.f32 %v3041, 1.442695
    %v3046 = vpow.pop %v3045
    %v3047 = vmul.f32 %v3042, 1.442695
    %v3048 = vpow.pop %v3047
    %v3049 = vmul.f32 %v3043, 1.442695
    %v3050 = vpow.pop %v3049
    %v3051 = vmul.f32 %v3044, 1.442695
    %v3052 = vpow.pop %v3051
    %v3053 = vadd.f32 %v3046, 1.0
    %v3054 = vadd.f32 %v3048, 1.0
    %v3055 = vadd.f32 %v3050, 1.0
    %v3056 = vadd.f32 %v3052, 1.0
    %v3057 = vrcp.pop %v3053
    %v3058 = vmul.f32 1.0, %v3057
    %v3059 = vrcp.pop %v3054
    %v3060 = vmul.f32 1.0, %v3059
    %v3061 = vrcp.pop %v3055
    %v3062 = vmul.f32 1.0, %v3061
    %v3063 = vrcp.pop %v3056
    %v3064 = vmul.f32 1.0, %v3063
    %v3065 = vmul.f32 %v3037, %v3058
    %v3066 = vmul.f32 %v3038, %v3060
    %v3067 = vmul.f32 %v3039, %v3062
    %v3068 = vmul.f32 %v3040, %v3064
    %3069 = vmatprep.subr.mxu0 0.0
    %3070 = vmatpush1.msra.mxu0 %v3065
    %3071 = vmatprep.subr.mxu0 0.0
    %3072 = vmatpush1.msra.mxu0 %v3066
    %3073 = vmatprep.subr.mxu0 0.0
    %3074 = vmatpush1.msra.mxu0 %v3067
    %3075 = vmatprep.subr.mxu0 0.0
    %3076 = vmatpush1.msra.mxu0 %v3068
    %3077 = vmatprep.subr.mxu0 0.0
    %3078 = vmatpush1.msra.mxu0 0.0
    %3079 = vmatprep.subr.mxu0 0.0
    %3080 = vmatpush1.msra.mxu0 0.0
    %3081 = vmatprep.subr.mxu0 0.0
    %3082 = vmatpush1.msra.mxu0 0.0
    %3083 = vmatprep.subr.mxu0 0.0
    %3084 = vmatpush1.msra.mxu0 0.0
    %3085 = vmatprep.subr.mxu0 0.0
    %3086 = vmatpush1.msra.mxu0 0.0
    %3087 = vmatprep.subr.mxu0 0.0
    %3088 = vmatpush1.msra.mxu0 0.0
    %3089 = vmatprep.subr.mxu0 0.0
    %3090 = vmatpush1.msra.mxu0 0.0
    %3091 = vmatprep.subr.mxu0 0.0
    %3092 = vmatpush1.msra.mxu0 0.0
    %3093 = vmatprep.subr.mxu0 0.0
    %3094 = vmatpush1.msra.mxu0 0.0
    %3095 = vmatprep.subr.mxu0 0.0
    %3096 = vmatpush1.msra.mxu0 0.0
    %3097 = vmatprep.subr.mxu0 0.0
    %3098 = vmatpush1.msra.mxu0 0.0
    %3099 = vmatprep.subr.mxu0 0.0
    %3100 = vmatpush1.msra.mxu0 0.0
    %3101 = vmatprep.subr.mxu0 0.0
    %3102 = vmatpush1.msra.mxu0 0.0
    %3103 = vmatprep.subr.mxu0 0.0
    %3104 = vmatpush1.msra.mxu0 0.0
    %3105 = vmatprep.subr.mxu0 0.0
    %3106 = vmatpush1.msra.mxu0 0.0
    %3107 = vmatprep.subr.mxu0 0.0
    %3108 = vmatpush1.msra.mxu0 0.0
    %3109 = vmatprep.subr.mxu0 0.0
    %3110 = vmatpush1.msra.mxu0 0.0
    %3111 = vmatprep.subr.mxu0 0.0
    %3112 = vmatpush1.msra.mxu0 0.0
    %3113 = vmatprep.subr.mxu0 0.0
    %3114 = vmatpush1.msra.mxu0 0.0
    %3115 = vmatprep.subr.mxu0 0.0
    %3116 = vmatpush1.msra.mxu0 0.0
    %3117 = vmatprep.subr.mxu0 0.0
    %3118 = vmatpush1.msra.mxu0 0.0
    %3119 = vmatprep.subr.mxu0 0.0
    %3120 = vmatpush1.msra.mxu0 0.0
    %3121 = vmatprep.subr.mxu0 0.0
    %3122 = vmatpush1.msra.mxu0 0.0
    %3123 = vmatprep.subr.mxu0 0.0
    %3124 = vmatpush1.msra.mxu0 0.0
    %3125 = vmatprep.subr.mxu0 0.0
    %3126 = vmatpush1.msra.mxu0 0.0
    %3127 = vmatprep.subr.mxu0 0.0
    %3128 = vmatpush1.msra.mxu0 0.0
    %3129 = vmatprep.subr.mxu0 0.0
    %3130 = vmatpush1.msra.mxu0 0.0
    %3131 = vmatprep.subr.mxu0 0.0
    %3132 = vmatpush1.msra.mxu0 0.0
    %3133 = vmatprep.mubr.f32.mxu0 0.0
    %3134 = vmatmul.mubr.f32.gmra.mrb[0].mxu0 %v873
    %v3135 = vpop.f32.mrb[0].mxu0
    %v3136 = vadd.f32 %v825, %v3135
    %v3137 = vpop.f32.mrb[0].mxu0
    %3138 = vmatprep.mubr.f32.mxu0 0.0
    %3139 = vmatmul.mubr.f32.gmra.mrb[0].mxu0 %v876
    %v3140 = vpop.f32.mrb[0].mxu0
    %v3141 = vadd.f32 %v830, %v3140
    %v3142 = vpop.f32.mrb[0].mxu0
    %3143 = vmatprep.mubr.f32.mxu0 0.0
    %3144 = vmatmul.mubr.f32.gmra.mrb[0].mxu0 %v879
    %v3145 = vpop.f32.mrb[0].mxu0
    %v3146 = vadd.f32 %v835, %v3145
    %v3147 = vpop.f32.mrb[0].mxu0
    %3148 = vmatprep.mubr.f32.mxu0 0.0
    %3149 = vmatmul.mubr.f32.gmra.mrb[0].mxu0 %v882
    %v3150 = vpop.f32.mrb[0].mxu0
    %v3151 = vadd.f32 %v840, %v3150
    %v3152 = vpop.f32.mrb[0].mxu0
    %3153 = vmatprep.mubr.f32.mxu0 0.0
    %3154 = vmatmul.mubr.f32.gmra.mrb[0].mxu0 %v885
    %v3155 = vpop.f32.mrb[0].mxu0
    %v3156 = vadd.f32 %v845, %v3155
    %v3157 = vpop.f32.mrb[0].mxu0
    %3158 = vmatprep.mubr.f32.mxu0 0.0
    %3159 = vmatmul.mubr.f32.gmra.mrb[0].mxu0 %v888
    %v3160 = vpop.f32.mrb[0].mxu0
    %v3161 = vadd.f32 %v850, %v3160
    %v3162 = vpop.f32.mrb[0].mxu0
    %3163 = vmatprep.mubr.f32.mxu0 0.0
    %3164 = vmatmul.mubr.f32.gmra.mrb[0].mxu0 %v891
    %v3165 = vpop.f32.mrb[0].mxu0
    %v3166 = vadd.f32 %v855, %v3165
    %v3167 = vpop.f32.mrb[0].mxu0
    %3168 = vmatprep.mubr.f32.mxu0 0.0
    %3169 = vmatmul.mubr.f32.gmra.mrb[0].mxu0 %v894
    %v3170 = vpop.f32.mrb[0].mxu0
    %v3171 = vadd.f32 %v860, %v3170
    %v3172 = vpop.f32.mrb[0].mxu0
    %3173 = vmatprep.mubr.f32.mxu0 0.0
    %3174 = vmatmul.mubr.f32.gmra.mrb[0].mxu0 %v897
    %v3175 = vpop.f32.mrb[0].mxu0
    %v3176 = vadd.f32 %v865, %v3175
    %v3177 = vpop.f32.mrb[0].mxu0
    %3178 = vmatprep.mubr.f32.mxu0 0.0
    %3179 = vmatmul.mubr.f32.gmra.mrb[0].mxu0 %v900
    %v3180 = vpop.f32.mrb[0].mxu0
    %v3181 = vadd.f32 %v870, %v3180
    %v3182 = vpop.f32.mrb[0].mxu0
    %3183 = vdwg.mxu0
    %v3184 = vtanh.pop %v3136
    %v3185 = vtanh.pop %v3141
    %v3186 = vtanh.pop %v3146
    %v3187 = vtanh.pop %v3151
    %v3188 = vtanh.pop %v3156
    %v3189 = vtanh.pop %v3161
    %v3190 = vtanh.pop %v3166
    %v3191 = vtanh.pop %v3171
    %v3192 = vtanh.pop %v3176
    %v3193 = vtanh.pop %v3181
    %s3194 = scalar_lea.vmem %s0, 40
    %v3195 = vld [vmem:[%s3194] sm:$0x1f]
    %v3196 = vsub.f32 %v3195, %v2755
    %v3197 = vlaneseq
    %v3198 = vshrl.u32 %v3197, 7
    %v3199 = vsub.s32 0, %v3198
    %v3200 = vrot.slane %v3196, %v3199
    %v3201 = vmul.f32 %v3184, %v3200
    %v3202 = vmul.f32 %v3185, %v3200
    %v3203 = vlaneseq
    %v3204 = vshrl.u32 %v3203, 7
    %v3205 = vsub.s32 1, %v3204
    %v3206 = vrot.slane %v3196, %v3205
    %v3207 = vmul.f32 %v3186, %v3206
    %v3208 = vmul.f32 %v3187, %v3206
    %v3209 = vadd.f32 %v3201, %v3207
    %v3210 = vadd.f32 %v3202, %v3208
    %v3211 = vlaneseq
    %v3212 = vshrl.u32 %v3211, 7
    %v3213 = vsub.s32 2, %v3212
    %v3214 = vrot.slane %v3196, %v3213
    %v3215 = vmul.f32 %v3188, %v3214
    %v3216 = vmul.f32 %v3189, %v3214
    %v3217 = vadd.f32 %v3209, %v3215
    %v3218 = vadd.f32 %v3210, %v3216
    %v3219 = vlaneseq
    %v3220 = vshrl.u32 %v3219, 7
    %v3221 = vsub.s32 3, %v3220
    %v3222 = vrot.slane %v3196, %v3221
    %v3223 = vmul.f32 %v3190, %v3222
    %v3224 = vmul.f32 %v3191, %v3222
    %v3225 = vadd.f32 %v3217, %v3223
    %v3226 = vadd.f32 %v3218, %v3224
    %v3227 = vlaneseq
    %v3228 = vshrl.u32 %v3227, 7
    %v3229 = vsub.s32 4, %v3228
    %v3230 = vrot.slane %v3196, %v3229
    %v3231 = vmul.f32 %v3192, %v3230
    %v3232 = vmul.f32 %v3193, %v3230
    %v3233 = vadd.f32 %v3225, %v3231
    %v3234 = vadd.f32 %v3226, %v3232
    %v3235 = vadd.f32 %v2793, %v3233
    %v3236 = vadd.f32 %v2794, %v3234
    %v3237 = vmul.f32 %v3235, 0.5
    %v3238 = vmul.f32 %v3236, 0.5
    %v3239 = vadd.f32 %v2799, %v3237
    %v3240 = vadd.f32 %v2800, %v3238
    %v3241 = vmul.f32 %v3239, 2.0
    %v3242 = vmul.f32 %v3240, 2.0
    %v3243 = vsub.f32 %v3241, %v2805
    %v3244 = vsub.f32 %v3242, %v2806
    %v3245 = vadd.f32 %v3243, %v3233
    %v3246 = vadd.f32 %v3244, %v3234
    %v3247 = vmul.f32 %v76, 6.0
    %v3248 = vmul.f32 %v77, 6.0
    %v3249 = vmul.f32 %v78, 6.0
    %v3250 = vmul.f32 %v79, 6.0
    %v3251 = vadd.f32 %v3247, %v84
    %v3252 = vadd.f32 %v3248, %v85
    %v3253 = vadd.f32 %v3249, %v86
    %v3254 = vadd.f32 %v3250, %v87
    %3256 = vset.pattern.permute.xlu0 0
    %3257 = vperm.xlu0 %3256, %v3251
    %v3258 = vpop.permute.xlu0 %3257
    %3261 = vset.pattern.permute.xlu0 0
    %3262 = vperm.xlu0 %3261, %v3252
    %v3263 = vpop.permute.xlu0 %3262
    %3266 = vset.pattern.permute.xlu0 0
    %3267 = vperm.xlu0 %3266, %v3253
    %v3268 = vpop.permute.xlu0 %3267
    %3271 = vset.pattern.permute.xlu0 0
    %3272 = vperm.xlu0 %3271, %v3254
    %v3273 = vpop.permute.xlu0 %3272
    %3275 = vmatprep.subr.mxu0 0.0
    %3276 = vmatpush1.msra.mxu0 %v3245
    %3277 = vmatprep.subr.mxu0 0.0
    %3278 = vmatpush1.msra.mxu0 %v3246
    %3279 = vmatprep.subr.mxu0 0.0
    %3280 = vmatpush1.msra.mxu0 0.0
    %3281 = vmatprep.subr.mxu0 0.0
    %3282 = vmatpush1.msra.mxu0 0.0
    %3283 = vmatprep.subr.mxu0 0.0
    %3284 = vmatpush1.msra.mxu0 0.0
    %3285 = vmatprep.subr.mxu0 0.0
    %3286 = vmatpush1.msra.mxu0 0.0
    %3287 = vmatprep.subr.mxu0 0.0
    %3288 = vmatpush1.msra.mxu0 0.0
    %3289 = vmatprep.subr.mxu0 0.0
    %3290 = vmatpush1.msra.mxu0 0.0
    %3291 = vmatprep.subr.mxu0 0.0
    %3292 = vmatpush1.msra.mxu0 0.0
    %3293 = vmatprep.subr.mxu0 0.0
    %3294 = vmatpush1.msra.mxu0 0.0
    %3295 = vmatprep.subr.mxu0 0.0
    %3296 = vmatpush1.msra.mxu0 0.0
    %3297 = vmatprep.subr.mxu0 0.0
    %3298 = vmatpush1.msra.mxu0 0.0
    %3299 = vmatprep.subr.mxu0 0.0
    %3300 = vmatpush1.msra.mxu0 0.0
    %3301 = vmatprep.subr.mxu0 0.0
    %3302 = vmatpush1.msra.mxu0 0.0
    %3303 = vmatprep.subr.mxu0 0.0
    %3304 = vmatpush1.msra.mxu0 0.0
    %3305 = vmatprep.subr.mxu0 0.0
    %3306 = vmatpush1.msra.mxu0 0.0
    %3307 = vmatprep.subr.mxu0 0.0
    %3308 = vmatpush1.msra.mxu0 0.0
    %3309 = vmatprep.subr.mxu0 0.0
    %3310 = vmatpush1.msra.mxu0 0.0
    %3311 = vmatprep.subr.mxu0 0.0
    %3312 = vmatpush1.msra.mxu0 0.0
    %3313 = vmatprep.subr.mxu0 0.0
    %3314 = vmatpush1.msra.mxu0 0.0
    %3315 = vmatprep.subr.mxu0 0.0
    %3316 = vmatpush1.msra.mxu0 0.0
    %3317 = vmatprep.subr.mxu0 0.0
    %3318 = vmatpush1.msra.mxu0 0.0
    %3319 = vmatprep.subr.mxu0 0.0
    %3320 = vmatpush1.msra.mxu0 0.0
    %3321 = vmatprep.subr.mxu0 0.0
    %3322 = vmatpush1.msra.mxu0 0.0
    %3323 = vmatprep.subr.mxu0 0.0
    %3324 = vmatpush1.msra.mxu0 0.0
    %3325 = vmatprep.subr.mxu0 0.0
    %3326 = vmatpush1.msra.mxu0 0.0
    %3327 = vmatprep.subr.mxu0 0.0
    %3328 = vmatpush1.msra.mxu0 0.0
    %3329 = vmatprep.subr.mxu0 0.0
    %3330 = vmatpush1.msra.mxu0 0.0
    %3331 = vmatprep.subr.mxu0 0.0
    %3332 = vmatpush1.msra.mxu0 0.0
    %3333 = vmatprep.subr.mxu0 0.0
    %3334 = vmatpush1.msra.mxu0 0.0
    %3335 = vmatprep.subr.mxu0 0.0
    %3336 = vmatpush1.msra.mxu0 0.0
    %3337 = vmatprep.subr.mxu0 0.0
    %3338 = vmatpush1.msra.mxu0 0.0
    %3339 = vmatprep.mubr.f32.mxu0 0.0
    %3340 = vmatmul.mubr.f32.gmra.mrb[0].mxu0 %v545
    %v3341 = vpop.f32.mrb[0].mxu0
    %v3342 = vadd.f32 %v3258, %v3341
    %v3343 = vpop.f32.mrb[0].mxu0
    %3344 = vmatprep.mubr.f32.mxu0 0.0
    %3345 = vmatmul.mubr.f32.gmra.mrb[0].mxu0 %v548
    %v3346 = vpop.f32.mrb[0].mxu0
    %v3347 = vadd.f32 %v3263, %v3346
    %v3348 = vpop.f32.mrb[0].mxu0
    %3349 = vmatprep.mubr.f32.mxu0 0.0
    %3350 = vmatmul.mubr.f32.gmra.mrb[0].mxu0 %v551
    %v3351 = vpop.f32.mrb[0].mxu0
    %v3352 = vadd.f32 %v3268, %v3351
    %v3353 = vpop.f32.mrb[0].mxu0
    %3354 = vmatprep.mubr.f32.mxu0 0.0
    %3355 = vmatmul.mubr.f32.gmra.mrb[0].mxu0 %v554
    %v3356 = vpop.f32.mrb[0].mxu0
    %v3357 = vadd.f32 %v3273, %v3356
    %v3358 = vpop.f32.mrb[0].mxu0
    %3359 = vdwg.mxu0
    %v3360 = vmul.f32 %v3342, 0.909
    %v3361 = vmul.f32 %v3347, 0.909
    %v3362 = vmul.f32 %v3352, 0.909
    %v3363 = vmul.f32 %v3357, 0.909
    %v3364 = vxor.u32 %v3342, 2147483648
    %v3365 = vxor.u32 %v3347, 2147483648
    %v3366 = vxor.u32 %v3352, 2147483648
    %v3367 = vxor.u32 %v3357, 2147483648
    %v3368 = vmul.f32 %v3364, 1.442695
    %v3369 = vpow.pop %v3368
    %v3370 = vmul.f32 %v3365, 1.442695
    %v3371 = vpow.pop %v3370
    %v3372 = vmul.f32 %v3366, 1.442695
    %v3373 = vpow.pop %v3372
    %v3374 = vmul.f32 %v3367, 1.442695
    %v3375 = vpow.pop %v3374
    %v3376 = vadd.f32 %v3369, 1.0
    %v3377 = vadd.f32 %v3371, 1.0
    %v3378 = vadd.f32 %v3373, 1.0
    %v3379 = vadd.f32 %v3375, 1.0
    %v3380 = vrcp.pop %v3376
    %v3381 = vmul.f32 1.0, %v3380
    %v3382 = vrcp.pop %v3377
    %v3383 = vmul.f32 1.0, %v3382
    %v3384 = vrcp.pop %v3378
    %v3385 = vmul.f32 1.0, %v3384
    %v3386 = vrcp.pop %v3379
    %v3387 = vmul.f32 1.0, %v3386
    %v3388 = vmul.f32 %v3360, %v3381
    %v3389 = vmul.f32 %v3361, %v3383
    %v3390 = vmul.f32 %v3362, %v3385
    %v3391 = vmul.f32 %v3363, %v3387
    %3392 = vmatprep.subr.mxu0 0.0
    %3393 = vmatpush1.msra.mxu0 %v3388
    %3394 = vmatprep.subr.mxu0 0.0
    %3395 = vmatpush1.msra.mxu0 %v3389
    %3396 = vmatprep.subr.mxu0 0.0
    %3397 = vmatpush1.msra.mxu0 %v3390
    %3398 = vmatprep.subr.mxu0 0.0
    %3399 = vmatpush1.msra.mxu0 %v3391
    %3400 = vmatprep.subr.mxu0 0.0
    %3401 = vmatpush1.msra.mxu0 0.0
    %3402 = vmatprep.subr.mxu0 0.0
    %3403 = vmatpush1.msra.mxu0 0.0
    %3404 = vmatprep.subr.mxu0 0.0
    %3405 = vmatpush1.msra.mxu0 0.0
    %3406 = vmatprep.subr.mxu0 0.0
    %3407 = vmatpush1.msra.mxu0 0.0
    %3408 = vmatprep.subr.mxu0 0.0
    %3409 = vmatpush1.msra.mxu0 0.0
    %3410 = vmatprep.subr.mxu0 0.0
    %3411 = vmatpush1.msra.mxu0 0.0
    %3412 = vmatprep.subr.mxu0 0.0
    %3413 = vmatpush1.msra.mxu0 0.0
    %3414 = vmatprep.subr.mxu0 0.0
    %3415 = vmatpush1.msra.mxu0 0.0
    %3416 = vmatprep.subr.mxu0 0.0
    %3417 = vmatpush1.msra.mxu0 0.0
    %3418 = vmatprep.subr.mxu0 0.0
    %3419 = vmatpush1.msra.mxu0 0.0
    %3420 = vmatprep.subr.mxu0 0.0
    %3421 = vmatpush1.msra.mxu0 0.0
    %3422 = vmatprep.subr.mxu0 0.0
    %3423 = vmatpush1.msra.mxu0 0.0
    %3424 = vmatprep.subr.mxu0 0.0
    %3425 = vmatpush1.msra.mxu0 0.0
    %3426 = vmatprep.subr.mxu0 0.0
    %3427 = vmatpush1.msra.mxu0 0.0
    %3428 = vmatprep.subr.mxu0 0.0
    %3429 = vmatpush1.msra.mxu0 0.0
    %3430 = vmatprep.subr.mxu0 0.0
    %3431 = vmatpush1.msra.mxu0 0.0
    %3432 = vmatprep.subr.mxu0 0.0
    %3433 = vmatpush1.msra.mxu0 0.0
    %3434 = vmatprep.subr.mxu0 0.0
    %3435 = vmatpush1.msra.mxu0 0.0
    %3436 = vmatprep.subr.mxu0 0.0
    %3437 = vmatpush1.msra.mxu0 0.0
    %3438 = vmatprep.subr.mxu0 0.0
    %3439 = vmatpush1.msra.mxu0 0.0
    %3440 = vmatprep.subr.mxu0 0.0
    %3441 = vmatpush1.msra.mxu0 0.0
    %3442 = vmatprep.subr.mxu0 0.0
    %3443 = vmatpush1.msra.mxu0 0.0
    %3444 = vmatprep.subr.mxu0 0.0
    %3445 = vmatpush1.msra.mxu0 0.0
    %3446 = vmatprep.subr.mxu0 0.0
    %3447 = vmatpush1.msra.mxu0 0.0
    %3448 = vmatprep.subr.mxu0 0.0
    %3449 = vmatpush1.msra.mxu0 0.0
    %3450 = vmatprep.subr.mxu0 0.0
    %3451 = vmatpush1.msra.mxu0 0.0
    %3452 = vmatprep.subr.mxu0 0.0
    %3453 = vmatpush1.msra.mxu0 0.0
    %3454 = vmatprep.subr.mxu0 0.0
    %3455 = vmatpush1.msra.mxu0 0.0
    %3456 = vmatprep.mubr.f32.mxu0 0.0
    %3457 = vmatmul.mubr.f32.gmra.mrb[0].mxu0 %v694
    %v3458 = vpop.f32.mrb[0].mxu0
    %v3459 = vadd.f32 %v676, %v3458
    %v3460 = vpop.f32.mrb[0].mxu0
    %3461 = vmatprep.mubr.f32.mxu0 0.0
    %3462 = vmatmul.mubr.f32.gmra.mrb[0].mxu0 %v697
    %v3463 = vpop.f32.mrb[0].mxu0
    %v3464 = vadd.f32 %v681, %v3463
    %v3465 = vpop.f32.mrb[0].mxu0
    %3466 = vmatprep.mubr.f32.mxu0 0.0
    %3467 = vmatmul.mubr.f32.gmra.mrb[0].mxu0 %v700
    %v3468 = vpop.f32.mrb[0].mxu0
    %v3469 = vadd.f32 %v686, %v3468
    %v3470 = vpop.f32.mrb[0].mxu0
    %3471 = vmatprep.mubr.f32.mxu0 0.0
    %3472 = vmatmul.mubr.f32.gmra.mrb[0].mxu0 %v703
    %v3473 = vpop.f32.mrb[0].mxu0
    %v3474 = vadd.f32 %v691, %v3473
    %v3475 = vpop.f32.mrb[0].mxu0
    %3476 = vdwg.mxu0
    %v3477 = vmul.f32 %v3459, 0.909
    %v3478 = vmul.f32 %v3464, 0.909
    %v3479 = vmul.f32 %v3469, 0.909
    %v3480 = vmul.f32 %v3474, 0.909
    %v3481 = vxor.u32 %v3459, 2147483648
    %v3482 = vxor.u32 %v3464, 2147483648
    %v3483 = vxor.u32 %v3469, 2147483648
    %v3484 = vxor.u32 %v3474, 2147483648
    %v3485 = vmul.f32 %v3481, 1.442695
    %v3486 = vpow.pop %v3485
    %v3487 = vmul.f32 %v3482, 1.442695
    %v3488 = vpow.pop %v3487
    %v3489 = vmul.f32 %v3483, 1.442695
    %v3490 = vpow.pop %v3489
    %v3491 = vmul.f32 %v3484, 1.442695
    %v3492 = vpow.pop %v3491
    %v3493 = vadd.f32 %v3486, 1.0
    %v3494 = vadd.f32 %v3488, 1.0
    %v3495 = vadd.f32 %v3490, 1.0
    %v3496 = vadd.f32 %v3492, 1.0
    %v3497 = vrcp.pop %v3493
    %v3498 = vmul.f32 1.0, %v3497
    %v3499 = vrcp.pop %v3494
    %v3500 = vmul.f32 1.0, %v3499
    %v3501 = vrcp.pop %v3495
    %v3502 = vmul.f32 1.0, %v3501
    %v3503 = vrcp.pop %v3496
    %v3504 = vmul.f32 1.0, %v3503
    %v3505 = vmul.f32 %v3477, %v3498
    %v3506 = vmul.f32 %v3478, %v3500
    %v3507 = vmul.f32 %v3479, %v3502
    %v3508 = vmul.f32 %v3480, %v3504
    %3509 = vmatprep.subr.mxu0 0.0
    %3510 = vmatpush1.msra.mxu0 %v3505
    %3511 = vmatprep.subr.mxu0 0.0
    %3512 = vmatpush1.msra.mxu0 %v3506
    %3513 = vmatprep.subr.mxu0 0.0
    %3514 = vmatpush1.msra.mxu0 %v3507
    %3515 = vmatprep.subr.mxu0 0.0
    %3516 = vmatpush1.msra.mxu0 %v3508
    %3517 = vmatprep.subr.mxu0 0.0
    %3518 = vmatpush1.msra.mxu0 0.0
    %3519 = vmatprep.subr.mxu0 0.0
    %3520 = vmatpush1.msra.mxu0 0.0
    %3521 = vmatprep.subr.mxu0 0.0
    %3522 = vmatpush1.msra.mxu0 0.0
    %3523 = vmatprep.subr.mxu0 0.0
    %3524 = vmatpush1.msra.mxu0 0.0
    %3525 = vmatprep.subr.mxu0 0.0
    %3526 = vmatpush1.msra.mxu0 0.0
    %3527 = vmatprep.subr.mxu0 0.0
    %3528 = vmatpush1.msra.mxu0 0.0
    %3529 = vmatprep.subr.mxu0 0.0
    %3530 = vmatpush1.msra.mxu0 0.0
    %3531 = vmatprep.subr.mxu0 0.0
    %3532 = vmatpush1.msra.mxu0 0.0
    %3533 = vmatprep.subr.mxu0 0.0
    %3534 = vmatpush1.msra.mxu0 0.0
    %3535 = vmatprep.subr.mxu0 0.0
    %3536 = vmatpush1.msra.mxu0 0.0
    %3537 = vmatprep.subr.mxu0 0.0
    %3538 = vmatpush1.msra.mxu0 0.0
    %3539 = vmatprep.subr.mxu0 0.0
    %3540 = vmatpush1.msra.mxu0 0.0
    %3541 = vmatprep.subr.mxu0 0.0
    %3542 = vmatpush1.msra.mxu0 0.0
    %3543 = vmatprep.subr.mxu0 0.0
    %3544 = vmatpush1.msra.mxu0 0.0
    %3545 = vmatprep.subr.mxu0 0.0
    %3546 = vmatpush1.msra.mxu0 0.0
    %3547 = vmatprep.subr.mxu0 0.0
    %3548 = vmatpush1.msra.mxu0 0.0
    %3549 = vmatprep.subr.mxu0 0.0
    %3550 = vmatpush1.msra.mxu0 0.0
    %3551 = vmatprep.subr.mxu0 0.0
    %3552 = vmatpush1.msra.mxu0 0.0
    %3553 = vmatprep.subr.mxu0 0.0
    %3554 = vmatpush1.msra.mxu0 0.0
    %3555 = vmatprep.subr.mxu0 0.0
    %3556 = vmatpush1.msra.mxu0 0.0
    %3557 = vmatprep.subr.mxu0 0.0
    %3558 = vmatpush1.msra.mxu0 0.0
    %3559 = vmatprep.subr.mxu0 0.0
    %3560 = vmatpush1.msra.mxu0 0.0
    %3561 = vmatprep.subr.mxu0 0.0
    %3562 = vmatpush1.msra.mxu0 0.0
    %3563 = vmatprep.subr.mxu0 0.0
    %3564 = vmatpush1.msra.mxu0 0.0
    %3565 = vmatprep.subr.mxu0 0.0
    %3566 = vmatpush1.msra.mxu0 0.0
    %3567 = vmatprep.subr.mxu0 0.0
    %3568 = vmatpush1.msra.mxu0 0.0
    %3569 = vmatprep.subr.mxu0 0.0
    %3570 = vmatpush1.msra.mxu0 0.0
    %3571 = vmatprep.subr.mxu0 0.0
    %3572 = vmatpush1.msra.mxu0 0.0
    %3573 = vmatprep.mubr.f32.mxu0 0.0
    %3574 = vmatmul.mubr.f32.gmra.mrb[0].mxu0 %v873
    %v3575 = vpop.f32.mrb[0].mxu0
    %v3576 = vadd.f32 %v825, %v3575
    %v3577 = vpop.f32.mrb[0].mxu0
    %3578 = vmatprep.mubr.f32.mxu0 0.0
    %3579 = vmatmul.mubr.f32.gmra.mrb[0].mxu0 %v876
    %v3580 = vpop.f32.mrb[0].mxu0
    %v3581 = vadd.f32 %v830, %v3580
    %v3582 = vpop.f32.mrb[0].mxu0
    %3583 = vmatprep.mubr.f32.mxu0 0.0
    %3584 = vmatmul.mubr.f32.gmra.mrb[0].mxu0 %v879
    %v3585 = vpop.f32.mrb[0].mxu0
    %v3586 = vadd.f32 %v835, %v3585
    %v3587 = vpop.f32.mrb[0].mxu0
    %3588 = vmatprep.mubr.f32.mxu0 0.0
    %3589 = vmatmul.mubr.f32.gmra.mrb[0].mxu0 %v882
    %v3590 = vpop.f32.mrb[0].mxu0
    %v3591 = vadd.f32 %v840, %v3590
    %v3592 = vpop.f32.mrb[0].mxu0
    %3593 = vmatprep.mubr.f32.mxu0 0.0
    %3594 = vmatmul.mubr.f32.gmra.mrb[0].mxu0 %v885
    %v3595 = vpop.f32.mrb[0].mxu0
    %v3596 = vadd.f32 %v845, %v3595
    %v3597 = vpop.f32.mrb[0].mxu0
    %3598 = vmatprep.mubr.f32.mxu0 0.0
    %3599 = vmatmul.mubr.f32.gmra.mrb[0].mxu0 %v888
    %v3600 = vpop.f32.mrb[0].mxu0
    %v3601 = vadd.f32 %v850, %v3600
    %v3602 = vpop.f32.mrb[0].mxu0
    %3603 = vmatprep.mubr.f32.mxu0 0.0
    %3604 = vmatmul.mubr.f32.gmra.mrb[0].mxu0 %v891
    %v3605 = vpop.f32.mrb[0].mxu0
    %v3606 = vadd.f32 %v855, %v3605
    %v3607 = vpop.f32.mrb[0].mxu0
    %3608 = vmatprep.mubr.f32.mxu0 0.0
    %3609 = vmatmul.mubr.f32.gmra.mrb[0].mxu0 %v894
    %v3610 = vpop.f32.mrb[0].mxu0
    %v3611 = vadd.f32 %v860, %v3610
    %v3612 = vpop.f32.mrb[0].mxu0
    %3613 = vmatprep.mubr.f32.mxu0 0.0
    %3614 = vmatmul.mubr.f32.gmra.mrb[0].mxu0 %v897
    %v3615 = vpop.f32.mrb[0].mxu0
    %v3616 = vadd.f32 %v865, %v3615
    %v3617 = vpop.f32.mrb[0].mxu0
    %3618 = vmatprep.mubr.f32.mxu0 0.0
    %3619 = vmatmul.mubr.f32.gmra.mrb[0].mxu0 %v900
    %v3620 = vpop.f32.mrb[0].mxu0
    %v3621 = vadd.f32 %v870, %v3620
    %v3622 = vpop.f32.mrb[0].mxu0
    %3623 = vdwg.mxu0
    %v3624 = vtanh.pop %v3576
    %v3625 = vtanh.pop %v3581
    %v3626 = vtanh.pop %v3586
    %v3627 = vtanh.pop %v3591
    %v3628 = vtanh.pop %v3596
    %v3629 = vtanh.pop %v3601
    %v3630 = vtanh.pop %v3606
    %v3631 = vtanh.pop %v3611
    %v3632 = vtanh.pop %v3616
    %v3633 = vtanh.pop %v3621
    %s3634 = scalar_lea.vmem %s0, 48
    %v3635 = vld [vmem:[%s3634] sm:$0x1f]
    %v3636 = vsub.f32 %v3635, %v3195
    %v3637 = vlaneseq
    %v3638 = vshrl.u32 %v3637, 7
    %v3639 = vsub.s32 0, %v3638
    %v3640 = vrot.slane %v3636, %v3639
    %v3641 = vmul.f32 %v3624, %v3640
    %v3642 = vmul.f32 %v3625, %v3640
    %v3643 = vlaneseq
    %v3644 = vshrl.u32 %v3643, 7
    %v3645 = vsub.s32 1, %v3644
    %v3646 = vrot.slane %v3636, %v3645
    %v3647 = vmul.f32 %v3626, %v3646
    %v3648 = vmul.f32 %v3627, %v3646
    %v3649 = vadd.f32 %v3641, %v3647
    %v3650 = vadd.f32 %v3642, %v3648
    %v3651 = vlaneseq
    %v3652 = vshrl.u32 %v3651, 7
    %v3653 = vsub.s32 2, %v3652
    %v3654 = vrot.slane %v3636, %v3653
    %v3655 = vmul.f32 %v3628, %v3654
    %v3656 = vmul.f32 %v3629, %v3654
    %v3657 = vadd.f32 %v3649, %v3655
    %v3658 = vadd.f32 %v3650, %v3656
    %v3659 = vlaneseq
    %v3660 = vshrl.u32 %v3659, 7
    %v3661 = vsub.s32 3, %v3660
    %v3662 = vrot.slane %v3636, %v3661
    %v3663 = vmul.f32 %v3630, %v3662
    %v3664 = vmul.f32 %v3631, %v3662
    %v3665 = vadd.f32 %v3657, %v3663
    %v3666 = vadd.f32 %v3658, %v3664
    %v3667 = vlaneseq
    %v3668 = vshrl.u32 %v3667, 7
    %v3669 = vsub.s32 4, %v3668
    %v3670 = vrot.slane %v3636, %v3669
    %v3671 = vmul.f32 %v3632, %v3670
    %v3672 = vmul.f32 %v3633, %v3670
    %v3673 = vadd.f32 %v3665, %v3671
    %v3674 = vadd.f32 %v3666, %v3672
    %v3675 = vadd.f32 %v3233, %v3673
    %v3676 = vadd.f32 %v3234, %v3674
    %v3677 = vmul.f32 %v3675, 0.5
    %v3678 = vmul.f32 %v3676, 0.5
    %v3679 = vadd.f32 %v3239, %v3677
    %v3680 = vadd.f32 %v3240, %v3678
    %v3681 = vmul.f32 %v3679, 2.0
    %v3682 = vmul.f32 %v3680, 2.0
    %v3683 = vsub.f32 %v3681, %v3245
    %v3684 = vsub.f32 %v3682, %v3246
    %v3685 = vadd.f32 %v3683, %v3673
    %v3686 = vadd.f32 %v3684, %v3674
    %v3687 = vmul.f32 %v76, 7.0
    %v3688 = vmul.f32 %v77, 7.0
    %v3689 = vmul.f32 %v78, 7.0
    %v3690 = vmul.f32 %v79, 7.0
    %v3691 = vadd.f32 %v3687, %v84
    %v3692 = vadd.f32 %v3688, %v85
    %v3693 = vadd.f32 %v3689, %v86
    %v3694 = vadd.f32 %v3690, %v87
    %3696 = vset.pattern.permute.xlu0 0
    %3697 = vperm.xlu0 %3696, %v3691
    %v3698 = vpop.permute.xlu0 %3697
    %3701 = vset.pattern.permute.xlu0 0
    %3702 = vperm.xlu0 %3701, %v3692
    %v3703 = vpop.permute.xlu0 %3702
    %3706 = vset.pattern.permute.xlu0 0
    %3707 = vperm.xlu0 %3706, %v3693
    %v3708 = vpop.permute.xlu0 %3707
    %3711 = vset.pattern.permute.xlu0 0
    %3712 = vperm.xlu0 %3711, %v3694
    %v3713 = vpop.permute.xlu0 %3712
    %3715 = vmatprep.subr.mxu0 0.0
    %3716 = vmatpush1.msra.mxu0 %v3685
    %3717 = vmatprep.subr.mxu0 0.0
    %3718 = vmatpush1.msra.mxu0 %v3686
    %3719 = vmatprep.subr.mxu0 0.0
    %3720 = vmatpush1.msra.mxu0 0.0
    %3721 = vmatprep.subr.mxu0 0.0
    %3722 = vmatpush1.msra.mxu0 0.0
    %3723 = vmatprep.subr.mxu0 0.0
    %3724 = vmatpush1.msra.mxu0 0.0
    %3725 = vmatprep.subr.mxu0 0.0
    %3726 = vmatpush1.msra.mxu0 0.0
    %3727 = vmatprep.subr.mxu0 0.0
    %3728 = vmatpush1.msra.mxu0 0.0
    %3729 = vmatprep.subr.mxu0 0.0
    %3730 = vmatpush1.msra.mxu0 0.0
    %3731 = vmatprep.subr.mxu0 0.0
    %3732 = vmatpush1.msra.mxu0 0.0
    %3733 = vmatprep.subr.mxu0 0.0
    %3734 = vmatpush1.msra.mxu0 0.0
    %3735 = vmatprep.subr.mxu0 0.0
    %3736 = vmatpush1.msra.mxu0 0.0
    %3737 = vmatprep.subr.mxu0 0.0
    %3738 = vmatpush1.msra.mxu0 0.0
    %3739 = vmatprep.subr.mxu0 0.0
    %3740 = vmatpush1.msra.mxu0 0.0
    %3741 = vmatprep.subr.mxu0 0.0
    %3742 = vmatpush1.msra.mxu0 0.0
    %3743 = vmatprep.subr.mxu0 0.0
    %3744 = vmatpush1.msra.mxu0 0.0
    %3745 = vmatprep.subr.mxu0 0.0
    %3746 = vmatpush1.msra.mxu0 0.0
    %3747 = vmatprep.subr.mxu0 0.0
    %3748 = vmatpush1.msra.mxu0 0.0
    %3749 = vmatprep.subr.mxu0 0.0
    %3750 = vmatpush1.msra.mxu0 0.0
    %3751 = vmatprep.subr.mxu0 0.0
    %3752 = vmatpush1.msra.mxu0 0.0
    %3753 = vmatprep.subr.mxu0 0.0
    %3754 = vmatpush1.msra.mxu0 0.0
    %3755 = vmatprep.subr.mxu0 0.0
    %3756 = vmatpush1.msra.mxu0 0.0
    %3757 = vmatprep.subr.mxu0 0.0
    %3758 = vmatpush1.msra.mxu0 0.0
    %3759 = vmatprep.subr.mxu0 0.0
    %3760 = vmatpush1.msra.mxu0 0.0
    %3761 = vmatprep.subr.mxu0 0.0
    %3762 = vmatpush1.msra.mxu0 0.0
    %3763 = vmatprep.subr.mxu0 0.0
    %3764 = vmatpush1.msra.mxu0 0.0
    %3765 = vmatprep.subr.mxu0 0.0
    %3766 = vmatpush1.msra.mxu0 0.0
    %3767 = vmatprep.subr.mxu0 0.0
    %3768 = vmatpush1.msra.mxu0 0.0
    %3769 = vmatprep.subr.mxu0 0.0
    %3770 = vmatpush1.msra.mxu0 0.0
    %3771 = vmatprep.subr.mxu0 0.0
    %3772 = vmatpush1.msra.mxu0 0.0
    %3773 = vmatprep.subr.mxu0 0.0
    %3774 = vmatpush1.msra.mxu0 0.0
    %3775 = vmatprep.subr.mxu0 0.0
    %3776 = vmatpush1.msra.mxu0 0.0
    %3777 = vmatprep.subr.mxu0 0.0
    %3778 = vmatpush1.msra.mxu0 0.0
    %3779 = vmatprep.mubr.f32.mxu0 0.0
    %3780 = vmatmul.mubr.f32.gmra.mrb[0].mxu0 %v545
    %v3781 = vpop.f32.mrb[0].mxu0
    %v3782 = vadd.f32 %v3698, %v3781
    %v3783 = vpop.f32.mrb[0].mxu0
    %3784 = vmatprep.mubr.f32.mxu0 0.0
    %3785 = vmatmul.mubr.f32.gmra.mrb[0].mxu0 %v548
    %v3786 = vpop.f32.mrb[0].mxu0
    %v3787 = vadd.f32 %v3703, %v3786
    %v3788 = vpop.f32.mrb[0].mxu0
    %3789 = vmatprep.mubr.f32.mxu0 0.0
    %3790 = vmatmul.mubr.f32.gmra.mrb[0].mxu0 %v551
    %v3791 = vpop.f32.mrb[0].mxu0
    %v3792 = vadd.f32 %v3708, %v3791
    %v3793 = vpop.f32.mrb[0].mxu0
    %3794 = vmatprep.mubr.f32.mxu0 0.0
    %3795 = vmatmul.mubr.f32.gmra.mrb[0].mxu0 %v554
    %v3796 = vpop.f32.mrb[0].mxu0
    %v3797 = vadd.f32 %v3713, %v3796
    %v3798 = vpop.f32.mrb[0].mxu0
    %3799 = vdwg.mxu0
    %v3800 = vmul.f32 %v3782, 0.909
    %v3801 = vmul.f32 %v3787, 0.909
    %v3802 = vmul.f32 %v3792, 0.909
    %v3803 = vmul.f32 %v3797, 0.909
    %v3804 = vxor.u32 %v3782, 2147483648
    %v3805 = vxor.u32 %v3787, 2147483648
    %v3806 = vxor.u32 %v3792, 2147483648
    %v3807 = vxor.u32 %v3797, 2147483648
    %v3808 = vmul.f32 %v3804, 1.442695
    %v3809 = vpow.pop %v3808
    %v3810 = vmul.f32 %v3805, 1.442695
    %v3811 = vpow.pop %v3810
    %v3812 = vmul.f32 %v3806, 1.442695
    %v3813 = vpow.pop %v3812
    %v3814 = vmul.f32 %v3807, 1.442695
    %v3815 = vpow.pop %v3814
    %v3816 = vadd.f32 %v3809, 1.0
    %v3817 = vadd.f32 %v3811, 1.0
    %v3818 = vadd.f32 %v3813, 1.0
    %v3819 = vadd.f32 %v3815, 1.0
    %v3820 = vrcp.pop %v3816
    %v3821 = vmul.f32 1.0, %v3820
    %v3822 = vrcp.pop %v3817
    %v3823 = vmul.f32 1.0, %v3822
    %v3824 = vrcp.pop %v3818
    %v3825 = vmul.f32 1.0, %v3824
    %v3826 = vrcp.pop %v3819
    %v3827 = vmul.f32 1.0, %v3826
    %v3828 = vmul.f32 %v3800, %v3821
    %v3829 = vmul.f32 %v3801, %v3823
    %v3830 = vmul.f32 %v3802, %v3825
    %v3831 = vmul.f32 %v3803, %v3827
    %3832 = vmatprep.subr.mxu0 0.0
    %3833 = vmatpush1.msra.mxu0 %v3828
    %3834 = vmatprep.subr.mxu0 0.0
    %3835 = vmatpush1.msra.mxu0 %v3829
    %3836 = vmatprep.subr.mxu0 0.0
    %3837 = vmatpush1.msra.mxu0 %v3830
    %3838 = vmatprep.subr.mxu0 0.0
    %3839 = vmatpush1.msra.mxu0 %v3831
    %3840 = vmatprep.subr.mxu0 0.0
    %3841 = vmatpush1.msra.mxu0 0.0
    %3842 = vmatprep.subr.mxu0 0.0
    %3843 = vmatpush1.msra.mxu0 0.0
    %3844 = vmatprep.subr.mxu0 0.0
    %3845 = vmatpush1.msra.mxu0 0.0
    %3846 = vmatprep.subr.mxu0 0.0
    %3847 = vmatpush1.msra.mxu0 0.0
    %3848 = vmatprep.subr.mxu0 0.0
    %3849 = vmatpush1.msra.mxu0 0.0
    %3850 = vmatprep.subr.mxu0 0.0
    %3851 = vmatpush1.msra.mxu0 0.0
    %3852 = vmatprep.subr.mxu0 0.0
    %3853 = vmatpush1.msra.mxu0 0.0
    %3854 = vmatprep.subr.mxu0 0.0
    %3855 = vmatpush1.msra.mxu0 0.0
    %3856 = vmatprep.subr.mxu0 0.0
    %3857 = vmatpush1.msra.mxu0 0.0
    %3858 = vmatprep.subr.mxu0 0.0
    %3859 = vmatpush1.msra.mxu0 0.0
    %3860 = vmatprep.subr.mxu0 0.0
    %3861 = vmatpush1.msra.mxu0 0.0
    %3862 = vmatprep.subr.mxu0 0.0
    %3863 = vmatpush1.msra.mxu0 0.0
    %3864 = vmatprep.subr.mxu0 0.0
    %3865 = vmatpush1.msra.mxu0 0.0
    %3866 = vmatprep.subr.mxu0 0.0
    %3867 = vmatpush1.msra.mxu0 0.0
    %3868 = vmatprep.subr.mxu0 0.0
    %3869 = vmatpush1.msra.mxu0 0.0
    %3870 = vmatprep.subr.mxu0 0.0
    %3871 = vmatpush1.msra.mxu0 0.0
    %3872 = vmatprep.subr.mxu0 0.0
    %3873 = vmatpush1.msra.mxu0 0.0
    %3874 = vmatprep.subr.mxu0 0.0
    %3875 = vmatpush1.msra.mxu0 0.0
    %3876 = vmatprep.subr.mxu0 0.0
    %3877 = vmatpush1.msra.mxu0 0.0
    %3878 = vmatprep.subr.mxu0 0.0
    %3879 = vmatpush1.msra.mxu0 0.0
    %3880 = vmatprep.subr.mxu0 0.0
    %3881 = vmatpush1.msra.mxu0 0.0
    %3882 = vmatprep.subr.mxu0 0.0
    %3883 = vmatpush1.msra.mxu0 0.0
    %3884 = vmatprep.subr.mxu0 0.0
    %3885 = vmatpush1.msra.mxu0 0.0
    %3886 = vmatprep.subr.mxu0 0.0
    %3887 = vmatpush1.msra.mxu0 0.0
    %3888 = vmatprep.subr.mxu0 0.0
    %3889 = vmatpush1.msra.mxu0 0.0
    %3890 = vmatprep.subr.mxu0 0.0
    %3891 = vmatpush1.msra.mxu0 0.0
    %3892 = vmatprep.subr.mxu0 0.0
    %3893 = vmatpush1.msra.mxu0 0.0
    %3894 = vmatprep.subr.mxu0 0.0
    %3895 = vmatpush1.msra.mxu0 0.0
    %3896 = vmatprep.mubr.f32.mxu0 0.0
    %3897 = vmatmul.mubr.f32.gmra.mrb[0].mxu0 %v694
    %v3898 = vpop.f32.mrb[0].mxu0
    %v3899 = vadd.f32 %v676, %v3898
    %v3900 = vpop.f32.mrb[0].mxu0
    %3901 = vmatprep.mubr.f32.mxu0 0.0
    %3902 = vmatmul.mubr.f32.gmra.mrb[0].mxu0 %v697
    %v3903 = vpop.f32.mrb[0].mxu0
    %v3904 = vadd.f32 %v681, %v3903
    %v3905 = vpop.f32.mrb[0].mxu0
    %3906 = vmatprep.mubr.f32.mxu0 0.0
    %3907 = vmatmul.mubr.f32.gmra.mrb[0].mxu0 %v700
    %v3908 = vpop.f32.mrb[0].mxu0
    %v3909 = vadd.f32 %v686, %v3908
    %v3910 = vpop.f32.mrb[0].mxu0
    %3911 = vmatprep.mubr.f32.mxu0 0.0
    %3912 = vmatmul.mubr.f32.gmra.mrb[0].mxu0 %v703
    %v3913 = vpop.f32.mrb[0].mxu0
    %v3914 = vadd.f32 %v691, %v3913
    %v3915 = vpop.f32.mrb[0].mxu0
    %3916 = vdwg.mxu0
    %v3917 = vmul.f32 %v3899, 0.909
    %v3918 = vmul.f32 %v3904, 0.909
    %v3919 = vmul.f32 %v3909, 0.909
    %v3920 = vmul.f32 %v3914, 0.909
    %v3921 = vxor.u32 %v3899, 2147483648
    %v3922 = vxor.u32 %v3904, 2147483648
    %v3923 = vxor.u32 %v3909, 2147483648
    %v3924 = vxor.u32 %v3914, 2147483648
    %v3925 = vmul.f32 %v3921, 1.442695
    %v3926 = vpow.pop %v3925
    %v3927 = vmul.f32 %v3922, 1.442695
    %v3928 = vpow.pop %v3927
    %v3929 = vmul.f32 %v3923, 1.442695
    %v3930 = vpow.pop %v3929
    %v3931 = vmul.f32 %v3924, 1.442695
    %v3932 = vpow.pop %v3931
    %v3933 = vadd.f32 %v3926, 1.0
    %v3934 = vadd.f32 %v3928, 1.0
    %v3935 = vadd.f32 %v3930, 1.0
    %v3936 = vadd.f32 %v3932, 1.0
    %v3937 = vrcp.pop %v3933
    %v3938 = vmul.f32 1.0, %v3937
    %v3939 = vrcp.pop %v3934
    %v3940 = vmul.f32 1.0, %v3939
    %v3941 = vrcp.pop %v3935
    %v3942 = vmul.f32 1.0, %v3941
    %v3943 = vrcp.pop %v3936
    %v3944 = vmul.f32 1.0, %v3943
    %v3945 = vmul.f32 %v3917, %v3938
    %v3946 = vmul.f32 %v3918, %v3940
    %v3947 = vmul.f32 %v3919, %v3942
    %v3948 = vmul.f32 %v3920, %v3944
    %3949 = vmatprep.subr.mxu0 0.0
    %3950 = vmatpush1.msra.mxu0 %v3945
    %3951 = vmatprep.subr.mxu0 0.0
    %3952 = vmatpush1.msra.mxu0 %v3946
    %3953 = vmatprep.subr.mxu0 0.0
    %3954 = vmatpush1.msra.mxu0 %v3947
    %3955 = vmatprep.subr.mxu0 0.0
    %3956 = vmatpush1.msra.mxu0 %v3948
    %3957 = vmatprep.subr.mxu0 0.0
    %3958 = vmatpush1.msra.mxu0 0.0
    %3959 = vmatprep.subr.mxu0 0.0
    %3960 = vmatpush1.msra.mxu0 0.0
    %3961 = vmatprep.subr.mxu0 0.0
    %3962 = vmatpush1.msra.mxu0 0.0
    %3963 = vmatprep.subr.mxu0 0.0
    %3964 = vmatpush1.msra.mxu0 0.0
    %3965 = vmatprep.subr.mxu0 0.0
    %3966 = vmatpush1.msra.mxu0 0.0
    %3967 = vmatprep.subr.mxu0 0.0
    %3968 = vmatpush1.msra.mxu0 0.0
    %3969 = vmatprep.subr.mxu0 0.0
    %3970 = vmatpush1.msra.mxu0 0.0
    %3971 = vmatprep.subr.mxu0 0.0
    %3972 = vmatpush1.msra.mxu0 0.0
    %3973 = vmatprep.subr.mxu0 0.0
    %3974 = vmatpush1.msra.mxu0 0.0
    %3975 = vmatprep.subr.mxu0 0.0
    %3976 = vmatpush1.msra.mxu0 0.0
    %3977 = vmatprep.subr.mxu0 0.0
    %3978 = vmatpush1.msra.mxu0 0.0
    %3979 = vmatprep.subr.mxu0 0.0
    %3980 = vmatpush1.msra.mxu0 0.0
    %3981 = vmatprep.subr.mxu0 0.0
    %3982 = vmatpush1.msra.mxu0 0.0
    %3983 = vmatprep.subr.mxu0 0.0
    %3984 = vmatpush1.msra.mxu0 0.0
    %3985 = vmatprep.subr.mxu0 0.0
    %3986 = vmatpush1.msra.mxu0 0.0
    %3987 = vmatprep.subr.mxu0 0.0
    %3988 = vmatpush1.msra.mxu0 0.0
    %3989 = vmatprep.subr.mxu0 0.0
    %3990 = vmatpush1.msra.mxu0 0.0
    %3991 = vmatprep.subr.mxu0 0.0
    %3992 = vmatpush1.msra.mxu0 0.0
    %3993 = vmatprep.subr.mxu0 0.0
    %3994 = vmatpush1.msra.mxu0 0.0
    %3995 = vmatprep.subr.mxu0 0.0
    %3996 = vmatpush1.msra.mxu0 0.0
    %3997 = vmatprep.subr.mxu0 0.0
    %3998 = vmatpush1.msra.mxu0 0.0
    %3999 = vmatprep.subr.mxu0 0.0
    %4000 = vmatpush1.msra.mxu0 0.0
    %4001 = vmatprep.subr.mxu0 0.0
    %4002 = vmatpush1.msra.mxu0 0.0
    %4003 = vmatprep.subr.mxu0 0.0
    %4004 = vmatpush1.msra.mxu0 0.0
    %4005 = vmatprep.subr.mxu0 0.0
    %4006 = vmatpush1.msra.mxu0 0.0
    %4007 = vmatprep.subr.mxu0 0.0
    %4008 = vmatpush1.msra.mxu0 0.0
    %4009 = vmatprep.subr.mxu0 0.0
    %4010 = vmatpush1.msra.mxu0 0.0
    %4011 = vmatprep.subr.mxu0 0.0
    %4012 = vmatpush1.msra.mxu0 0.0
    %4013 = vmatprep.mubr.f32.mxu0 0.0
    %4014 = vmatmul.mubr.f32.gmra.mrb[0].mxu0 %v873
    %v4015 = vpop.f32.mrb[0].mxu0
    %v4016 = vadd.f32 %v825, %v4015
    %v4017 = vpop.f32.mrb[0].mxu0
    %4018 = vmatprep.mubr.f32.mxu0 0.0
    %4019 = vmatmul.mubr.f32.gmra.mrb[0].mxu0 %v876
    %v4020 = vpop.f32.mrb[0].mxu0
    %v4021 = vadd.f32 %v830, %v4020
    %v4022 = vpop.f32.mrb[0].mxu0
    %4023 = vmatprep.mubr.f32.mxu0 0.0
    %4024 = vmatmul.mubr.f32.gmra.mrb[0].mxu0 %v879
    %v4025 = vpop.f32.mrb[0].mxu0
    %v4026 = vadd.f32 %v835, %v4025
    %v4027 = vpop.f32.mrb[0].mxu0
    %4028 = vmatprep.mubr.f32.mxu0 0.0
    %4029 = vmatmul.mubr.f32.gmra.mrb[0].mxu0 %v882
    %v4030 = vpop.f32.mrb[0].mxu0
    %v4031 = vadd.f32 %v840, %v4030
    %v4032 = vpop.f32.mrb[0].mxu0
    %4033 = vmatprep.mubr.f32.mxu0 0.0
    %4034 = vmatmul.mubr.f32.gmra.mrb[0].mxu0 %v885
    %v4035 = vpop.f32.mrb[0].mxu0
    %v4036 = vadd.f32 %v845, %v4035
    %v4037 = vpop.f32.mrb[0].mxu0
    %4038 = vmatprep.mubr.f32.mxu0 0.0
    %4039 = vmatmul.mubr.f32.gmra.mrb[0].mxu0 %v888
    %v4040 = vpop.f32.mrb[0].mxu0
    %v4041 = vadd.f32 %v850, %v4040
    %v4042 = vpop.f32.mrb[0].mxu0
    %4043 = vmatprep.mubr.f32.mxu0 0.0
    %4044 = vmatmul.mubr.f32.gmra.mrb[0].mxu0 %v891
    %v4045 = vpop.f32.mrb[0].mxu0
    %v4046 = vadd.f32 %v855, %v4045
    %v4047 = vpop.f32.mrb[0].mxu0
    %4048 = vmatprep.mubr.f32.mxu0 0.0
    %4049 = vmatmul.mubr.f32.gmra.mrb[0].mxu0 %v894
    %v4050 = vpop.f32.mrb[0].mxu0
    %v4051 = vadd.f32 %v860, %v4050
    %v4052 = vpop.f32.mrb[0].mxu0
    %4053 = vmatprep.mubr.f32.mxu0 0.0
    %4054 = vmatmul.mubr.f32.gmra.mrb[0].mxu0 %v897
    %v4055 = vpop.f32.mrb[0].mxu0
    %v4056 = vadd.f32 %v865, %v4055
    %v4057 = vpop.f32.mrb[0].mxu0
    %4058 = vmatprep.mubr.f32.mxu0 0.0
    %4059 = vmatmul.mubr.f32.gmra.mrb[0].mxu0 %v900
    %v4060 = vpop.f32.mrb[0].mxu0
    %v4061 = vadd.f32 %v870, %v4060
    %v4062 = vpop.f32.mrb[0].mxu0
    %4063 = vdwg.mxu0
    %v4064 = vtanh.pop %v4016
    %v4065 = vtanh.pop %v4021
    %v4066 = vtanh.pop %v4026
    %v4067 = vtanh.pop %v4031
    %v4068 = vtanh.pop %v4036
    %v4069 = vtanh.pop %v4041
    %v4070 = vtanh.pop %v4046
    %v4071 = vtanh.pop %v4051
    %v4072 = vtanh.pop %v4056
    %v4073 = vtanh.pop %v4061
    %s4074 = scalar_lea.vmem %s0, 56
    %v4075 = vld [vmem:[%s4074] sm:$0x1f]
    %v4076 = vsub.f32 %v4075, %v3635
    %v4077 = vlaneseq
    %v4078 = vshrl.u32 %v4077, 7
    %v4079 = vsub.s32 0, %v4078
    %v4080 = vrot.slane %v4076, %v4079
    %v4081 = vmul.f32 %v4064, %v4080
    %v4082 = vmul.f32 %v4065, %v4080
    %v4083 = vlaneseq
    %v4084 = vshrl.u32 %v4083, 7
    %v4085 = vsub.s32 1, %v4084
    %v4086 = vrot.slane %v4076, %v4085
    %v4087 = vmul.f32 %v4066, %v4086
    %v4088 = vmul.f32 %v4067, %v4086
    %v4089 = vadd.f32 %v4081, %v4087
    %v4090 = vadd.f32 %v4082, %v4088
    %v4091 = vlaneseq
    %v4092 = vshrl.u32 %v4091, 7
    %v4093 = vsub.s32 2, %v4092
    %v4094 = vrot.slane %v4076, %v4093
    %v4095 = vmul.f32 %v4068, %v4094
    %v4096 = vmul.f32 %v4069, %v4094
    %v4097 = vadd.f32 %v4089, %v4095
    %v4098 = vadd.f32 %v4090, %v4096
    %v4099 = vlaneseq
    %v4100 = vshrl.u32 %v4099, 7
    %v4101 = vsub.s32 3, %v4100
    %v4102 = vrot.slane %v4076, %v4101
    %v4103 = vmul.f32 %v4070, %v4102
    %v4104 = vmul.f32 %v4071, %v4102
    %v4105 = vadd.f32 %v4097, %v4103
    %v4106 = vadd.f32 %v4098, %v4104
    %v4107 = vlaneseq
    %v4108 = vshrl.u32 %v4107, 7
    %v4109 = vsub.s32 4, %v4108
    %v4110 = vrot.slane %v4076, %v4109
    %v4111 = vmul.f32 %v4072, %v4110
    %v4112 = vmul.f32 %v4073, %v4110
    %v4113 = vadd.f32 %v4105, %v4111
    %v4114 = vadd.f32 %v4106, %v4112
    %v4115 = vadd.f32 %v3673, %v4113
    %v4116 = vadd.f32 %v3674, %v4114
    %v4117 = vmul.f32 %v4115, 0.5
    %v4118 = vmul.f32 %v4116, 0.5
    %v4119 = vadd.f32 %v3679, %v4117
    %v4120 = vadd.f32 %v3680, %v4118
    %v4121 = vmul.f32 %v4119, 2.0
    %v4122 = vmul.f32 %v4120, 2.0
    %v4123 = vsub.f32 %v4121, %v3685
    %v4124 = vsub.f32 %v4122, %v3686
    %v4125 = vadd.f32 %v4123, %v4113
    %v4126 = vadd.f32 %v4124, %v4114
    %v4127 = vmul.f32 %v76, 8.0
    %v4128 = vmul.f32 %v77, 8.0
    %v4129 = vmul.f32 %v78, 8.0
    %v4130 = vmul.f32 %v79, 8.0
    %v4131 = vadd.f32 %v4127, %v84
    %v4132 = vadd.f32 %v4128, %v85
    %v4133 = vadd.f32 %v4129, %v86
    %v4134 = vadd.f32 %v4130, %v87
    %4136 = vset.pattern.permute.xlu0 0
    %4137 = vperm.xlu0 %4136, %v4131
    %v4138 = vpop.permute.xlu0 %4137
    %4141 = vset.pattern.permute.xlu0 0
    %4142 = vperm.xlu0 %4141, %v4132
    %v4143 = vpop.permute.xlu0 %4142
    %4146 = vset.pattern.permute.xlu0 0
    %4147 = vperm.xlu0 %4146, %v4133
    %v4148 = vpop.permute.xlu0 %4147
    %4151 = vset.pattern.permute.xlu0 0
    %4152 = vperm.xlu0 %4151, %v4134
    %v4153 = vpop.permute.xlu0 %4152
    %4155 = vmatprep.subr.mxu0 0.0
    %4156 = vmatpush1.msra.mxu0 %v4125
    %4157 = vmatprep.subr.mxu0 0.0
    %4158 = vmatpush1.msra.mxu0 %v4126
    %4159 = vmatprep.subr.mxu0 0.0
    %4160 = vmatpush1.msra.mxu0 0.0
    %4161 = vmatprep.subr.mxu0 0.0
    %4162 = vmatpush1.msra.mxu0 0.0
    %4163 = vmatprep.subr.mxu0 0.0
    %4164 = vmatpush1.msra.mxu0 0.0
    %4165 = vmatprep.subr.mxu0 0.0
    %4166 = vmatpush1.msra.mxu0 0.0
    %4167 = vmatprep.subr.mxu0 0.0
    %4168 = vmatpush1.msra.mxu0 0.0
    %4169 = vmatprep.subr.mxu0 0.0
    %4170 = vmatpush1.msra.mxu0 0.0
    %4171 = vmatprep.subr.mxu0 0.0
    %4172 = vmatpush1.msra.mxu0 0.0
    %4173 = vmatprep.subr.mxu0 0.0
    %4174 = vmatpush1.msra.mxu0 0.0
    %4175 = vmatprep.subr.mxu0 0.0
    %4176 = vmatpush1.msra.mxu0 0.0
    %4177 = vmatprep.subr.mxu0 0.0
    %4178 = vmatpush1.msra.mxu0 0.0
    %4179 = vmatprep.subr.mxu0 0.0
    %4180 = vmatpush1.msra.mxu0 0.0
    %4181 = vmatprep.subr.mxu0 0.0
    %4182 = vmatpush1.msra.mxu0 0.0
    %4183 = vmatprep.subr.mxu0 0.0
    %4184 = vmatpush1.msra.mxu0 0.0
    %4185 = vmatprep.subr.mxu0 0.0
    %4186 = vmatpush1.msra.mxu0 0.0
    %4187 = vmatprep.subr.mxu0 0.0
    %4188 = vmatpush1.msra.mxu0 0.0
    %4189 = vmatprep.subr.mxu0 0.0
    %4190 = vmatpush1.msra.mxu0 0.0
    %4191 = vmatprep.subr.mxu0 0.0
    %4192 = vmatpush1.msra.mxu0 0.0
    %4193 = vmatprep.subr.mxu0 0.0
    %4194 = vmatpush1.msra.mxu0 0.0
    %4195 = vmatprep.subr.mxu0 0.0
    %4196 = vmatpush1.msra.mxu0 0.0
    %4197 = vmatprep.subr.mxu0 0.0
    %4198 = vmatpush1.msra.mxu0 0.0
    %4199 = vmatprep.subr.mxu0 0.0
    %4200 = vmatpush1.msra.mxu0 0.0
    %4201 = vmatprep.subr.mxu0 0.0
    %4202 = vmatpush1.msra.mxu0 0.0
    %4203 = vmatprep.subr.mxu0 0.0
    %4204 = vmatpush1.msra.mxu0 0.0
    %4205 = vmatprep.subr.mxu0 0.0
    %4206 = vmatpush1.msra.mxu0 0.0
    %4207 = vmatprep.subr.mxu0 0.0
    %4208 = vmatpush1.msra.mxu0 0.0
    %4209 = vmatprep.subr.mxu0 0.0
    %4210 = vmatpush1.msra.mxu0 0.0
    %4211 = vmatprep.subr.mxu0 0.0
    %4212 = vmatpush1.msra.mxu0 0.0
    %4213 = vmatprep.subr.mxu0 0.0
    %4214 = vmatpush1.msra.mxu0 0.0
    %4215 = vmatprep.subr.mxu0 0.0
    %4216 = vmatpush1.msra.mxu0 0.0
    %4217 = vmatprep.subr.mxu0 0.0
    %4218 = vmatpush1.msra.mxu0 0.0
    %4219 = vmatprep.mubr.f32.mxu0 0.0
    %4220 = vmatmul.mubr.f32.gmra.mrb[0].mxu0 %v545
    %v4221 = vpop.f32.mrb[0].mxu0
    %v4222 = vadd.f32 %v4138, %v4221
    %v4223 = vpop.f32.mrb[0].mxu0
    %4224 = vmatprep.mubr.f32.mxu0 0.0
    %4225 = vmatmul.mubr.f32.gmra.mrb[0].mxu0 %v548
    %v4226 = vpop.f32.mrb[0].mxu0
    %v4227 = vadd.f32 %v4143, %v4226
    %v4228 = vpop.f32.mrb[0].mxu0
    %4229 = vmatprep.mubr.f32.mxu0 0.0
    %4230 = vmatmul.mubr.f32.gmra.mrb[0].mxu0 %v551
    %v4231 = vpop.f32.mrb[0].mxu0
    %v4232 = vadd.f32 %v4148, %v4231
    %v4233 = vpop.f32.mrb[0].mxu0
    %4234 = vmatprep.mubr.f32.mxu0 0.0
    %4235 = vmatmul.mubr.f32.gmra.mrb[0].mxu0 %v554
    %v4236 = vpop.f32.mrb[0].mxu0
    %v4237 = vadd.f32 %v4153, %v4236
    %v4238 = vpop.f32.mrb[0].mxu0
    %4239 = vdwg.mxu0
    %v4240 = vmul.f32 %v4222, 0.909
    %v4241 = vmul.f32 %v4227, 0.909
    %v4242 = vmul.f32 %v4232, 0.909
    %v4243 = vmul.f32 %v4237, 0.909
    %v4244 = vxor.u32 %v4222, 2147483648
    %v4245 = vxor.u32 %v4227, 2147483648
    %v4246 = vxor.u32 %v4232, 2147483648
    %v4247 = vxor.u32 %v4237, 2147483648
    %v4248 = vmul.f32 %v4244, 1.442695
    %v4249 = vpow.pop %v4248
    %v4250 = vmul.f32 %v4245, 1.442695
    %v4251 = vpow.pop %v4250
    %v4252 = vmul.f32 %v4246, 1.442695
    %v4253 = vpow.pop %v4252
    %v4254 = vmul.f32 %v4247, 1.442695
    %v4255 = vpow.pop %v4254
    %v4256 = vadd.f32 %v4249, 1.0
    %v4257 = vadd.f32 %v4251, 1.0
    %v4258 = vadd.f32 %v4253, 1.0
    %v4259 = vadd.f32 %v4255, 1.0
    %v4260 = vrcp.pop %v4256
    %v4261 = vmul.f32 1.0, %v4260
    %v4262 = vrcp.pop %v4257
    %v4263 = vmul.f32 1.0, %v4262
    %v4264 = vrcp.pop %v4258
    %v4265 = vmul.f32 1.0, %v4264
    %v4266 = vrcp.pop %v4259
    %v4267 = vmul.f32 1.0, %v4266
    %v4268 = vmul.f32 %v4240, %v4261
    %v4269 = vmul.f32 %v4241, %v4263
    %v4270 = vmul.f32 %v4242, %v4265
    %v4271 = vmul.f32 %v4243, %v4267
    %4272 = vmatprep.subr.mxu0 0.0
    %4273 = vmatpush1.msra.mxu0 %v4268
    %4274 = vmatprep.subr.mxu0 0.0
    %4275 = vmatpush1.msra.mxu0 %v4269
    %4276 = vmatprep.subr.mxu0 0.0
    %4277 = vmatpush1.msra.mxu0 %v4270
    %4278 = vmatprep.subr.mxu0 0.0
    %4279 = vmatpush1.msra.mxu0 %v4271
    %4280 = vmatprep.subr.mxu0 0.0
    %4281 = vmatpush1.msra.mxu0 0.0
    %4282 = vmatprep.subr.mxu0 0.0
    %4283 = vmatpush1.msra.mxu0 0.0
    %4284 = vmatprep.subr.mxu0 0.0
    %4285 = vmatpush1.msra.mxu0 0.0
    %4286 = vmatprep.subr.mxu0 0.0
    %4287 = vmatpush1.msra.mxu0 0.0
    %4288 = vmatprep.subr.mxu0 0.0
    %4289 = vmatpush1.msra.mxu0 0.0
    %4290 = vmatprep.subr.mxu0 0.0
    %4291 = vmatpush1.msra.mxu0 0.0
    %4292 = vmatprep.subr.mxu0 0.0
    %4293 = vmatpush1.msra.mxu0 0.0
    %4294 = vmatprep.subr.mxu0 0.0
    %4295 = vmatpush1.msra.mxu0 0.0
    %4296 = vmatprep.subr.mxu0 0.0
    %4297 = vmatpush1.msra.mxu0 0.0
    %4298 = vmatprep.subr.mxu0 0.0
    %4299 = vmatpush1.msra.mxu0 0.0
    %4300 = vmatprep.subr.mxu0 0.0
    %4301 = vmatpush1.msra.mxu0 0.0
    %4302 = vmatprep.subr.mxu0 0.0
    %4303 = vmatpush1.msra.mxu0 0.0
    %4304 = vmatprep.subr.mxu0 0.0
    %4305 = vmatpush1.msra.mxu0 0.0
    %4306 = vmatprep.subr.mxu0 0.0
    %4307 = vmatpush1.msra.mxu0 0.0
    %4308 = vmatprep.subr.mxu0 0.0
    %4309 = vmatpush1.msra.mxu0 0.0
    %4310 = vmatprep.subr.mxu0 0.0
    %4311 = vmatpush1.msra.mxu0 0.0
    %4312 = vmatprep.subr.mxu0 0.0
    %4313 = vmatpush1.msra.mxu0 0.0
    %4314 = vmatprep.subr.mxu0 0.0
    %4315 = vmatpush1.msra.mxu0 0.0
    %4316 = vmatprep.subr.mxu0 0.0
    %4317 = vmatpush1.msra.mxu0 0.0
    %4318 = vmatprep.subr.mxu0 0.0
    %4319 = vmatpush1.msra.mxu0 0.0
    %4320 = vmatprep.subr.mxu0 0.0
    %4321 = vmatpush1.msra.mxu0 0.0
    %4322 = vmatprep.subr.mxu0 0.0
    %4323 = vmatpush1.msra.mxu0 0.0
    %4324 = vmatprep.subr.mxu0 0.0
    %4325 = vmatpush1.msra.mxu0 0.0
    %4326 = vmatprep.subr.mxu0 0.0
    %4327 = vmatpush1.msra.mxu0 0.0
    %4328 = vmatprep.subr.mxu0 0.0
    %4329 = vmatpush1.msra.mxu0 0.0
    %4330 = vmatprep.subr.mxu0 0.0
    %4331 = vmatpush1.msra.mxu0 0.0
    %4332 = vmatprep.subr.mxu0 0.0
    %4333 = vmatpush1.msra.mxu0 0.0
    %4334 = vmatprep.subr.mxu0 0.0
    %4335 = vmatpush1.msra.mxu0 0.0
    %4336 = vmatprep.mubr.f32.mxu0 0.0
    %4337 = vmatmul.mubr.f32.gmra.mrb[0].mxu0 %v694
    %v4338 = vpop.f32.mrb[0].mxu0
    %v4339 = vadd.f32 %v676, %v4338
    %v4340 = vpop.f32.mrb[0].mxu0
    %4341 = vmatprep.mubr.f32.mxu0 0.0
    %4342 = vmatmul.mubr.f32.gmra.mrb[0].mxu0 %v697
    %v4343 = vpop.f32.mrb[0].mxu0
    %v4344 = vadd.f32 %v681, %v4343
    %v4345 = vpop.f32.mrb[0].mxu0
    %4346 = vmatprep.mubr.f32.mxu0 0.0
    %4347 = vmatmul.mubr.f32.gmra.mrb[0].mxu0 %v700
    %v4348 = vpop.f32.mrb[0].mxu0
    %v4349 = vadd.f32 %v686, %v4348
    %v4350 = vpop.f32.mrb[0].mxu0
    %4351 = vmatprep.mubr.f32.mxu0 0.0
    %4352 = vmatmul.mubr.f32.gmra.mrb[0].mxu0 %v703
    %v4353 = vpop.f32.mrb[0].mxu0
    %v4354 = vadd.f32 %v691, %v4353
    %v4355 = vpop.f32.mrb[0].mxu0
    %4356 = vdwg.mxu0
    %v4357 = vmul.f32 %v4339, 0.909
    %v4358 = vmul.f32 %v4344, 0.909
    %v4359 = vmul.f32 %v4349, 0.909
    %v4360 = vmul.f32 %v4354, 0.909
    %v4361 = vxor.u32 %v4339, 2147483648
    %v4362 = vxor.u32 %v4344, 2147483648
    %v4363 = vxor.u32 %v4349, 2147483648
    %v4364 = vxor.u32 %v4354, 2147483648
    %v4365 = vmul.f32 %v4361, 1.442695
    %v4366 = vpow.pop %v4365
    %v4367 = vmul.f32 %v4362, 1.442695
    %v4368 = vpow.pop %v4367
    %v4369 = vmul.f32 %v4363, 1.442695
    %v4370 = vpow.pop %v4369
    %v4371 = vmul.f32 %v4364, 1.442695
    %v4372 = vpow.pop %v4371
    %v4373 = vadd.f32 %v4366, 1.0
    %v4374 = vadd.f32 %v4368, 1.0
    %v4375 = vadd.f32 %v4370, 1.0
    %v4376 = vadd.f32 %v4372, 1.0
    %v4377 = vrcp.pop %v4373
    %v4378 = vmul.f32 1.0, %v4377
    %v4379 = vrcp.pop %v4374
    %v4380 = vmul.f32 1.0, %v4379
    %v4381 = vrcp.pop %v4375
    %v4382 = vmul.f32 1.0, %v4381
    %v4383 = vrcp.pop %v4376
    %v4384 = vmul.f32 1.0, %v4383
    %v4385 = vmul.f32 %v4357, %v4378
    %v4386 = vmul.f32 %v4358, %v4380
    %v4387 = vmul.f32 %v4359, %v4382
    %v4388 = vmul.f32 %v4360, %v4384
    %4389 = vmatprep.subr.mxu0 0.0
    %4390 = vmatpush1.msra.mxu0 %v4385
    %4391 = vmatprep.subr.mxu0 0.0
    %4392 = vmatpush1.msra.mxu0 %v4386
    %4393 = vmatprep.subr.mxu0 0.0
    %4394 = vmatpush1.msra.mxu0 %v4387
    %4395 = vmatprep.subr.mxu0 0.0
    %4396 = vmatpush1.msra.mxu0 %v4388
    %4397 = vmatprep.subr.mxu0 0.0
    %4398 = vmatpush1.msra.mxu0 0.0
    %4399 = vmatprep.subr.mxu0 0.0
    %4400 = vmatpush1.msra.mxu0 0.0
    %4401 = vmatprep.subr.mxu0 0.0
    %4402 = vmatpush1.msra.mxu0 0.0
    %4403 = vmatprep.subr.mxu0 0.0
    %4404 = vmatpush1.msra.mxu0 0.0
    %4405 = vmatprep.subr.mxu0 0.0
    %4406 = vmatpush1.msra.mxu0 0.0
    %4407 = vmatprep.subr.mxu0 0.0
    %4408 = vmatpush1.msra.mxu0 0.0
    %4409 = vmatprep.subr.mxu0 0.0
    %4410 = vmatpush1.msra.mxu0 0.0
    %4411 = vmatprep.subr.mxu0 0.0
    %4412 = vmatpush1.msra.mxu0 0.0
    %4413 = vmatprep.subr.mxu0 0.0
    %4414 = vmatpush1.msra.mxu0 0.0
    %4415 = vmatprep.subr.mxu0 0.0
    %4416 = vmatpush1.msra.mxu0 0.0
    %4417 = vmatprep.subr.mxu0 0.0
    %4418 = vmatpush1.msra.mxu0 0.0
    %4419 = vmatprep.subr.mxu0 0.0
    %4420 = vmatpush1.msra.mxu0 0.0
    %4421 = vmatprep.subr.mxu0 0.0
    %4422 = vmatpush1.msra.mxu0 0.0
    %4423 = vmatprep.subr.mxu0 0.0
    %4424 = vmatpush1.msra.mxu0 0.0
    %4425 = vmatprep.subr.mxu0 0.0
    %4426 = vmatpush1.msra.mxu0 0.0
    %4427 = vmatprep.subr.mxu0 0.0
    %4428 = vmatpush1.msra.mxu0 0.0
    %4429 = vmatprep.subr.mxu0 0.0
    %4430 = vmatpush1.msra.mxu0 0.0
    %4431 = vmatprep.subr.mxu0 0.0
    %4432 = vmatpush1.msra.mxu0 0.0
    %4433 = vmatprep.subr.mxu0 0.0
    %4434 = vmatpush1.msra.mxu0 0.0
    %4435 = vmatprep.subr.mxu0 0.0
    %4436 = vmatpush1.msra.mxu0 0.0
    %4437 = vmatprep.subr.mxu0 0.0
    %4438 = vmatpush1.msra.mxu0 0.0
    %4439 = vmatprep.subr.mxu0 0.0
    %4440 = vmatpush1.msra.mxu0 0.0
    %4441 = vmatprep.subr.mxu0 0.0
    %4442 = vmatpush1.msra.mxu0 0.0
    %4443 = vmatprep.subr.mxu0 0.0
    %4444 = vmatpush1.msra.mxu0 0.0
    %4445 = vmatprep.subr.mxu0 0.0
    %4446 = vmatpush1.msra.mxu0 0.0
    %4447 = vmatprep.subr.mxu0 0.0
    %4448 = vmatpush1.msra.mxu0 0.0
    %4449 = vmatprep.subr.mxu0 0.0
    %4450 = vmatpush1.msra.mxu0 0.0
    %4451 = vmatprep.subr.mxu0 0.0
    %4452 = vmatpush1.msra.mxu0 0.0
    %4453 = vmatprep.mubr.f32.mxu0 0.0
    %4454 = vmatmul.mubr.f32.gmra.mrb[0].mxu0 %v873
    %v4455 = vpop.f32.mrb[0].mxu0
    %v4456 = vadd.f32 %v825, %v4455
    %v4457 = vpop.f32.mrb[0].mxu0
    %4458 = vmatprep.mubr.f32.mxu0 0.0
    %4459 = vmatmul.mubr.f32.gmra.mrb[0].mxu0 %v876
    %v4460 = vpop.f32.mrb[0].mxu0
    %v4461 = vadd.f32 %v830, %v4460
    %v4462 = vpop.f32.mrb[0].mxu0
    %4463 = vmatprep.mubr.f32.mxu0 0.0
    %4464 = vmatmul.mubr.f32.gmra.mrb[0].mxu0 %v879
    %v4465 = vpop.f32.mrb[0].mxu0
    %v4466 = vadd.f32 %v835, %v4465
    %v4467 = vpop.f32.mrb[0].mxu0
    %4468 = vmatprep.mubr.f32.mxu0 0.0
    %4469 = vmatmul.mubr.f32.gmra.mrb[0].mxu0 %v882
    %v4470 = vpop.f32.mrb[0].mxu0
    %v4471 = vadd.f32 %v840, %v4470
    %v4472 = vpop.f32.mrb[0].mxu0
    %4473 = vmatprep.mubr.f32.mxu0 0.0
    %4474 = vmatmul.mubr.f32.gmra.mrb[0].mxu0 %v885
    %v4475 = vpop.f32.mrb[0].mxu0
    %v4476 = vadd.f32 %v845, %v4475
    %v4477 = vpop.f32.mrb[0].mxu0
    %4478 = vmatprep.mubr.f32.mxu0 0.0
    %4479 = vmatmul.mubr.f32.gmra.mrb[0].mxu0 %v888
    %v4480 = vpop.f32.mrb[0].mxu0
    %v4481 = vadd.f32 %v850, %v4480
    %v4482 = vpop.f32.mrb[0].mxu0
    %4483 = vmatprep.mubr.f32.mxu0 0.0
    %4484 = vmatmul.mubr.f32.gmra.mrb[0].mxu0 %v891
    %v4485 = vpop.f32.mrb[0].mxu0
    %v4486 = vadd.f32 %v855, %v4485
    %v4487 = vpop.f32.mrb[0].mxu0
    %4488 = vmatprep.mubr.f32.mxu0 0.0
    %4489 = vmatmul.mubr.f32.gmra.mrb[0].mxu0 %v894
    %v4490 = vpop.f32.mrb[0].mxu0
    %v4491 = vadd.f32 %v860, %v4490
    %v4492 = vpop.f32.mrb[0].mxu0
    %4493 = vmatprep.mubr.f32.mxu0 0.0
    %4494 = vmatmul.mubr.f32.gmra.mrb[0].mxu0 %v897
    %v4495 = vpop.f32.mrb[0].mxu0
    %v4496 = vadd.f32 %v865, %v4495
    %v4497 = vpop.f32.mrb[0].mxu0
    %4498 = vmatprep.mubr.f32.mxu0 0.0
    %4499 = vmatmul.mubr.f32.gmra.mrb[0].mxu0 %v900
    %v4500 = vpop.f32.mrb[0].mxu0
    %v4501 = vadd.f32 %v870, %v4500
    %v4502 = vpop.f32.mrb[0].mxu0
    %4503 = vdwg.mxu0
    %v4504 = vtanh.pop %v4456
    %v4505 = vtanh.pop %v4461
    %v4506 = vtanh.pop %v4466
    %v4507 = vtanh.pop %v4471
    %v4508 = vtanh.pop %v4476
    %v4509 = vtanh.pop %v4481
    %v4510 = vtanh.pop %v4486
    %v4511 = vtanh.pop %v4491
    %v4512 = vtanh.pop %v4496
    %v4513 = vtanh.pop %v4501
    %s4514 = scalar_lea.vmem %s0, 64
    %v4515 = vld [vmem:[%s4514] sm:$0x1f]
    %v4516 = vsub.f32 %v4515, %v4075
    %v4517 = vlaneseq
    %v4518 = vshrl.u32 %v4517, 7
    %v4519 = vsub.s32 0, %v4518
    %v4520 = vrot.slane %v4516, %v4519
    %v4521 = vmul.f32 %v4504, %v4520
    %v4522 = vmul.f32 %v4505, %v4520
    %v4523 = vlaneseq
    %v4524 = vshrl.u32 %v4523, 7
    %v4525 = vsub.s32 1, %v4524
    %v4526 = vrot.slane %v4516, %v4525
    %v4527 = vmul.f32 %v4506, %v4526
    %v4528 = vmul.f32 %v4507, %v4526
    %v4529 = vadd.f32 %v4521, %v4527
    %v4530 = vadd.f32 %v4522, %v4528
    %v4531 = vlaneseq
    %v4532 = vshrl.u32 %v4531, 7
    %v4533 = vsub.s32 2, %v4532
    %v4534 = vrot.slane %v4516, %v4533
    %v4535 = vmul.f32 %v4508, %v4534
    %v4536 = vmul.f32 %v4509, %v4534
    %v4537 = vadd.f32 %v4529, %v4535
    %v4538 = vadd.f32 %v4530, %v4536
    %v4539 = vlaneseq
    %v4540 = vshrl.u32 %v4539, 7
    %v4541 = vsub.s32 3, %v4540
    %v4542 = vrot.slane %v4516, %v4541
    %v4543 = vmul.f32 %v4510, %v4542
    %v4544 = vmul.f32 %v4511, %v4542
    %v4545 = vadd.f32 %v4537, %v4543
    %v4546 = vadd.f32 %v4538, %v4544
    %v4547 = vlaneseq
    %v4548 = vshrl.u32 %v4547, 7
    %v4549 = vsub.s32 4, %v4548
    %v4550 = vrot.slane %v4516, %v4549
    %v4551 = vmul.f32 %v4512, %v4550
    %v4552 = vmul.f32 %v4513, %v4550
    %v4553 = vadd.f32 %v4545, %v4551
    %v4554 = vadd.f32 %v4546, %v4552
    %v4555 = vadd.f32 %v4113, %v4553
    %v4556 = vadd.f32 %v4114, %v4554
    %v4557 = vmul.f32 %v4555, 0.5
    %v4558 = vmul.f32 %v4556, 0.5
    %v4559 = vadd.f32 %v4119, %v4557
    %v4560 = vadd.f32 %v4120, %v4558
    %v4561 = vsel %vm543, %v4559, 0.0
    %4562 = vadd.xlane.f32.xlu0 %v4561
    %v4563 = vpop.xlane.xlu0 %4562
    %v4564 = vsel %vm543, %v4560, 0.0
    %4565 = vadd.xlane.f32.xlu0 %v4564
    %v4566 = vpop.xlane.xlu0 %4565
    %v4567 = vmul.f32 %v116, %v4563
    %v4568 = vmul.f32 %v117, %v4566
    %vm4569 = vcmask 7168
    %v4570 = vsel %vm4569, %v4567, 0.0
    %v4571 = vsel %vm4569, %v4568, 0.0
    %v4572 = vadd.f32 %v4570, %v4571
    %v4573 = vrot.slane %v4572, 4
    %v4574 = vadd.f32 %v4572, %v4573
    %v4575 = vrot.slane %v4574, 2
    %v4576 = vadd.f32 %v4574, %v4575
    %v4577 = vrot.slane %v4576, 1
    %v4578 = vadd.f32 %v4576, %v4577
    %v4579 = vmul.f32 %v118, 16.0
    %v4580 = vadd.f32 %v4578, %v4579
    %vm4581 = vcmask 0
    %4582 = vst.msk [vmem:[#allocation3] sm:$0x1] %vm4581, %v4580
    // Predicated region
    $region66: #{tpu_custom_call.1} parent=1 // pred_check
      _
    $region67: #{tpu_custom_call.1} parent=1 // pred_check_branch
      %4584 = sbr.rel (0) target = $region69
    $region68: #{tpu_custom_call.1} parent=1 // pred_region
      %s4586 = ssub.s32 16, 16
      %4587 = vsyncadd [#allocation4], %s4586
      %s4589 = sshll.u32 [#allocation3], 4
      %s4590 = int_to_ptr.vmem [resolvable:$true] %s4589
      %4592 = dma.vmem_to_hbm [thread:$0]  %s4590, 16, %s16, [#allocation4]
    $region69: #{tpu_custom_call.1} parent=1 // pred_fallthru
      _
    // Predicated region
    $region70: #{tpu_custom_call.1} parent=1 // pred_check
      _
    $region71: #{tpu_custom_call.1} parent=1 // pred_check_branch
      %4594 = sbr.rel (0) target = $region73
    $region72: #{tpu_custom_call.1} parent=1 // pred_region
      %4595 = dma.done [#allocation4], 16
    $region73: #{tpu_custom_call.1} parent=1 // pred_fallthru
      _
    %4596 = vsyncpa [#allocation4], 1

</llo_original>
